<compile_context>
chip_gen: v7x
topology: tpu7x:2x2x1
jax: 0.10.0
libtpu: 0.0.40
codegen_flags: <defaults>
</compile_context>

<pallas_src>
import math

import jax
import jax.numpy as jnp
import numpy as np
from jax.experimental import pallas as pl
from jax.experimental.pallas import tpu as pltpu

PARAM_ORDER = [
    "wqkv", "bqkv", "wo", "bo",
    "ln1g", "ln1b", "w1", "b1", "w2", "b2", "ln2g", "ln2b",
    "head_sum", "head_expand",
]


def make_encoder_kernel(nhead: int, nlayers: int, eps: float = 1e-5):
    """Fused 2-layer post-norm transformer encoder, whole batch in one block."""

    def kernel(x_ref, bias_ref,
               wqkv_ref, bqkv_ref, wo_ref, bo_ref,
               ln1g_ref, ln1b_ref, w1_ref, b1_ref, w2_ref, b2_ref,
               ln2g_ref, ln2b_ref, hsum_ref, hexp_ref, out_ref):
        B, S, D = x_ref.shape
        BS = B * S
        H = nhead

        def layer_norm(t, g, b):
            mu = jnp.mean(t, axis=-1, keepdims=True)
            var = jnp.mean((t - mu) ** 2, axis=-1, keepdims=True)
            return (t - mu) * jax.lax.rsqrt(var + eps) * g + b

        def mm(a, w):
            # Cast only the MXU operand to the weight dtype (f32 here; bf16 at
            # production dims) -- residual / LN / softmax math stays f32.
            return jnp.dot(a.astype(w.dtype), w, preferred_element_type=jnp.float32)

        # (B,S,D) -> (B*S, D): merges major dims only (free reshape).
        x = x_ref[...].astype(jnp.float32).reshape(BS, D)
        bias = bias_ref[...]          # (B, 1, S, 1) additive key-padding bias
        hsum = hsum_ref[...]          # (D, H) 0/1 head-indicator (sum within head)
        hexp = hexp_ref[...]          # (H, D) 0/1 head-indicator (expand to lanes)

        for l in range(nlayers):
            # ---- fused QKV projection: one matmul, scale folded into Q ----
            qkv = mm(x, wqkv_ref[l]) + bqkv_ref[l]               # (BS, 3D)
            q = qkv[:, :D].reshape(B, S, D)                      # lane slices,
            k = qkv[:, D:2 * D].reshape(B, S, D)                 # major-dim split
            v = qkv[:, 2 * D:].reshape(B, S, D)                  # reshapes (free)

            # ---- per-head scores without head-major relayout ----
            # prod[b,q,k,d] = q[b,q,d]*k[b,k,d]; contract D against the 0/1
            # head indicator -> scores per head, heads on the minor axis.
            prod = q[:, :, None, :] * k[:, None, :, :]           # (B,S,S,D) VPU
            s = jnp.dot(prod.reshape(BS * S, D), hsum,
                        preferred_element_type=jnp.float32)      # one MXU push
            s = s.reshape(B, S, S, H) + bias                     # key mask, per layer

            # ---- softmax over the key axis (axis=2) ----
            s = s - jnp.max(s, axis=2, keepdims=True)
            p = jnp.exp(s)
            p = p * pl.reciprocal(jnp.sum(p, axis=2, keepdims=True), approx=True)

            # ---- context: expand head probs back onto lanes, contract keys ----
            p_exp = jnp.dot(p.reshape(BS * S, H), hexp,
                            preferred_element_type=jnp.float32)  # one MXU push
            p_exp = p_exp.reshape(B, S, S, D)
            ctx = jnp.sum(p_exp * v[:, None, :, :], axis=2)      # (B,S,D) VPU+XLU
            ctx = ctx.reshape(BS, D)

            # ---- output projection: ONE full (D,D) matmul (no per-head sum) ----
            attn = mm(ctx, wo_ref[l]) + bo_ref[l]
            # TODO(synk): dropout (p=0.5) only fires in training mode; eval
            # forward is identity, so it is intentionally omitted.
            x = layer_norm(x + attn, ln1g_ref[l], ln1b_ref[l])

            # ---- feed-forward (ReLU) ----
            h1 = jnp.maximum(mm(x, w1_ref[l]) + b1_ref[l], 0.0)
            ff = mm(h1, w2_ref[l]) + b2_ref[l]
            x = layer_norm(x + ff, ln2g_ref[l], ln2b_ref[l])

        out_ref[...] = x.reshape(B, S, D).astype(out_ref.dtype)

    return kernel


def prepare_params(params, nhead, matmul_dtype=jnp.float32):
    """One-time offline parameter transform:
       - fuse wq|wk|wv -> (L, D, 3D), bq|bk|bv -> (L, 1, 3D)
       - fold the 1/sqrt(hd) attention scale into the Q part
       - build the constant 0/1 head-indicator matrices (D,H) and (H,D)
       - optionally cast the matmul weights to bf16 (v6e/v7x at production
         dims; keep f32 here so the strict numerics check passes)."""
    L, D, _ = params["wq"].shape
    hd = D // nhead
    scale = 1.0 / math.sqrt(hd)
    wqkv = jnp.concatenate(
        [params["wq"] * scale, params["wk"], params["wv"]], axis=-1)  # (L, D, 3D)
    bqkv = jnp.concatenate(
        [params["bq"] * scale, params["bk"], params["bv"]], axis=-1)  # (L, 1, 3D)
    head_id = jnp.arange(D, dtype=jnp.int32) // hd
    hsum = (head_id[:, None] == jnp.arange(nhead, dtype=jnp.int32)[None, :]
            ).astype(jnp.float32)                                     # (D, H)
    cast = lambda w: w.astype(matmul_dtype)
    return dict(
        wqkv=cast(wqkv), bqkv=bqkv, wo=cast(params["wo"]), bo=params["bo"],
        ln1g=params["ln1g"], ln1b=params["ln1b"],
        w1=cast(params["w1"]), b1=params["b1"],
        w2=cast(params["w2"]), b2=params["b2"],
        ln2g=params["ln2g"], ln2b=params["ln2b"],
        head_sum=hsum, head_expand=hsum.T,
    )


def encoder_forward(prepared_params, object_proposals, object_proposals_mask,
                    question_embeddings, question_embeddings_mask, nhead):
    # --- glue (plain JAX): concat, cast, bool mask -> additive bias ---------
    seq = jnp.concatenate([object_proposals, question_embeddings],
                          axis=1).astype(jnp.float32)                 # (B, S, D)
    mask = jnp.concatenate([object_proposals_mask, question_embeddings_mask],
                           axis=1)                                    # (B, S) bool
    B, S, D = seq.shape
    # Key-padding bias shaped to broadcast over (B, S_q, S_k, H) inside the kernel.
    bias = jnp.where(mask, -1e30, 0.0).astype(jnp.float32).reshape(B, 1, S, 1)
    nlayers = prepared_params["wqkv"].shape[0]

    kernel = make_encoder_kernel(nhead, nlayers)
    args = [seq, bias] + [prepared_params[k] for k in PARAM_ORDER]

    # Single invocation, no grid: every operand is one whole-array VMEM block
    # (single-buffered, DMA'd exactly once).  Total VMEM footprint here is
    # ~150 KB -- far under any generation's limit.  At production dims, add a
    # per-layer 'arbitrary' grid axis + VMEM-scratch carry for x instead.
    vmem = pl.BlockSpec(memory_space=pltpu.MemorySpace.VMEM)
    out = pl.pallas_call(
        kernel,
        out_shape=jax.ShapeDtypeStruct((B, S, D), jnp.float32),
        in_specs=[vmem] * len(args),
        out_specs=vmem,
    )(*args)
    return out


def init_params(key, d_model, nhead, d_hid, nlayers):
    D, Hd, L = d_model, d_hid, nlayers
    ks = jax.random.split(key, 16)

    def rnd(k, shape, scale=0.05):
        return jax.random.normal(k, shape, dtype=jnp.float32) * scale

    return dict(
        wq=rnd(ks[0], (L, D, D)), wk=rnd(ks[1], (L, D, D)), wv=rnd(ks[2], (L, D, D)),
        bq=rnd(ks[3], (L, 1, D)), bk=rnd(ks[4], (L, 1, D)), bv=rnd(ks[5], (L, 1, D)),
        wo=rnd(ks[6], (L, D, D)), bo=rnd(ks[7], (L, 1, D)),
        ln1g=jnp.ones((L, 1, D), jnp.float32) + rnd(ks[8], (L, 1, D), 0.01),
        ln1b=rnd(ks[9], (L, 1, D)),
        w1=rnd(ks[10], (L, D, Hd)), b1=rnd(ks[11], (L, 1, Hd)),
        w2=rnd(ks[12], (L, Hd, D)), b2=rnd(ks[13], (L, 1, D)),
        ln2g=jnp.ones((L, 1, D), jnp.float32) + rnd(ks[14], (L, 1, D), 0.01),
        ln2b=rnd(ks[15], (L, 1, D)),
    )


def reference_forward(params, obj, obj_mask, q_emb, q_mask, nhead, eps=1e-5):
    """Pure-JAX mirror of the PyTorch post-norm TransformerEncoder (eval mode)."""
    seq = jnp.concatenate([obj, q_emb], axis=1).astype(jnp.float32)
    mask = jnp.concatenate([obj_mask, q_mask], axis=1)
    B, S, D = seq.shape
    hd = D // nhead
    scale = 1.0 / math.sqrt(hd)
    bias = jnp.where(mask, -1e30, 0.0)[:, None, None, :]  # (B,1,1,S)
    L = params["wq"].shape[0]

    def ln(v, g, b):
        mu = v.mean(-1, keepdims=True)
        var = ((v - mu) ** 2).mean(-1, keepdims=True)
        return (v - mu) / jnp.sqrt(var + eps) * g + b

    x = seq
    for l in range(L):
        q = x @ params["wq"][l] + params["bq"][l]
        k = x @ params["wk"][l] + params["bk"][l]
        v = x @ params["wv"][l] + params["bv"][l]
        q = q.reshape(B, S, nhead, hd)
        k = k.reshape(B, S, nhead, hd)
        v = v.reshape(B, S, nhead, hd)
        s = jnp.einsum("bqhd,bkhd->bhqk", q, k) * scale + bias
        p = jax.nn.softmax(s, axis=-1)
        ctx = jnp.einsum("bhqk,bkhd->bqhd", p, v).reshape(B, S, D)
        attn = ctx @ params["wo"][l] + params["bo"][l]
        x = ln(x + attn, params["ln1g"][l], params["ln1b"][l])
        h = jax.nn.relu(x @ params["w1"][l] + params["b1"][l])
        ff = h @ params["w2"][l] + params["b2"][l]
        x = ln(x + ff, params["ln2g"][l], params["ln2b"][l])
    return x


if __name__ == "__main__":
    # Small shapes consistent with the module: d_model divisible by nhead=6.
    B, N_OBJ, N_Q = 2, 4, 4
    D_MODEL, NHEAD, D_HID, NLAYERS = 48, 6, 64, 2

    key = jax.random.PRNGKey(0)
    k_obj, k_q, k_par = jax.random.split(key, 3)

    object_proposals = jax.random.normal(k_obj, (B, N_OBJ, D_MODEL), jnp.float32)
    question_embeddings = jax.random.normal(k_q, (B, N_Q, D_MODEL), jnp.float32)
    # key-padding masks (True = masked / padding); keep at least one real token.
    object_proposals_mask = jnp.zeros((B, N_OBJ), jnp.bool_).at[:, -1].set(True)
    question_embeddings_mask = jnp.zeros((B, N_Q), jnp.bool_).at[0, -1].set(True)

    params = init_params(k_par, D_MODEL, NHEAD, D_HID, NLAYERS)
    prepared = prepare_params(params, NHEAD)   # one-time offline transform (f32)

    out = encoder_forward(prepared, object_proposals, object_proposals_mask,
                          question_embeddings, question_embeddings_mask, NHEAD)
    out = jax.block_until_ready(out)

    ref = reference_forward(params, object_proposals, object_proposals_mask,
                            question_embeddings, question_embeddings_mask, NHEAD)
    # Tolerance loosened slightly (1e-4 -> 1e-3) to cover the approx=True
    # EUP reciprocal in the softmax normalisation.
    np.testing.assert_allclose(np.asarray(out), np.asarray(ref),
                               rtol=1e-3, atol=1e-3)

    assert out.shape == (B, N_OBJ + N_Q, D_MODEL)
    print("KERNEL_OK")
</pallas_src>

<mosaic_0001>
module attributes {stable_mosaic.version = 11 : i64} {
  func.func @kernel(%arg0: memref<2x8x48xf32, #tpu.memory_space<vmem>>, %arg1: memref<2x1x8x1xf32, #tpu.memory_space<vmem>>, %arg2: memref<2x48x144xf32, #tpu.memory_space<vmem>>, %arg3: memref<2x1x144xf32, #tpu.memory_space<vmem>>, %arg4: memref<2x48x48xf32, #tpu.memory_space<vmem>>, %arg5: memref<2x1x48xf32, #tpu.memory_space<vmem>>, %arg6: memref<2x1x48xf32, #tpu.memory_space<vmem>>, %arg7: memref<2x1x48xf32, #tpu.memory_space<vmem>>, %arg8: memref<2x48x64xf32, #tpu.memory_space<vmem>>, %arg9: memref<2x1x64xf32, #tpu.memory_space<vmem>>, %arg10: memref<2x64x48xf32, #tpu.memory_space<vmem>>, %arg11: memref<2x1x48xf32, #tpu.memory_space<vmem>>, %arg12: memref<2x1x48xf32, #tpu.memory_space<vmem>>, %arg13: memref<2x1x48xf32, #tpu.memory_space<vmem>>, %arg14: memref<48x6xf32, #tpu.memory_space<vmem>>, %arg15: memref<6x48xf32, #tpu.memory_space<vmem>>, %arg16: memref<2x8x48xf32, #tpu.memory_space<vmem>>) attributes {dimension_semantics = [], scalar_prefetch = 0 : i64, scratch_operands = 0 : i64, tpu.core_type = #tpu.core_type<tc>} {
    %c0 = arith.constant 0 : index
    %c0_0 = arith.constant 0 : index
    %c0_1 = arith.constant 0 : index
    %0 = vector.load %arg0[%c0, %c0_0, %c0_1] : memref<2x8x48xf32, #tpu.memory_space<vmem>>, vector<2x8x48xf32>
    %1 = vector.shape_cast %0 : vector<2x8x48xf32> to vector<16x48xf32>
    %c0_2 = arith.constant 0 : index
    %c0_3 = arith.constant 0 : index
    %c0_4 = arith.constant 0 : index
    %c0_5 = arith.constant 0 : index
    %2 = vector.load %arg1[%c0_2, %c0_3, %c0_4, %c0_5] : memref<2x1x8x1xf32, #tpu.memory_space<vmem>>, vector<2x1x8x1xf32>
    %c0_6 = arith.constant 0 : index
    %c0_7 = arith.constant 0 : index
    %3 = vector.load %arg14[%c0_6, %c0_7] : memref<48x6xf32, #tpu.memory_space<vmem>>, vector<48x6xf32>
    %c0_8 = arith.constant 0 : index
    %c0_9 = arith.constant 0 : index
    %4 = vector.load %arg15[%c0_8, %c0_9] : memref<6x48xf32, #tpu.memory_space<vmem>>, vector<6x48xf32>
    %c0_10 = arith.constant 0 : index
    %c0_11 = arith.constant 0 : index
    %c0_12 = arith.constant 0 : index
    %5 = vector.load %arg2[%c0_10, %c0_11, %c0_12] : memref<2x48x144xf32, #tpu.memory_space<vmem>>, vector<1x48x144xf32>
    %6 = vector.shape_cast %5 : vector<1x48x144xf32> to vector<48x144xf32>
    %cst = arith.constant dense<0.000000e+00> : vector<16x144xf32>
    %7 = tpu.matmul %1, %6, %cst {dimension_numbers = #tpu.dot_dimension_numbers<[1], [0], [0], [1], [0, 0, 1, 1], [], []>} : vector<16x48xf32>, vector<48x144xf32>, vector<16x144xf32> -> vector<16x144xf32>
    %c0_13 = arith.constant 0 : index
    %c0_14 = arith.constant 0 : index
    %c0_15 = arith.constant 0 : index
    %8 = vector.load %arg3[%c0_13, %c0_14, %c0_15] : memref<2x1x144xf32, #tpu.memory_space<vmem>>, vector<1x1x144xf32>
    %9 = vector.shape_cast %8 : vector<1x1x144xf32> to vector<1x144xf32>
    %10 = vector.broadcast %9 : vector<1x144xf32> to vector<16x144xf32>
    %11 = arith.addf %7, %10 : vector<16x144xf32>
    %12 = vector.extract_strided_slice %11 {offsets = [0, 0], sizes = [16, 48], strides = [1, 1]} : vector<16x144xf32> to vector<16x48xf32>
    %13 = vector.shape_cast %12 : vector<16x48xf32> to vector<2x8x48xf32>
    %14 = vector.extract_strided_slice %11 {offsets = [0, 48], sizes = [16, 48], strides = [1, 1]} : vector<16x144xf32> to vector<16x48xf32>
    %15 = vector.shape_cast %14 : vector<16x48xf32> to vector<2x8x48xf32>
    %16 = vector.extract_strided_slice %11 {offsets = [0, 96], sizes = [16, 48], strides = [1, 1]} : vector<16x144xf32> to vector<16x48xf32>
    %17 = vector.shape_cast %16 : vector<16x48xf32> to vector<2x8x48xf32>
    %18 = vector.shape_cast %13 : vector<2x8x48xf32> to vector<2x8x1x48xf32>
    %19 = vector.shape_cast %15 : vector<2x8x48xf32> to vector<2x1x8x48xf32>
    %20 = vector.broadcast %18 : vector<2x8x1x48xf32> to vector<2x8x8x48xf32>
    %21 = vector.broadcast %19 : vector<2x1x8x48xf32> to vector<2x8x8x48xf32>
    %22 = arith.mulf %20, %21 : vector<2x8x8x48xf32>
    %23 = vector.shape_cast %22 : vector<2x8x8x48xf32> to vector<128x48xf32>
    %cst_16 = arith.constant dense<0.000000e+00> : vector<128x6xf32>
    %24 = tpu.matmul %23, %3, %cst_16 {dimension_numbers = #tpu.dot_dimension_numbers<[1], [0], [0], [1], [0, 0, 1, 1], [], []>} : vector<128x48xf32>, vector<48x6xf32>, vector<128x6xf32> -> vector<128x6xf32>
    %25 = vector.shape_cast %24 : vector<128x6xf32> to vector<2x8x8x6xf32>
    %26 = vector.broadcast %2 : vector<2x1x8x1xf32> to vector<2x8x8x6xf32>
    %27 = arith.addf %25, %26 : vector<2x8x8x6xf32>
    %cst_17 = arith.constant dense<0xFF800000> : vector<2x8x6xf32>
    %28 = vector.multi_reduction <maximumf>, %27, %cst_17 [2] : vector<2x8x8x6xf32> to vector<2x8x6xf32>
    %29 = vector.shape_cast %28 : vector<2x8x6xf32> to vector<2x8x1x6xf32>
    %30 = vector.broadcast %29 : vector<2x8x1x6xf32> to vector<2x8x8x6xf32>
    %31 = arith.subf %27, %30 : vector<2x8x8x6xf32>
    %32 = math.exp %31 : vector<2x8x8x6xf32>
    %cst_18 = arith.constant dense<0.000000e+00> : vector<2x8x6xf32>
    %33 = vector.multi_reduction <add>, %32, %cst_18 [2] : vector<2x8x8x6xf32> to vector<2x8x6xf32>
    %34 = vector.shape_cast %33 : vector<2x8x6xf32> to vector<2x8x1x6xf32>
    %35 = tpu.reciprocal %34 {approx = true} : vector<2x8x1x6xf32> -> vector<2x8x1x6xf32>
    %36 = vector.broadcast %35 : vector<2x8x1x6xf32> to vector<2x8x8x6xf32>
    %37 = arith.mulf %32, %36 : vector<2x8x8x6xf32>
    %38 = vector.shape_cast %37 : vector<2x8x8x6xf32> to vector<128x6xf32>
    %cst_19 = arith.constant dense<0.000000e+00> : vector<128x48xf32>
    %39 = tpu.matmul %38, %4, %cst_19 {dimension_numbers = #tpu.dot_dimension_numbers<[1], [0], [0], [1], [0, 0, 1, 1], [], []>} : vector<128x6xf32>, vector<6x48xf32>, vector<128x48xf32> -> vector<128x48xf32>
    %40 = vector.shape_cast %39 : vector<128x48xf32> to vector<2x8x8x48xf32>
    %41 = vector.shape_cast %17 : vector<2x8x48xf32> to vector<2x1x8x48xf32>
    %42 = vector.broadcast %41 : vector<2x1x8x48xf32> to vector<2x8x8x48xf32>
    %43 = arith.mulf %40, %42 : vector<2x8x8x48xf32>
    %cst_20 = arith.constant dense<0.000000e+00> : vector<2x8x48xf32>
    %44 = vector.multi_reduction <add>, %43, %cst_20 [2] : vector<2x8x8x48xf32> to vector<2x8x48xf32>
    %45 = vector.shape_cast %44 : vector<2x8x48xf32> to vector<16x48xf32>
    %c0_21 = arith.constant 0 : index
    %c0_22 = arith.constant 0 : index
    %c0_23 = arith.constant 0 : index
    %46 = vector.load %arg4[%c0_21, %c0_22, %c0_23] : memref<2x48x48xf32, #tpu.memory_space<vmem>>, vector<1x48x48xf32>
    %47 = vector.shape_cast %46 : vector<1x48x48xf32> to vector<48x48xf32>
    %cst_24 = arith.constant dense<0.000000e+00> : vector<16x48xf32>
    %48 = tpu.matmul %45, %47, %cst_24 {dimension_numbers = #tpu.dot_dimension_numbers<[1], [0], [0], [1], [0, 0, 1, 1], [], []>} : vector<16x48xf32>, vector<48x48xf32>, vector<16x48xf32> -> vector<16x48xf32>
    %c0_25 = arith.constant 0 : index
    %c0_26 = arith.constant 0 : index
    %c0_27 = arith.constant 0 : index
    %49 = vector.load %arg5[%c0_25, %c0_26, %c0_27] : memref<2x1x48xf32, #tpu.memory_space<vmem>>, vector<1x1x48xf32>
    %50 = vector.shape_cast %49 : vector<1x1x48xf32> to vector<1x48xf32>
    %51 = vector.broadcast %50 : vector<1x48xf32> to vector<16x48xf32>
    %52 = arith.addf %48, %51 : vector<16x48xf32>
    %53 = arith.addf %1, %52 : vector<16x48xf32>
    %c0_28 = arith.constant 0 : index
    %c0_29 = arith.constant 0 : index
    %c0_30 = arith.constant 0 : index
    %54 = vector.load %arg6[%c0_28, %c0_29, %c0_30] : memref<2x1x48xf32, #tpu.memory_space<vmem>>, vector<1x1x48xf32>
    %55 = vector.shape_cast %54 : vector<1x1x48xf32> to vector<1x48xf32>
    %c0_31 = arith.constant 0 : index
    %c0_32 = arith.constant 0 : index
    %c0_33 = arith.constant 0 : index
    %56 = vector.load %arg7[%c0_31, %c0_32, %c0_33] : memref<2x1x48xf32, #tpu.memory_space<vmem>>, vector<1x1x48xf32>
    %57 = vector.shape_cast %56 : vector<1x1x48xf32> to vector<1x48xf32>
    %cst_34 = arith.constant dense<0.000000e+00> : vector<16xf32>
    %58 = vector.multi_reduction <add>, %53, %cst_34 [1] : vector<16x48xf32> to vector<16xf32>
    %59 = vector.shape_cast %58 : vector<16xf32> to vector<16x1xf32>
    %cst_35 = arith.constant 4.800000e+01 : f32
    %60 = vector.broadcast %cst_35 : f32 to vector<16x1xf32>
    %61 = arith.divf %59, %60 : vector<16x1xf32>
    %62 = vector.broadcast %61 : vector<16x1xf32> to vector<16x48xf32>
    %63 = arith.subf %53, %62 : vector<16x48xf32>
    %64 = arith.mulf %63, %63 : vector<16x48xf32>
    %cst_36 = arith.constant dense<0.000000e+00> : vector<16xf32>
    %65 = vector.multi_reduction <add>, %64, %cst_36 [1] : vector<16x48xf32> to vector<16xf32>
    %66 = vector.shape_cast %65 : vector<16xf32> to vector<16x1xf32>
    %cst_37 = arith.constant 4.800000e+01 : f32
    %67 = vector.broadcast %cst_37 : f32 to vector<16x1xf32>
    %68 = arith.divf %66, %67 : vector<16x1xf32>
    %69 = vector.broadcast %61 : vector<16x1xf32> to vector<16x48xf32>
    %70 = arith.subf %53, %69 : vector<16x48xf32>
    %cst_38 = arith.constant 9.99999974E-6 : f32
    %71 = vector.broadcast %cst_38 : f32 to vector<16x1xf32>
    %72 = arith.addf %68, %71 : vector<16x1xf32>
    %73 = math.rsqrt %72 : vector<16x1xf32>
    %74 = vector.broadcast %73 : vector<16x1xf32> to vector<16x48xf32>
    %75 = arith.mulf %70, %74 : vector<16x48xf32>
    %76 = vector.broadcast %55 : vector<1x48xf32> to vector<16x48xf32>
    %77 = arith.mulf %75, %76 : vector<16x48xf32>
    %78 = vector.broadcast %57 : vector<1x48xf32> to vector<16x48xf32>
    %79 = arith.addf %77, %78 : vector<16x48xf32>
    %c0_39 = arith.constant 0 : index
    %c0_40 = arith.constant 0 : index
    %c0_41 = arith.constant 0 : index
    %80 = vector.load %arg8[%c0_39, %c0_40, %c0_41] : memref<2x48x64xf32, #tpu.memory_space<vmem>>, vector<1x48x64xf32>
    %81 = vector.shape_cast %80 : vector<1x48x64xf32> to vector<48x64xf32>
    %cst_42 = arith.constant dense<0.000000e+00> : vector<16x64xf32>
    %82 = tpu.matmul %79, %81, %cst_42 {dimension_numbers = #tpu.dot_dimension_numbers<[1], [0], [0], [1], [0, 0, 1, 1], [], []>} : vector<16x48xf32>, vector<48x64xf32>, vector<16x64xf32> -> vector<16x64xf32>
    %c0_43 = arith.constant 0 : index
    %c0_44 = arith.constant 0 : index
    %c0_45 = arith.constant 0 : index
    %83 = vector.load %arg9[%c0_43, %c0_44, %c0_45] : memref<2x1x64xf32, #tpu.memory_space<vmem>>, vector<1x1x64xf32>
    %84 = vector.shape_cast %83 : vector<1x1x64xf32> to vector<1x64xf32>
    %85 = vector.broadcast %84 : vector<1x64xf32> to vector<16x64xf32>
    %86 = arith.addf %82, %85 : vector<16x64xf32>
    %cst_46 = arith.constant 0.000000e+00 : f32
    %87 = vector.broadcast %cst_46 : f32 to vector<16x64xf32>
    %88 = arith.maximumf %86, %87 : vector<16x64xf32>
    %c0_47 = arith.constant 0 : index
    %c0_48 = arith.constant 0 : index
    %c0_49 = arith.constant 0 : index
    %89 = vector.load %arg10[%c0_47, %c0_48, %c0_49] : memref<2x64x48xf32, #tpu.memory_space<vmem>>, vector<1x64x48xf32>
    %90 = vector.shape_cast %89 : vector<1x64x48xf32> to vector<64x48xf32>
    %cst_50 = arith.constant dense<0.000000e+00> : vector<16x48xf32>
    %91 = tpu.matmul %88, %90, %cst_50 {dimension_numbers = #tpu.dot_dimension_numbers<[1], [0], [0], [1], [0, 0, 1, 1], [], []>} : vector<16x64xf32>, vector<64x48xf32>, vector<16x48xf32> -> vector<16x48xf32>
    %c0_51 = arith.constant 0 : index
    %c0_52 = arith.constant 0 : index
    %c0_53 = arith.constant 0 : index
    %92 = vector.load %arg11[%c0_51, %c0_52, %c0_53] : memref<2x1x48xf32, #tpu.memory_space<vmem>>, vector<1x1x48xf32>
    %93 = vector.shape_cast %92 : vector<1x1x48xf32> to vector<1x48xf32>
    %94 = vector.broadcast %93 : vector<1x48xf32> to vector<16x48xf32>
    %95 = arith.addf %91, %94 : vector<16x48xf32>
    %96 = arith.addf %79, %95 : vector<16x48xf32>
    %c0_54 = arith.constant 0 : index
    %c0_55 = arith.constant 0 : index
    %c0_56 = arith.constant 0 : index
    %97 = vector.load %arg12[%c0_54, %c0_55, %c0_56] : memref<2x1x48xf32, #tpu.memory_space<vmem>>, vector<1x1x48xf32>
    %98 = vector.shape_cast %97 : vector<1x1x48xf32> to vector<1x48xf32>
    %c0_57 = arith.constant 0 : index
    %c0_58 = arith.constant 0 : index
    %c0_59 = arith.constant 0 : index
    %99 = vector.load %arg13[%c0_57, %c0_58, %c0_59] : memref<2x1x48xf32, #tpu.memory_space<vmem>>, vector<1x1x48xf32>
    %100 = vector.shape_cast %99 : vector<1x1x48xf32> to vector<1x48xf32>
    %cst_60 = arith.constant dense<0.000000e+00> : vector<16xf32>
    %101 = vector.multi_reduction <add>, %96, %cst_60 [1] : vector<16x48xf32> to vector<16xf32>
    %102 = vector.shape_cast %101 : vector<16xf32> to vector<16x1xf32>
    %cst_61 = arith.constant 4.800000e+01 : f32
    %103 = vector.broadcast %cst_61 : f32 to vector<16x1xf32>
    %104 = arith.divf %102, %103 : vector<16x1xf32>
    %105 = vector.broadcast %104 : vector<16x1xf32> to vector<16x48xf32>
    %106 = arith.subf %96, %105 : vector<16x48xf32>
    %107 = arith.mulf %106, %106 : vector<16x48xf32>
    %cst_62 = arith.constant dense<0.000000e+00> : vector<16xf32>
    %108 = vector.multi_reduction <add>, %107, %cst_62 [1] : vector<16x48xf32> to vector<16xf32>
    %109 = vector.shape_cast %108 : vector<16xf32> to vector<16x1xf32>
    %cst_63 = arith.constant 4.800000e+01 : f32
    %110 = vector.broadcast %cst_63 : f32 to vector<16x1xf32>
    %111 = arith.divf %109, %110 : vector<16x1xf32>
    %112 = vector.broadcast %104 : vector<16x1xf32> to vector<16x48xf32>
    %113 = arith.subf %96, %112 : vector<16x48xf32>
    %cst_64 = arith.constant 9.99999974E-6 : f32
    %114 = vector.broadcast %cst_64 : f32 to vector<16x1xf32>
    %115 = arith.addf %111, %114 : vector<16x1xf32>
    %116 = math.rsqrt %115 : vector<16x1xf32>
    %117 = vector.broadcast %116 : vector<16x1xf32> to vector<16x48xf32>
    %118 = arith.mulf %113, %117 : vector<16x48xf32>
    %119 = vector.broadcast %98 : vector<1x48xf32> to vector<16x48xf32>
    %120 = arith.mulf %118, %119 : vector<16x48xf32>
    %121 = vector.broadcast %100 : vector<1x48xf32> to vector<16x48xf32>
    %122 = arith.addf %120, %121 : vector<16x48xf32>
    %c1 = arith.constant 1 : index
    %c0_65 = arith.constant 0 : index
    %c0_66 = arith.constant 0 : index
    %123 = vector.load %arg2[%c1, %c0_65, %c0_66] : memref<2x48x144xf32, #tpu.memory_space<vmem>>, vector<1x48x144xf32>
    %124 = vector.shape_cast %123 : vector<1x48x144xf32> to vector<48x144xf32>
    %cst_67 = arith.constant dense<0.000000e+00> : vector<16x144xf32>
    %125 = tpu.matmul %122, %124, %cst_67 {dimension_numbers = #tpu.dot_dimension_numbers<[1], [0], [0], [1], [0, 0, 1, 1], [], []>} : vector<16x48xf32>, vector<48x144xf32>, vector<16x144xf32> -> vector<16x144xf32>
    %c1_68 = arith.constant 1 : index
    %c0_69 = arith.constant 0 : index
    %c0_70 = arith.constant 0 : index
    %126 = vector.load %arg3[%c1_68, %c0_69, %c0_70] : memref<2x1x144xf32, #tpu.memory_space<vmem>>, vector<1x1x144xf32>
    %127 = vector.shape_cast %126 : vector<1x1x144xf32> to vector<1x144xf32>
    %128 = vector.broadcast %127 : vector<1x144xf32> to vector<16x144xf32>
    %129 = arith.addf %125, %128 : vector<16x144xf32>
    %130 = vector.extract_strided_slice %129 {offsets = [0, 0], sizes = [16, 48], strides = [1, 1]} : vector<16x144xf32> to vector<16x48xf32>
    %131 = vector.shape_cast %130 : vector<16x48xf32> to vector<2x8x48xf32>
    %132 = vector.extract_strided_slice %129 {offsets = [0, 48], sizes = [16, 48], strides = [1, 1]} : vector<16x144xf32> to vector<16x48xf32>
    %133 = vector.shape_cast %132 : vector<16x48xf32> to vector<2x8x48xf32>
    %134 = vector.extract_strided_slice %129 {offsets = [0, 96], sizes = [16, 48], strides = [1, 1]} : vector<16x144xf32> to vector<16x48xf32>
    %135 = vector.shape_cast %134 : vector<16x48xf32> to vector<2x8x48xf32>
    %136 = vector.shape_cast %131 : vector<2x8x48xf32> to vector<2x8x1x48xf32>
    %137 = vector.shape_cast %133 : vector<2x8x48xf32> to vector<2x1x8x48xf32>
    %138 = vector.broadcast %136 : vector<2x8x1x48xf32> to vector<2x8x8x48xf32>
    %139 = vector.broadcast %137 : vector<2x1x8x48xf32> to vector<2x8x8x48xf32>
    %140 = arith.mulf %138, %139 : vector<2x8x8x48xf32>
    %141 = vector.shape_cast %140 : vector<2x8x8x48xf32> to vector<128x48xf32>
    %cst_71 = arith.constant dense<0.000000e+00> : vector<128x6xf32>
    %142 = tpu.matmul %141, %3, %cst_71 {dimension_numbers = #tpu.dot_dimension_numbers<[1], [0], [0], [1], [0, 0, 1, 1], [], []>} : vector<128x48xf32>, vector<48x6xf32>, vector<128x6xf32> -> vector<128x6xf32>
    %143 = vector.shape_cast %142 : vector<128x6xf32> to vector<2x8x8x6xf32>
    %144 = vector.broadcast %2 : vector<2x1x8x1xf32> to vector<2x8x8x6xf32>
    %145 = arith.addf %143, %144 : vector<2x8x8x6xf32>
    %cst_72 = arith.constant dense<0xFF800000> : vector<2x8x6xf32>
    %146 = vector.multi_reduction <maximumf>, %145, %cst_72 [2] : vector<2x8x8x6xf32> to vector<2x8x6xf32>
    %147 = vector.shape_cast %146 : vector<2x8x6xf32> to vector<2x8x1x6xf32>
    %148 = vector.broadcast %147 : vector<2x8x1x6xf32> to vector<2x8x8x6xf32>
    %149 = arith.subf %145, %148 : vector<2x8x8x6xf32>
    %150 = math.exp %149 : vector<2x8x8x6xf32>
    %cst_73 = arith.constant dense<0.000000e+00> : vector<2x8x6xf32>
    %151 = vector.multi_reduction <add>, %150, %cst_73 [2] : vector<2x8x8x6xf32> to vector<2x8x6xf32>
    %152 = vector.shape_cast %151 : vector<2x8x6xf32> to vector<2x8x1x6xf32>
    %153 = tpu.reciprocal %152 {approx = true} : vector<2x8x1x6xf32> -> vector<2x8x1x6xf32>
    %154 = vector.broadcast %153 : vector<2x8x1x6xf32> to vector<2x8x8x6xf32>
    %155 = arith.mulf %150, %154 : vector<2x8x8x6xf32>
    %156 = vector.shape_cast %155 : vector<2x8x8x6xf32> to vector<128x6xf32>
    %cst_74 = arith.constant dense<0.000000e+00> : vector<128x48xf32>
    %157 = tpu.matmul %156, %4, %cst_74 {dimension_numbers = #tpu.dot_dimension_numbers<[1], [0], [0], [1], [0, 0, 1, 1], [], []>} : vector<128x6xf32>, vector<6x48xf32>, vector<128x48xf32> -> vector<128x48xf32>
    %158 = vector.shape_cast %157 : vector<128x48xf32> to vector<2x8x8x48xf32>
    %159 = vector.shape_cast %135 : vector<2x8x48xf32> to vector<2x1x8x48xf32>
    %160 = vector.broadcast %159 : vector<2x1x8x48xf32> to vector<2x8x8x48xf32>
    %161 = arith.mulf %158, %160 : vector<2x8x8x48xf32>
    %cst_75 = arith.constant dense<0.000000e+00> : vector<2x8x48xf32>
    %162 = vector.multi_reduction <add>, %161, %cst_75 [2] : vector<2x8x8x48xf32> to vector<2x8x48xf32>
    %163 = vector.shape_cast %162 : vector<2x8x48xf32> to vector<16x48xf32>
    %c1_76 = arith.constant 1 : index
    %c0_77 = arith.constant 0 : index
    %c0_78 = arith.constant 0 : index
    %164 = vector.load %arg4[%c1_76, %c0_77, %c0_78] : memref<2x48x48xf32, #tpu.memory_space<vmem>>, vector<1x48x48xf32>
    %165 = vector.shape_cast %164 : vector<1x48x48xf32> to vector<48x48xf32>
    %cst_79 = arith.constant dense<0.000000e+00> : vector<16x48xf32>
    %166 = tpu.matmul %163, %165, %cst_79 {dimension_numbers = #tpu.dot_dimension_numbers<[1], [0], [0], [1], [0, 0, 1, 1], [], []>} : vector<16x48xf32>, vector<48x48xf32>, vector<16x48xf32> -> vector<16x48xf32>
    %c1_80 = arith.constant 1 : index
    %c0_81 = arith.constant 0 : index
    %c0_82 = arith.constant 0 : index
    %167 = vector.load %arg5[%c1_80, %c0_81, %c0_82] : memref<2x1x48xf32, #tpu.memory_space<vmem>>, vector<1x1x48xf32>
    %168 = vector.shape_cast %167 : vector<1x1x48xf32> to vector<1x48xf32>
    %169 = vector.broadcast %168 : vector<1x48xf32> to vector<16x48xf32>
    %170 = arith.addf %166, %169 : vector<16x48xf32>
    %171 = arith.addf %122, %170 : vector<16x48xf32>
    %c1_83 = arith.constant 1 : index
    %c0_84 = arith.constant 0 : index
    %c0_85 = arith.constant 0 : index
    %172 = vector.load %arg6[%c1_83, %c0_84, %c0_85] : memref<2x1x48xf32, #tpu.memory_space<vmem>>, vector<1x1x48xf32>
    %173 = vector.shape_cast %172 : vector<1x1x48xf32> to vector<1x48xf32>
    %c1_86 = arith.constant 1 : index
    %c0_87 = arith.constant 0 : index
    %c0_88 = arith.constant 0 : index
    %174 = vector.load %arg7[%c1_86, %c0_87, %c0_88] : memref<2x1x48xf32, #tpu.memory_space<vmem>>, vector<1x1x48xf32>
    %175 = vector.shape_cast %174 : vector<1x1x48xf32> to vector<1x48xf32>
    %cst_89 = arith.constant dense<0.000000e+00> : vector<16xf32>
    %176 = vector.multi_reduction <add>, %171, %cst_89 [1] : vector<16x48xf32> to vector<16xf32>
    %177 = vector.shape_cast %176 : vector<16xf32> to vector<16x1xf32>
    %cst_90 = arith.constant 4.800000e+01 : f32
    %178 = vector.broadcast %cst_90 : f32 to vector<16x1xf32>
    %179 = arith.divf %177, %178 : vector<16x1xf32>
    %180 = vector.broadcast %179 : vector<16x1xf32> to vector<16x48xf32>
    %181 = arith.subf %171, %180 : vector<16x48xf32>
    %182 = arith.mulf %181, %181 : vector<16x48xf32>
    %cst_91 = arith.constant dense<0.000000e+00> : vector<16xf32>
    %183 = vector.multi_reduction <add>, %182, %cst_91 [1] : vector<16x48xf32> to vector<16xf32>
    %184 = vector.shape_cast %183 : vector<16xf32> to vector<16x1xf32>
    %cst_92 = arith.constant 4.800000e+01 : f32
    %185 = vector.broadcast %cst_92 : f32 to vector<16x1xf32>
    %186 = arith.divf %184, %185 : vector<16x1xf32>
    %187 = vector.broadcast %179 : vector<16x1xf32> to vector<16x48xf32>
    %188 = arith.subf %171, %187 : vector<16x48xf32>
    %cst_93 = arith.constant 9.99999974E-6 : f32
    %189 = vector.broadcast %cst_93 : f32 to vector<16x1xf32>
    %190 = arith.addf %186, %189 : vector<16x1xf32>
    %191 = math.rsqrt %190 : vector<16x1xf32>
    %192 = vector.broadcast %191 : vector<16x1xf32> to vector<16x48xf32>
    %193 = arith.mulf %188, %192 : vector<16x48xf32>
    %194 = vector.broadcast %173 : vector<1x48xf32> to vector<16x48xf32>
    %195 = arith.mulf %193, %194 : vector<16x48xf32>
    %196 = vector.broadcast %175 : vector<1x48xf32> to vector<16x48xf32>
    %197 = arith.addf %195, %196 : vector<16x48xf32>
    %c1_94 = arith.constant 1 : index
    %c0_95 = arith.constant 0 : index
    %c0_96 = arith.constant 0 : index
    %198 = vector.load %arg8[%c1_94, %c0_95, %c0_96] : memref<2x48x64xf32, #tpu.memory_space<vmem>>, vector<1x48x64xf32>
    %199 = vector.shape_cast %198 : vector<1x48x64xf32> to vector<48x64xf32>
    %cst_97 = arith.constant dense<0.000000e+00> : vector<16x64xf32>
    %200 = tpu.matmul %197, %199, %cst_97 {dimension_numbers = #tpu.dot_dimension_numbers<[1], [0], [0], [1], [0, 0, 1, 1], [], []>} : vector<16x48xf32>, vector<48x64xf32>, vector<16x64xf32> -> vector<16x64xf32>
    %c1_98 = arith.constant 1 : index
    %c0_99 = arith.constant 0 : index
    %c0_100 = arith.constant 0 : index
    %201 = vector.load %arg9[%c1_98, %c0_99, %c0_100] : memref<2x1x64xf32, #tpu.memory_space<vmem>>, vector<1x1x64xf32>
    %202 = vector.shape_cast %201 : vector<1x1x64xf32> to vector<1x64xf32>
    %203 = vector.broadcast %202 : vector<1x64xf32> to vector<16x64xf32>
    %204 = arith.addf %200, %203 : vector<16x64xf32>
    %cst_101 = arith.constant 0.000000e+00 : f32
    %205 = vector.broadcast %cst_101 : f32 to vector<16x64xf32>
    %206 = arith.maximumf %204, %205 : vector<16x64xf32>
    %c1_102 = arith.constant 1 : index
    %c0_103 = arith.constant 0 : index
    %c0_104 = arith.constant 0 : index
    %207 = vector.load %arg10[%c1_102, %c0_103, %c0_104] : memref<2x64x48xf32, #tpu.memory_space<vmem>>, vector<1x64x48xf32>
    %208 = vector.shape_cast %207 : vector<1x64x48xf32> to vector<64x48xf32>
    %cst_105 = arith.constant dense<0.000000e+00> : vector<16x48xf32>
    %209 = tpu.matmul %206, %208, %cst_105 {dimension_numbers = #tpu.dot_dimension_numbers<[1], [0], [0], [1], [0, 0, 1, 1], [], []>} : vector<16x64xf32>, vector<64x48xf32>, vector<16x48xf32> -> vector<16x48xf32>
    %c1_106 = arith.constant 1 : index
    %c0_107 = arith.constant 0 : index
    %c0_108 = arith.constant 0 : index
    %210 = vector.load %arg11[%c1_106, %c0_107, %c0_108] : memref<2x1x48xf32, #tpu.memory_space<vmem>>, vector<1x1x48xf32>
    %211 = vector.shape_cast %210 : vector<1x1x48xf32> to vector<1x48xf32>
    %212 = vector.broadcast %211 : vector<1x48xf32> to vector<16x48xf32>
    %213 = arith.addf %209, %212 : vector<16x48xf32>
    %214 = arith.addf %197, %213 : vector<16x48xf32>
    %c1_109 = arith.constant 1 : index
    %c0_110 = arith.constant 0 : index
    %c0_111 = arith.constant 0 : index
    %215 = vector.load %arg12[%c1_109, %c0_110, %c0_111] : memref<2x1x48xf32, #tpu.memory_space<vmem>>, vector<1x1x48xf32>
    %216 = vector.shape_cast %215 : vector<1x1x48xf32> to vector<1x48xf32>
    %c1_112 = arith.constant 1 : index
    %c0_113 = arith.constant 0 : index
    %c0_114 = arith.constant 0 : index
    %217 = vector.load %arg13[%c1_112, %c0_113, %c0_114] : memref<2x1x48xf32, #tpu.memory_space<vmem>>, vector<1x1x48xf32>
    %218 = vector.shape_cast %217 : vector<1x1x48xf32> to vector<1x48xf32>
    %cst_115 = arith.constant dense<0.000000e+00> : vector<16xf32>
    %219 = vector.multi_reduction <add>, %214, %cst_115 [1] : vector<16x48xf32> to vector<16xf32>
    %220 = vector.shape_cast %219 : vector<16xf32> to vector<16x1xf32>
    %cst_116 = arith.constant 4.800000e+01 : f32
    %221 = vector.broadcast %cst_116 : f32 to vector<16x1xf32>
    %222 = arith.divf %220, %221 : vector<16x1xf32>
    %223 = vector.broadcast %222 : vector<16x1xf32> to vector<16x48xf32>
    %224 = arith.subf %214, %223 : vector<16x48xf32>
    %225 = arith.mulf %224, %224 : vector<16x48xf32>
    %cst_117 = arith.constant dense<0.000000e+00> : vector<16xf32>
    %226 = vector.multi_reduction <add>, %225, %cst_117 [1] : vector<16x48xf32> to vector<16xf32>
    %227 = vector.shape_cast %226 : vector<16xf32> to vector<16x1xf32>
    %cst_118 = arith.constant 4.800000e+01 : f32
    %228 = vector.broadcast %cst_118 : f32 to vector<16x1xf32>
    %229 = arith.divf %227, %228 : vector<16x1xf32>
    %230 = vector.broadcast %222 : vector<16x1xf32> to vector<16x48xf32>
    %231 = arith.subf %214, %230 : vector<16x48xf32>
    %cst_119 = arith.constant 9.99999974E-6 : f32
    %232 = vector.broadcast %cst_119 : f32 to vector<16x1xf32>
    %233 = arith.addf %229, %232 : vector<16x1xf32>
    %234 = math.rsqrt %233 : vector<16x1xf32>
    %235 = vector.broadcast %234 : vector<16x1xf32> to vector<16x48xf32>
    %236 = arith.mulf %231, %235 : vector<16x48xf32>
    %237 = vector.broadcast %216 : vector<1x48xf32> to vector<16x48xf32>
    %238 = arith.mulf %236, %237 : vector<16x48xf32>
    %239 = vector.broadcast %218 : vector<1x48xf32> to vector<16x48xf32>
    %240 = arith.addf %238, %239 : vector<16x48xf32>
    %241 = vector.shape_cast %240 : vector<16x48xf32> to vector<2x8x48xf32>
    %c0_120 = arith.constant 0 : index
    %c0_121 = arith.constant 0 : index
    %c0_122 = arith.constant 0 : index
    %242 = vector.load %arg16[%c0_120, %c0_121, %c0_122] : memref<2x8x48xf32, #tpu.memory_space<vmem>>, vector<2x8x48xf32>
    tpu.vector_store %arg16[%c0_120, %c0_121, %c0_122], %241 {strides = array<i32>} : memref<2x8x48xf32, #tpu.memory_space<vmem>>, vector<2x8x48xf32>,
    return
  }
}

</mosaic_0001>

<llo_original>
// kernel: tpu_custom_call.1
$region0: #{tpu_custom_call.1}
  #allocation0 [shape = 'u32[]', space=smem, size = 0x4, offset = 0x4, fixed_abs, tag = 'smem constant byte address 0x4 - core index']
  #allocation1 [shape = 'u32[144,128]{1,0:T(1,128)}', space=vmem, size = 0x12000, scoped, tag = 'internal scratch']
  %s0 = inlined_call_operand.vmem [shape: f32[2,8,48], index: 0, kind: input, shape index: {}]
  %s1 = inlined_call_operand.vmem [shape: f32[2,1,8,1], index: 1, kind: input, shape index: {}]
  %s2 = inlined_call_operand.vmem [shape: f32[2,48,144], index: 2, kind: input, shape index: {}]
  %s3 = inlined_call_operand.vmem [shape: f32[2,1,144], index: 3, kind: input, shape index: {}]
  %s4 = inlined_call_operand.hbm [shape: f32[2,48,48], index: 4, kind: input, shape index: {}]
  %s5 = inlined_call_operand.vmem [shape: f32[2,1,48], index: 5, kind: input, shape index: {}]
  %s6 = inlined_call_operand.vmem [shape: f32[2,1,48], index: 6, kind: input, shape index: {}]
  %s7 = inlined_call_operand.vmem [shape: f32[2,1,48], index: 7, kind: input, shape index: {}]
  %s8 = inlined_call_operand.hbm [shape: f32[2,48,64], index: 8, kind: input, shape index: {}]
  %s9 = inlined_call_operand.vmem [shape: f32[2,1,64], index: 9, kind: input, shape index: {}]
  %s10 = inlined_call_operand.vmem [shape: f32[2,64,48], index: 10, kind: input, shape index: {}]
  %s11 = inlined_call_operand.vmem [shape: f32[2,1,48], index: 11, kind: input, shape index: {}]
  %s12 = inlined_call_operand.vmem [shape: f32[2,1,48], index: 12, kind: input, shape index: {}]
  %s13 = inlined_call_operand.vmem [shape: f32[2,1,48], index: 13, kind: input, shape index: {}]
  %s14 = inlined_call_operand.vmem [shape: f32[48,6], index: 14, kind: input, shape index: {}]
  %s15 = inlined_call_operand.vmem [shape: f32[6,48], index: 15, kind: input, shape index: {}]
  %s16 = inlined_call_operand.hbm [shape: f32[2,8,48], index: 16, kind: output, shape index: {}]
  %s17 = sld [smem:[#allocation0]]
  $region82: #{tpu_custom_call.1} parent=0
    _
  %s19 = ssub.s32 1, %s17
  %s20 = scalar_select 0, %s19, %s17
  $region1: #{tpu_custom_call.1} parent=0
    #allocation2 [shape = 'u8[49152]{0}', space=vmem, size = 0xc000, scoped, tag = 'input window, operand 4, single buffered']
    #allocation3 [shape = 's32[1]{0}', space=sflag, size = 0x4, scoped, tag = 'scoped memory for tpu_custom_call.1']
    #allocation4 [shape = 's32[1]{0}', space=sflag, size = 0x4, scoped, tag = 'scoped memory for tpu_custom_call.1']
    #allocation5 [shape = 'u8[49152]{0}', space=vmem, size = 0xc000, scoped, tag = 'input window, operand 8, single buffered']
    #allocation6 [shape = 's32[1]{0}', space=sflag, size = 0x4, scoped, tag = 'scoped memory for tpu_custom_call.1']
    #allocation7 [shape = 'u8[8192]{0}', space=vmem, size = 0x2000, scoped, tag = 'output window, operand 0, single buffered']
    %21 = vsyncpa [#allocation3], 0
    %22 = vsyncpa [#allocation6], 0
    %23 = vsyncpa [#allocation4], 0
    // Predicated region
    $region2: #{tpu_custom_call.1} parent=1 // pred_check
      _
    $region3: #{tpu_custom_call.1} parent=1 // pred_check_branch
      %25 = sbr.rel (0) target = $region5
    $region4: #{tpu_custom_call.1} parent=1 // pred_region
      _
    $region5: #{tpu_custom_call.1} parent=1 // pred_fallthru
      _
    // Predicated region
    $region6: #{tpu_custom_call.1} parent=1 // pred_check
      _
    $region7: #{tpu_custom_call.1} parent=1 // pred_check_branch
      %27 = sbr.rel (0) target = $region9
    $region8: #{tpu_custom_call.1} parent=1 // pred_region
      _
    $region9: #{tpu_custom_call.1} parent=1 // pred_fallthru
      _
    // Predicated region
    $region10: #{tpu_custom_call.1} parent=1 // pred_check
      _
    $region11: #{tpu_custom_call.1} parent=1 // pred_check_branch
      %29 = sbr.rel (0) target = $region13
    $region12: #{tpu_custom_call.1} parent=1 // pred_region
      _
    $region13: #{tpu_custom_call.1} parent=1 // pred_fallthru
      _
    // Predicated region
    $region14: #{tpu_custom_call.1} parent=1 // pred_check
      _
    $region15: #{tpu_custom_call.1} parent=1 // pred_check_branch
      %31 = sbr.rel (0) target = $region17
    $region16: #{tpu_custom_call.1} parent=1 // pred_region
      _
    $region17: #{tpu_custom_call.1} parent=1 // pred_fallthru
      _
    // Predicated region
    $region18: #{tpu_custom_call.1} parent=1 // pred_check
      _
    $region19: #{tpu_custom_call.1} parent=1 // pred_check_branch
      %33 = sbr.rel (0) target = $region21
    $region20: #{tpu_custom_call.1} parent=1 // pred_region
      %s35 = ssub.s32 1536, 1536
      %36 = vsyncadd [#allocation3], %s35
      %s37 = sshll.u32 [#allocation2], 4
      %s38 = int_to_ptr.vmem [resolvable:$true] %s37
      %43 = dma.hbm_to_vmem [thread:$0]  %s4, 1536, %s38, [#allocation3], 128, 128, 8
    $region21: #{tpu_custom_call.1} parent=1 // pred_fallthru
      _
    // Predicated region
    $region22: #{tpu_custom_call.1} parent=1 // pred_check
      _
    $region23: #{tpu_custom_call.1} parent=1 // pred_check_branch
      %45 = sbr.rel (0) target = $region25
    $region24: #{tpu_custom_call.1} parent=1 // pred_region
      _
    $region25: #{tpu_custom_call.1} parent=1 // pred_fallthru
      _
    // Predicated region
    $region26: #{tpu_custom_call.1} parent=1 // pred_check
      _
    $region27: #{tpu_custom_call.1} parent=1 // pred_check_branch
      %47 = sbr.rel (0) target = $region29
    $region28: #{tpu_custom_call.1} parent=1 // pred_region
      _
    $region29: #{tpu_custom_call.1} parent=1 // pred_fallthru
      _
    // Predicated region
    $region30: #{tpu_custom_call.1} parent=1 // pred_check
      _
    $region31: #{tpu_custom_call.1} parent=1 // pred_check_branch
      %49 = sbr.rel (0) target = $region33
    $region32: #{tpu_custom_call.1} parent=1 // pred_region
      _
    $region33: #{tpu_custom_call.1} parent=1 // pred_fallthru
      _
    // Predicated region
    $region34: #{tpu_custom_call.1} parent=1 // pred_check
      _
    $region35: #{tpu_custom_call.1} parent=1 // pred_check_branch
      %51 = sbr.rel (0) target = $region37
    $region36: #{tpu_custom_call.1} parent=1 // pred_region
      %s53 = ssub.s32 1536, 1536
      %54 = vsyncadd [#allocation6], %s53
      %s55 = sshll.u32 [#allocation5], 4
      %s56 = int_to_ptr.vmem [resolvable:$true] %s55
      %61 = dma.hbm_to_vmem [thread:$0]  %s8, 1536, %s56, [#allocation6], 128, 128, 8
    $region37: #{tpu_custom_call.1} parent=1 // pred_fallthru
      _
    // Predicated region
    $region38: #{tpu_custom_call.1} parent=1 // pred_check
      _
    $region39: #{tpu_custom_call.1} parent=1 // pred_check_branch
      %63 = sbr.rel (0) target = $region41
    $region40: #{tpu_custom_call.1} parent=1 // pred_region
      _
    $region41: #{tpu_custom_call.1} parent=1 // pred_fallthru
      _
    // Predicated region
    $region42: #{tpu_custom_call.1} parent=1 // pred_check
      _
    $region43: #{tpu_custom_call.1} parent=1 // pred_check_branch
      %65 = sbr.rel (0) target = $region45
    $region44: #{tpu_custom_call.1} parent=1 // pred_region
      _
    $region45: #{tpu_custom_call.1} parent=1 // pred_fallthru
      _
    // Predicated region
    $region46: #{tpu_custom_call.1} parent=1 // pred_check
      _
    $region47: #{tpu_custom_call.1} parent=1 // pred_check_branch
      %67 = sbr.rel (0) target = $region49
    $region48: #{tpu_custom_call.1} parent=1 // pred_region
      _
    $region49: #{tpu_custom_call.1} parent=1 // pred_fallthru
      _
    // Predicated region
    $region50: #{tpu_custom_call.1} parent=1 // pred_check
      _
    $region51: #{tpu_custom_call.1} parent=1 // pred_check_branch
      %69 = sbr.rel (0) target = $region53
    $region52: #{tpu_custom_call.1} parent=1 // pred_region
      _
    $region53: #{tpu_custom_call.1} parent=1 // pred_fallthru
      _
    // Predicated region
    $region54: #{tpu_custom_call.1} parent=1 // pred_check
      _
    $region55: #{tpu_custom_call.1} parent=1 // pred_check_branch
      %71 = sbr.rel (0) target = $region57
    $region56: #{tpu_custom_call.1} parent=1 // pred_region
      _
    $region57: #{tpu_custom_call.1} parent=1 // pred_fallthru
      _
    // Predicated region
    $region58: #{tpu_custom_call.1} parent=1 // pred_check
      _
    $region59: #{tpu_custom_call.1} parent=1 // pred_check_branch
      %73 = sbr.rel (0) target = $region61
    $region60: #{tpu_custom_call.1} parent=1 // pred_region
      _
    $region61: #{tpu_custom_call.1} parent=1 // pred_fallthru
      _
    // Predicated region
    $region62: #{tpu_custom_call.1} parent=1 // pred_check
      _
    $region63: #{tpu_custom_call.1} parent=1 // pred_check_branch
      %75 = sbr.rel (0) target = $region65
    $region64: #{tpu_custom_call.1} parent=1 // pred_region
      _
    $region65: #{tpu_custom_call.1} parent=1 // pred_fallthru
      _
    // Predicated region
    $region66: #{tpu_custom_call.1} parent=1 // pred_check
      _
    $region67: #{tpu_custom_call.1} parent=1 // pred_check_branch
      %77 = sbr.rel (0) target = $region69
    $region68: #{tpu_custom_call.1} parent=1 // pred_region
      %78 = dma.done [#allocation3], 1536
    $region69: #{tpu_custom_call.1} parent=1 // pred_fallthru
      _
    // Predicated region
    $region70: #{tpu_custom_call.1} parent=1 // pred_check
      _
    $region71: #{tpu_custom_call.1} parent=1 // pred_check_branch
      %80 = sbr.rel (0) target = $region73
    $region72: #{tpu_custom_call.1} parent=1 // pred_region
      %81 = dma.done [#allocation6], 1536
    $region73: #{tpu_custom_call.1} parent=1 // pred_fallthru
      _
    %v82 = vld [vmem:[%s0] sm:$0xff]
    %v83 = vld [vmem:[%s0 + $0x8] sm:$0xff]
    %v84 = vld [vmem:[%s1] sm:$0xff]
    %v85 = vld [vmem:[%s1 + $0x8] sm:$0xff]
    %v86 = vld [vmem:[%s14] sm:$0xff]
    %v87 = vld [vmem:[%s14 + $0x8] sm:$0xff]
    %v88 = vld [vmem:[%s14 + $0x10] sm:$0xff]
    %v89 = vld [vmem:[%s14 + $0x18] sm:$0xff]
    %v90 = vld [vmem:[%s14 + $0x20] sm:$0xff]
    %v91 = vld [vmem:[%s14 + $0x28] sm:$0xff]
    %v92 = vld [vmem:[%s15] sm:$0x3f]
    %v93 = vld [vmem:[%s2] sm:$0xff]
    %v94 = vld [vmem:[%s2 + $0x8] sm:$0xff]
    %v95 = vld [vmem:[%s2 + $0x10] sm:$0xff]
    %v96 = vld [vmem:[%s2 + $0x18] sm:$0xff]
    %v97 = vld [vmem:[%s2 + $0x20] sm:$0xff]
    %v98 = vld [vmem:[%s2 + $0x28] sm:$0xff]
    %v99 = vld [vmem:[%s2 + $0x30] sm:$0xff]
    %v100 = vld [vmem:[%s2 + $0x38] sm:$0xff]
    %v101 = vld [vmem:[%s2 + $0x40] sm:$0xff]
    %v102 = vld [vmem:[%s2 + $0x48] sm:$0xff]
    %v103 = vld [vmem:[%s2 + $0x50] sm:$0xff]
    %v104 = vld [vmem:[%s2 + $0x58] sm:$0xff]
    %v105 = vld [vmem:[%s3] sm:$0x3]
    %v107 = vlaneseq
    %v108 = vshrl.u32 %v107, 7
    %v109 = vsub.s32 0, %v108
    %v110 = vrot.slane %v105, %v109
    %v111 = vlaneseq
    %v112 = vshrl.u32 %v111, 7
    %v113 = vsub.s32 1, %v112
    %v114 = vrot.slane %v105, %v113
    %vm117 = vcmask 392192
    %v119 = vsel %vm117, %v82, 0
    %v122 = vsel %vm117, %v83, 0
    %124 = vmatprep.subr.mxu0 %v94
    %125 = vmatpush1.msra.mxu0 %v93
    %126 = vmatprep.subr.mxu0 %v96
    %127 = vmatpush1.msra.mxu0 %v95
    %128 = vmatprep.subr.mxu0 %v98
    %129 = vmatpush1.msra.mxu0 %v97
    %130 = vmatprep.subr.mxu0 %v100
    %131 = vmatpush1.msra.mxu0 %v99
    %132 = vmatprep.subr.mxu0 %v102
    %133 = vmatpush1.msra.mxu0 %v101
    %134 = vmatprep.subr.mxu0 %v104
    %135 = vmatpush1.msra.mxu0 %v103
    %136 = vmatprep.subr.mxu0 0.0
    %137 = vmatpush1.msra.mxu0 0.0
    %138 = vmatprep.subr.mxu0 0.0
    %139 = vmatpush1.msra.mxu0 0.0
    %140 = vmatprep.subr.mxu0 0.0
    %141 = vmatpush1.msra.mxu0 0.0
    %142 = vmatprep.subr.mxu0 0.0
    %143 = vmatpush1.msra.mxu0 0.0
    %144 = vmatprep.subr.mxu0 0.0
    %145 = vmatpush1.msra.mxu0 0.0
    %146 = vmatprep.subr.mxu0 0.0
    %147 = vmatpush1.msra.mxu0 0.0
    %148 = vmatprep.subr.mxu0 0.0
    %149 = vmatpush1.msra.mxu0 0.0
    %150 = vmatprep.subr.mxu0 0.0
    %151 = vmatpush1.msra.mxu0 0.0
    %152 = vmatprep.subr.mxu0 0.0
    %153 = vmatpush1.msra.mxu0 0.0
    %154 = vmatprep.subr.mxu0 0.0
    %155 = vmatpush1.msra.mxu0 0.0
    %156 = vmatprep.subr.mxu0 0.0
    %157 = vmatpush1.msra.mxu0 0.0
    %158 = vmatprep.subr.mxu0 0.0
    %159 = vmatpush1.msra.mxu0 0.0
    %160 = vmatprep.subr.mxu0 0.0
    %161 = vmatpush1.msra.mxu0 0.0
    %162 = vmatprep.subr.mxu0 0.0
    %163 = vmatpush1.msra.mxu0 0.0
    %164 = vmatprep.subr.mxu0 0.0
    %165 = vmatpush1.msra.mxu0 0.0
    %166 = vmatprep.subr.mxu0 0.0
    %167 = vmatpush1.msra.mxu0 0.0
    %168 = vmatprep.subr.mxu0 0.0
    %169 = vmatpush1.msra.mxu0 0.0
    %170 = vmatprep.subr.mxu0 0.0
    %171 = vmatpush1.msra.mxu0 0.0
    %172 = vmatprep.subr.mxu0 0.0
    %173 = vmatpush1.msra.mxu0 0.0
    %174 = vmatprep.subr.mxu0 0.0
    %175 = vmatpush1.msra.mxu0 0.0
    %176 = vmatprep.subr.mxu0 0.0
    %177 = vmatpush1.msra.mxu0 0.0
    %178 = vmatprep.subr.mxu0 0.0
    %179 = vmatpush1.msra.mxu0 0.0
    %180 = vmatprep.subr.mxu0 0.0
    %181 = vmatpush1.msra.mxu0 0.0
    %182 = vmatprep.subr.mxu0 0.0
    %183 = vmatpush1.msra.mxu0 0.0
    %184 = vmatprep.subr.mxu0 0.0
    %185 = vmatpush1.msra.mxu0 0.0
    %186 = vmatprep.subr.mxu0 0.0
    %187 = vmatpush1.msra.mxu0 0.0
    %188 = vmatprep.mubr.f32.mxu0 0.0
    %189 = vmatmul.mubr.f32.gmra.mrb[0].mxu0 %v119
    %v190 = vpop.f32.mrb[0].mxu0
    %v191 = vadd.f32 %v110, %v190
    %v192 = vpop.f32.mrb[0].mxu0
    %v193 = vadd.f32 %v114, %v192
    %194 = vmatprep.mubr.f32.mxu0 0.0
    %195 = vmatmul.mubr.f32.gmra.mrb[0].mxu0 %v122
    %v196 = vpop.f32.mrb[0].mxu0
    %v197 = vadd.f32 %v110, %v196
    %v198 = vpop.f32.mrb[0].mxu0
    %v199 = vadd.f32 %v114, %v198
    %200 = vdwg.mxu0
    %v203 = vcombine.high %v191, %v191
    %v205 = vunpack.c.l.s4 1966171168
    %v206 = vunpack.c.0.s8 %v205
    %v207 = vlaneseq
    %v208 = vshrl.u32 %v207, 7
    %v209 = vsub.s32 %v206, %v208
    %v210 = vrot.slane %v191, %v209
    %v212 = vunpack.c.l.s4 1966171168
    %v213 = vunpack.c.0.s8 %v212
    %v214 = vlaneseq
    %v215 = vshrl.u32 %v214, 7
    %v216 = vsub.s32 %v213, %v215
    %v217 = vrot.slane %v203, %v216
    %v218 = vcombine.high %v210, %v210
    %v219 = vcombine.high %v217, %v217
    %v221 = vunpack.c.l.s4 1966171168
    %v222 = vunpack.c.0.s8 %v221
    %v223 = vlaneseq
    %v224 = vshrl.u32 %v223, 7
    %v225 = vsub.s32 %v222, %v224
    %v226 = vrot.slane %v210, %v225
    %v228 = vunpack.c.l.s4 1966171168
    %v229 = vunpack.c.0.s8 %v228
    %v230 = vlaneseq
    %v231 = vshrl.u32 %v230, 7
    %v232 = vsub.s32 %v229, %v231
    %v233 = vrot.slane %v217, %v232
    %v235 = vunpack.c.l.s4 1966171168
    %v236 = vunpack.c.0.s8 %v235
    %v237 = vlaneseq
    %v238 = vshrl.u32 %v237, 7
    %v239 = vsub.s32 %v236, %v238
    %v240 = vrot.slane %v218, %v239
    %v242 = vunpack.c.l.s4 1966171168
    %v243 = vunpack.c.0.s8 %v242
    %v244 = vlaneseq
    %v245 = vshrl.u32 %v244, 7
    %v246 = vsub.s32 %v243, %v245
    %v247 = vrot.slane %v219, %v246
    %v248 = vcombine.high %v226, %v226
    %v249 = vcombine.high %v233, %v233
    %v250 = vcombine.high %v240, %v240
    %v251 = vcombine.high %v247, %v247
    %v252 = vcombine.high %v197, %v197
    %v254 = vunpack.c.l.s4 1966171168
    %v255 = vunpack.c.0.s8 %v254
    %v256 = vlaneseq
    %v257 = vshrl.u32 %v256, 7
    %v258 = vsub.s32 %v255, %v257
    %v259 = vrot.slane %v197, %v258
    %v261 = vunpack.c.l.s4 1966171168
    %v262 = vunpack.c.0.s8 %v261
    %v263 = vlaneseq
    %v264 = vshrl.u32 %v263, 7
    %v265 = vsub.s32 %v262, %v264
    %v266 = vrot.slane %v252, %v265
    %v267 = vcombine.high %v259, %v259
    %v268 = vcombine.high %v266, %v266
    %v270 = vunpack.c.l.s4 1966171168
    %v271 = vunpack.c.0.s8 %v270
    %v272 = vlaneseq
    %v273 = vshrl.u32 %v272, 7
    %v274 = vsub.s32 %v271, %v273
    %v275 = vrot.slane %v259, %v274
    %v277 = vunpack.c.l.s4 1966171168
    %v278 = vunpack.c.0.s8 %v277
    %v279 = vlaneseq
    %v280 = vshrl.u32 %v279, 7
    %v281 = vsub.s32 %v278, %v280
    %v282 = vrot.slane %v266, %v281
    %v284 = vunpack.c.l.s4 1966171168
    %v285 = vunpack.c.0.s8 %v284
    %v286 = vlaneseq
    %v287 = vshrl.u32 %v286, 7
    %v288 = vsub.s32 %v285, %v287
    %v289 = vrot.slane %v267, %v288
    %v291 = vunpack.c.l.s4 1966171168
    %v292 = vunpack.c.0.s8 %v291
    %v293 = vlaneseq
    %v294 = vshrl.u32 %v293, 7
    %v295 = vsub.s32 %v292, %v294
    %v296 = vrot.slane %v268, %v295
    %v297 = vcombine.high %v275, %v275
    %v298 = vcombine.high %v282, %v282
    %v299 = vcombine.high %v289, %v289
    %v300 = vcombine.high %v296, %v296
    %v301 = vlaneseq
    %v302 = vshrl.u32 %v301, 7
    %v303 = vsub.s32 0, %v302
    %v304 = vrot.slane %v226, %v303
    %v305 = vlaneseq
    %v306 = vshrl.u32 %v305, 7
    %v307 = vsub.s32 0, %v306
    %v308 = vrot.slane %v240, %v307
    %v309 = vlaneseq
    %v310 = vshrl.u32 %v309, 7
    %v311 = vsub.s32 0, %v310
    %v312 = vrot.slane %v248, %v311
    %v313 = vlaneseq
    %v314 = vshrl.u32 %v313, 7
    %v315 = vsub.s32 0, %v314
    %v316 = vrot.slane %v250, %v315
    %v317 = vlaneseq
    %v318 = vshrl.u32 %v317, 7
    %v319 = vsub.s32 0, %v318
    %v320 = vrot.slane %v233, %v319
    %v321 = vlaneseq
    %v322 = vshrl.u32 %v321, 7
    %v323 = vsub.s32 0, %v322
    %v324 = vrot.slane %v247, %v323
    %v325 = vlaneseq
    %v326 = vshrl.u32 %v325, 7
    %v327 = vsub.s32 0, %v326
    %v328 = vrot.slane %v249, %v327
    %v329 = vlaneseq
    %v330 = vshrl.u32 %v329, 7
    %v331 = vsub.s32 0, %v330
    %v332 = vrot.slane %v251, %v331
    %v333 = vlaneseq
    %v334 = vshrl.u32 %v333, 7
    %v335 = vsub.s32 0, %v334
    %v336 = vrot.slane %v275, %v335
    %v337 = vlaneseq
    %v338 = vshrl.u32 %v337, 7
    %v339 = vsub.s32 0, %v338
    %v340 = vrot.slane %v289, %v339
    %v341 = vlaneseq
    %v342 = vshrl.u32 %v341, 7
    %v343 = vsub.s32 0, %v342
    %v344 = vrot.slane %v297, %v343
    %v345 = vlaneseq
    %v346 = vshrl.u32 %v345, 7
    %v347 = vsub.s32 0, %v346
    %v348 = vrot.slane %v299, %v347
    %v349 = vlaneseq
    %v350 = vshrl.u32 %v349, 7
    %v351 = vsub.s32 0, %v350
    %v352 = vrot.slane %v282, %v351
    %v353 = vlaneseq
    %v354 = vshrl.u32 %v353, 7
    %v355 = vsub.s32 0, %v354
    %v356 = vrot.slane %v296, %v355
    %v357 = vlaneseq
    %v358 = vshrl.u32 %v357, 7
    %v359 = vsub.s32 0, %v358
    %v360 = vrot.slane %v298, %v359
    %v361 = vlaneseq
    %v362 = vshrl.u32 %v361, 7
    %v363 = vsub.s32 0, %v362
    %v364 = vrot.slane %v300, %v363
    %381 = vrot.lane.b32.xlu0 %v191, 80
    %v382 = vpop.permute.xlu0 %381
    %383 = vrot.lane.b32.xlu0 %v197, 80
    %v384 = vpop.permute.xlu0 %383
    %v387 = vmul.f32 %v304, %v382
    %v388 = vmul.f32 %v308, %v382
    %v389 = vmul.f32 %v312, %v382
    %v390 = vmul.f32 %v316, %v382
    %v391 = vmul.f32 %v320, %v382
    %v392 = vmul.f32 %v324, %v382
    %v393 = vmul.f32 %v328, %v382
    %v394 = vmul.f32 %v332, %v382
    %v395 = vmul.f32 %v336, %v384
    %v396 = vmul.f32 %v340, %v384
    %v397 = vmul.f32 %v344, %v384
    %v398 = vmul.f32 %v348, %v384
    %v399 = vmul.f32 %v352, %v384
    %v400 = vmul.f32 %v356, %v384
    %v401 = vmul.f32 %v360, %v384
    %v402 = vmul.f32 %v364, %v384
    %v404 = vsel %vm117, %v387, 0
    %v407 = vsel %vm117, %v388, 0
    %v410 = vsel %vm117, %v389, 0
    %v413 = vsel %vm117, %v390, 0
    %v416 = vsel %vm117, %v391, 0
    %v419 = vsel %vm117, %v392, 0
    %v422 = vsel %vm117, %v393, 0
    %v425 = vsel %vm117, %v394, 0
    %v428 = vsel %vm117, %v395, 0
    %v431 = vsel %vm117, %v396, 0
    %v434 = vsel %vm117, %v397, 0
    %v437 = vsel %vm117, %v398, 0
    %v440 = vsel %vm117, %v399, 0
    %v443 = vsel %vm117, %v400, 0
    %v446 = vsel %vm117, %v401, 0
    %v449 = vsel %vm117, %v402, 0
    %451 = vmatprep.subr.mxu0 0.0
    %452 = vmatpush1.msra.mxu0 %v86
    %453 = vmatprep.subr.mxu0 0.0
    %454 = vmatpush1.msra.mxu0 %v87
    %455 = vmatprep.subr.mxu0 0.0
    %456 = vmatpush1.msra.mxu0 %v88
    %457 = vmatprep.subr.mxu0 0.0
    %458 = vmatpush1.msra.mxu0 %v89
    %459 = vmatprep.subr.mxu0 0.0
    %460 = vmatpush1.msra.mxu0 %v90
    %461 = vmatprep.subr.mxu0 0.0
    %462 = vmatpush1.msra.mxu0 %v91
    %463 = vmatprep.subr.mxu0 0.0
    %464 = vmatpush1.msra.mxu0 0.0
    %465 = vmatprep.subr.mxu0 0.0
    %466 = vmatpush1.msra.mxu0 0.0
    %467 = vmatprep.subr.mxu0 0.0
    %468 = vmatpush1.msra.mxu0 0.0
    %469 = vmatprep.subr.mxu0 0.0
    %470 = vmatpush1.msra.mxu0 0.0
    %471 = vmatprep.subr.mxu0 0.0
    %472 = vmatpush1.msra.mxu0 0.0
    %473 = vmatprep.subr.mxu0 0.0
    %474 = vmatpush1.msra.mxu0 0.0
    %475 = vmatprep.subr.mxu0 0.0
    %476 = vmatpush1.msra.mxu0 0.0
    %477 = vmatprep.subr.mxu0 0.0
    %478 = vmatpush1.msra.mxu0 0.0
    %479 = vmatprep.subr.mxu0 0.0
    %480 = vmatpush1.msra.mxu0 0.0
    %481 = vmatprep.subr.mxu0 0.0
    %482 = vmatpush1.msra.mxu0 0.0
    %483 = vmatprep.subr.mxu0 0.0
    %484 = vmatpush1.msra.mxu0 0.0
    %485 = vmatprep.subr.mxu0 0.0
    %486 = vmatpush1.msra.mxu0 0.0
    %487 = vmatprep.subr.mxu0 0.0
    %488 = vmatpush1.msra.mxu0 0.0
    %489 = vmatprep.subr.mxu0 0.0
    %490 = vmatpush1.msra.mxu0 0.0
    %491 = vmatprep.subr.mxu0 0.0
    %492 = vmatpush1.msra.mxu0 0.0
    %493 = vmatprep.subr.mxu0 0.0
    %494 = vmatpush1.msra.mxu0 0.0
    %495 = vmatprep.subr.mxu0 0.0
    %496 = vmatpush1.msra.mxu0 0.0
    %497 = vmatprep.subr.mxu0 0.0
    %498 = vmatpush1.msra.mxu0 0.0
    %499 = vmatprep.subr.mxu0 0.0
    %500 = vmatpush1.msra.mxu0 0.0
    %501 = vmatprep.subr.mxu0 0.0
    %502 = vmatpush1.msra.mxu0 0.0
    %503 = vmatprep.subr.mxu0 0.0
    %504 = vmatpush1.msra.mxu0 0.0
    %505 = vmatprep.subr.mxu0 0.0
    %506 = vmatpush1.msra.mxu0 0.0
    %507 = vmatprep.subr.mxu0 0.0
    %508 = vmatpush1.msra.mxu0 0.0
    %509 = vmatprep.subr.mxu0 0.0
    %510 = vmatpush1.msra.mxu0 0.0
    %511 = vmatprep.subr.mxu0 0.0
    %512 = vmatpush1.msra.mxu0 0.0
    %513 = vmatprep.subr.mxu0 0.0
    %514 = vmatpush1.msra.mxu0 0.0
    %515 = vmatprep.mubr.f32.mxu0 0.0
    %516 = vmatmul.mubr.f32.gmra.mrb[0].mxu0 %v404
    %v517 = vpop.f32.mrb[0].mxu0
    %v518 = vadd.f32 0.0, %v517
    %v519 = vpop.f32.mrb[0].mxu0
    %520 = vmatprep.mubr.f32.mxu0 0.0
    %521 = vmatmul.mubr.f32.gmra.mrb[0].mxu0 %v407
    %v522 = vpop.f32.mrb[0].mxu0
    %v523 = vadd.f32 0.0, %v522
    %v524 = vpop.f32.mrb[0].mxu0
    %525 = vmatprep.mubr.f32.mxu0 0.0
    %526 = vmatmul.mubr.f32.gmra.mrb[0].mxu0 %v410
    %v527 = vpop.f32.mrb[0].mxu0
    %v528 = vadd.f32 0.0, %v527
    %v529 = vpop.f32.mrb[0].mxu0
    %530 = vmatprep.mubr.f32.mxu0 0.0
    %531 = vmatmul.mubr.f32.gmra.mrb[0].mxu0 %v413
    %v532 = vpop.f32.mrb[0].mxu0
    %v533 = vadd.f32 0.0, %v532
    %v534 = vpop.f32.mrb[0].mxu0
    %535 = vmatprep.mubr.f32.mxu0 0.0
    %536 = vmatmul.mubr.f32.gmra.mrb[0].mxu0 %v416
    %v537 = vpop.f32.mrb[0].mxu0
    %v538 = vadd.f32 0.0, %v537
    %v539 = vpop.f32.mrb[0].mxu0
    %540 = vmatprep.mubr.f32.mxu0 0.0
    %541 = vmatmul.mubr.f32.gmra.mrb[0].mxu0 %v419
    %v542 = vpop.f32.mrb[0].mxu0
    %v543 = vadd.f32 0.0, %v542
    %v544 = vpop.f32.mrb[0].mxu0
    %545 = vmatprep.mubr.f32.mxu0 0.0
    %546 = vmatmul.mubr.f32.gmra.mrb[0].mxu0 %v422
    %v547 = vpop.f32.mrb[0].mxu0
    %v548 = vadd.f32 0.0, %v547
    %v549 = vpop.f32.mrb[0].mxu0
    %550 = vmatprep.mubr.f32.mxu0 0.0
    %551 = vmatmul.mubr.f32.gmra.mrb[0].mxu0 %v425
    %v552 = vpop.f32.mrb[0].mxu0
    %v553 = vadd.f32 0.0, %v552
    %v554 = vpop.f32.mrb[0].mxu0
    %555 = vmatprep.mubr.f32.mxu0 0.0
    %556 = vmatmul.mubr.f32.gmra.mrb[0].mxu0 %v428
    %v557 = vpop.f32.mrb[0].mxu0
    %v558 = vadd.f32 0.0, %v557
    %v559 = vpop.f32.mrb[0].mxu0
    %560 = vmatprep.mubr.f32.mxu0 0.0
    %561 = vmatmul.mubr.f32.gmra.mrb[0].mxu0 %v431
    %v562 = vpop.f32.mrb[0].mxu0
    %v563 = vadd.f32 0.0, %v562
    %v564 = vpop.f32.mrb[0].mxu0
    %565 = vmatprep.mubr.f32.mxu0 0.0
    %566 = vmatmul.mubr.f32.gmra.mrb[0].mxu0 %v434
    %v567 = vpop.f32.mrb[0].mxu0
    %v568 = vadd.f32 0.0, %v567
    %v569 = vpop.f32.mrb[0].mxu0
    %570 = vmatprep.mubr.f32.mxu0 0.0
    %571 = vmatmul.mubr.f32.gmra.mrb[0].mxu0 %v437
    %v572 = vpop.f32.mrb[0].mxu0
    %v573 = vadd.f32 0.0, %v572
    %v574 = vpop.f32.mrb[0].mxu0
    %575 = vmatprep.mubr.f32.mxu0 0.0
    %576 = vmatmul.mubr.f32.gmra.mrb[0].mxu0 %v440
    %v577 = vpop.f32.mrb[0].mxu0
    %v578 = vadd.f32 0.0, %v577
    %v579 = vpop.f32.mrb[0].mxu0
    %580 = vmatprep.mubr.f32.mxu0 0.0
    %581 = vmatmul.mubr.f32.gmra.mrb[0].mxu0 %v443
    %v582 = vpop.f32.mrb[0].mxu0
    %v583 = vadd.f32 0.0, %v582
    %v584 = vpop.f32.mrb[0].mxu0
    %585 = vmatprep.mubr.f32.mxu0 0.0
    %586 = vmatmul.mubr.f32.gmra.mrb[0].mxu0 %v446
    %v587 = vpop.f32.mrb[0].mxu0
    %v588 = vadd.f32 0.0, %v587
    %v589 = vpop.f32.mrb[0].mxu0
    %590 = vmatprep.mubr.f32.mxu0 0.0
    %591 = vmatmul.mubr.f32.gmra.mrb[0].mxu0 %v449
    %v592 = vpop.f32.mrb[0].mxu0
    %v593 = vadd.f32 0.0, %v592
    %v594 = vpop.f32.mrb[0].mxu0
    %595 = vdwg.mxu0
    %597 = vset.pattern.permute.xlu0 0
    %598 = vperm.xlu0 %597, %v84
    %v599 = vpop.permute.xlu0 %598
    %602 = vset.pattern.permute.xlu0 0
    %603 = vperm.xlu0 %602, %v85
    %v604 = vpop.permute.xlu0 %603
    %v606 = vadd.f32 %v518, %v599
    %v607 = vadd.f32 %v523, %v599
    %v608 = vadd.f32 %v528, %v599
    %v609 = vadd.f32 %v533, %v599
    %v610 = vadd.f32 %v538, %v599
    %v611 = vadd.f32 %v543, %v599
    %v612 = vadd.f32 %v548, %v599
    %v613 = vadd.f32 %v553, %v599
    %v614 = vadd.f32 %v558, %v604
    %v615 = vadd.f32 %v563, %v604
    %v616 = vadd.f32 %v568, %v604
    %v617 = vadd.f32 %v573, %v604
    %v618 = vadd.f32 %v578, %v604
    %v619 = vadd.f32 %v583, %v604
    %v620 = vadd.f32 %v588, %v604
    %v621 = vadd.f32 %v593, %v604
    %vm622 = vcmask 48128
    %v623 = vsel %vm622, %v606, -inf
    %v624 = vrot.slane %v623, 4
    %v625 = vmax.f32 %v623, %v624
    %v626 = vrot.slane %v625, 2
    %v627 = vmax.f32 %v625, %v626
    %v628 = vrot.slane %v627, 1
    %v629 = vmax.f32 %v627, %v628
    %v630 = vsel %vm622, %v607, -inf
    %v631 = vrot.slane %v630, 4
    %v632 = vmax.f32 %v630, %v631
    %v633 = vrot.slane %v632, 2
    %v634 = vmax.f32 %v632, %v633
    %v635 = vrot.slane %v634, 1
    %v636 = vmax.f32 %v634, %v635
    %v637 = vsel %vm622, %v608, -inf
    %v638 = vrot.slane %v637, 4
    %v639 = vmax.f32 %v637, %v638
    %v640 = vrot.slane %v639, 2
    %v641 = vmax.f32 %v639, %v640
    %v642 = vrot.slane %v641, 1
    %v643 = vmax.f32 %v641, %v642
    %v644 = vsel %vm622, %v609, -inf
    %v645 = vrot.slane %v644, 4
    %v646 = vmax.f32 %v644, %v645
    %v647 = vrot.slane %v646, 2
    %v648 = vmax.f32 %v646, %v647
    %v649 = vrot.slane %v648, 1
    %v650 = vmax.f32 %v648, %v649
    %v651 = vsel %vm622, %v610, -inf
    %v652 = vrot.slane %v651, 4
    %v653 = vmax.f32 %v651, %v652
    %v654 = vrot.slane %v653, 2
    %v655 = vmax.f32 %v653, %v654
    %v656 = vrot.slane %v655, 1
    %v657 = vmax.f32 %v655, %v656
    %v658 = vsel %vm622, %v611, -inf
    %v659 = vrot.slane %v658, 4
    %v660 = vmax.f32 %v658, %v659
    %v661 = vrot.slane %v660, 2
    %v662 = vmax.f32 %v660, %v661
    %v663 = vrot.slane %v662, 1
    %v664 = vmax.f32 %v662, %v663
    %v665 = vsel %vm622, %v612, -inf
    %v666 = vrot.slane %v665, 4
    %v667 = vmax.f32 %v665, %v666
    %v668 = vrot.slane %v667, 2
    %v669 = vmax.f32 %v667, %v668
    %v670 = vrot.slane %v669, 1
    %v671 = vmax.f32 %v669, %v670
    %v672 = vsel %vm622, %v613, -inf
    %v673 = vrot.slane %v672, 4
    %v674 = vmax.f32 %v672, %v673
    %v675 = vrot.slane %v674, 2
    %v676 = vmax.f32 %v674, %v675
    %v677 = vrot.slane %v676, 1
    %v678 = vmax.f32 %v676, %v677
    %v679 = vsel %vm622, %v614, -inf
    %v680 = vrot.slane %v679, 4
    %v681 = vmax.f32 %v679, %v680
    %v682 = vrot.slane %v681, 2
    %v683 = vmax.f32 %v681, %v682
    %v684 = vrot.slane %v683, 1
    %v685 = vmax.f32 %v683, %v684
    %v686 = vsel %vm622, %v615, -inf
    %v687 = vrot.slane %v686, 4
    %v688 = vmax.f32 %v686, %v687
    %v689 = vrot.slane %v688, 2
    %v690 = vmax.f32 %v688, %v689
    %v691 = vrot.slane %v690, 1
    %v692 = vmax.f32 %v690, %v691
    %v693 = vsel %vm622, %v616, -inf
    %v694 = vrot.slane %v693, 4
    %v695 = vmax.f32 %v693, %v694
    %v696 = vrot.slane %v695, 2
    %v697 = vmax.f32 %v695, %v696
    %v698 = vrot.slane %v697, 1
    %v699 = vmax.f32 %v697, %v698
    %v700 = vsel %vm622, %v617, -inf
    %v701 = vrot.slane %v700, 4
    %v702 = vmax.f32 %v700, %v701
    %v703 = vrot.slane %v702, 2
    %v704 = vmax.f32 %v702, %v703
    %v705 = vrot.slane %v704, 1
    %v706 = vmax.f32 %v704, %v705
    %v707 = vsel %vm622, %v618, -inf
    %v708 = vrot.slane %v707, 4
    %v709 = vmax.f32 %v707, %v708
    %v710 = vrot.slane %v709, 2
    %v711 = vmax.f32 %v709, %v710
    %v712 = vrot.slane %v711, 1
    %v713 = vmax.f32 %v711, %v712
    %v714 = vsel %vm622, %v619, -inf
    %v715 = vrot.slane %v714, 4
    %v716 = vmax.f32 %v714, %v715
    %v717 = vrot.slane %v716, 2
    %v718 = vmax.f32 %v716, %v717
    %v719 = vrot.slane %v718, 1
    %v720 = vmax.f32 %v718, %v719
    %v721 = vsel %vm622, %v620, -inf
    %v722 = vrot.slane %v721, 4
    %v723 = vmax.f32 %v721, %v722
    %v724 = vrot.slane %v723, 2
    %v725 = vmax.f32 %v723, %v724
    %v726 = vrot.slane %v725, 1
    %v727 = vmax.f32 %v725, %v726
    %v728 = vsel %vm622, %v621, -inf
    %v729 = vrot.slane %v728, 4
    %v730 = vmax.f32 %v728, %v729
    %v731 = vrot.slane %v730, 2
    %v732 = vmax.f32 %v730, %v731
    %v733 = vrot.slane %v732, 1
    %v734 = vmax.f32 %v732, %v733
    %v735 = vsub.f32 %v606, %v629
    %v736 = vsub.f32 %v607, %v636
    %v737 = vsub.f32 %v608, %v643
    %v738 = vsub.f32 %v609, %v650
    %v739 = vsub.f32 %v610, %v657
    %v740 = vsub.f32 %v611, %v664
    %v741 = vsub.f32 %v612, %v671
    %v742 = vsub.f32 %v613, %v678
    %v743 = vsub.f32 %v614, %v685
    %v744 = vsub.f32 %v615, %v692
    %v745 = vsub.f32 %v616, %v699
    %v746 = vsub.f32 %v617, %v706
    %v747 = vsub.f32 %v618, %v713
    %v748 = vsub.f32 %v619, %v720
    %v749 = vsub.f32 %v620, %v727
    %v750 = vsub.f32 %v621, %v734
    %v751 = vmul.f32 %v735, 1.442695
    %v752 = vpow.pop %v751
    %v753 = vmul.f32 %v736, 1.442695
    %v754 = vpow.pop %v753
    %v755 = vmul.f32 %v737, 1.442695
    %v756 = vpow.pop %v755
    %v757 = vmul.f32 %v738, 1.442695
    %v758 = vpow.pop %v757
    %v759 = vmul.f32 %v739, 1.442695
    %v760 = vpow.pop %v759
    %v761 = vmul.f32 %v740, 1.442695
    %v762 = vpow.pop %v761
    %v763 = vmul.f32 %v741, 1.442695
    %v764 = vpow.pop %v763
    %v765 = vmul.f32 %v742, 1.442695
    %v766 = vpow.pop %v765
    %v767 = vmul.f32 %v743, 1.442695
    %v768 = vpow.pop %v767
    %v769 = vmul.f32 %v744, 1.442695
    %v770 = vpow.pop %v769
    %v771 = vmul.f32 %v745, 1.442695
    %v772 = vpow.pop %v771
    %v773 = vmul.f32 %v746, 1.442695
    %v774 = vpow.pop %v773
    %v775 = vmul.f32 %v747, 1.442695
    %v776 = vpow.pop %v775
    %v777 = vmul.f32 %v748, 1.442695
    %v778 = vpow.pop %v777
    %v779 = vmul.f32 %v749, 1.442695
    %v780 = vpow.pop %v779
    %v781 = vmul.f32 %v750, 1.442695
    %v782 = vpow.pop %v781
    %v783 = vsel %vm622, %v752, 0.0
    %v784 = vrot.slane %v783, 4
    %v785 = vadd.f32 %v783, %v784
    %v786 = vrot.slane %v785, 2
    %v787 = vadd.f32 %v785, %v786
    %v788 = vrot.slane %v787, 1
    %v789 = vadd.f32 %v787, %v788
    %v790 = vsel %vm622, %v754, 0.0
    %v791 = vrot.slane %v790, 4
    %v792 = vadd.f32 %v790, %v791
    %v793 = vrot.slane %v792, 2
    %v794 = vadd.f32 %v792, %v793
    %v795 = vrot.slane %v794, 1
    %v796 = vadd.f32 %v794, %v795
    %v797 = vsel %vm622, %v756, 0.0
    %v798 = vrot.slane %v797, 4
    %v799 = vadd.f32 %v797, %v798
    %v800 = vrot.slane %v799, 2
    %v801 = vadd.f32 %v799, %v800
    %v802 = vrot.slane %v801, 1
    %v803 = vadd.f32 %v801, %v802
    %v804 = vsel %vm622, %v758, 0.0
    %v805 = vrot.slane %v804, 4
    %v806 = vadd.f32 %v804, %v805
    %v807 = vrot.slane %v806, 2
    %v808 = vadd.f32 %v806, %v807
    %v809 = vrot.slane %v808, 1
    %v810 = vadd.f32 %v808, %v809
    %v811 = vsel %vm622, %v760, 0.0
    %v812 = vrot.slane %v811, 4
    %v813 = vadd.f32 %v811, %v812
    %v814 = vrot.slane %v813, 2
    %v815 = vadd.f32 %v813, %v814
    %v816 = vrot.slane %v815, 1
    %v817 = vadd.f32 %v815, %v816
    %v818 = vsel %vm622, %v762, 0.0
    %v819 = vrot.slane %v818, 4
    %v820 = vadd.f32 %v818, %v819
    %v821 = vrot.slane %v820, 2
    %v822 = vadd.f32 %v820, %v821
    %v823 = vrot.slane %v822, 1
    %v824 = vadd.f32 %v822, %v823
    %v825 = vsel %vm622, %v764, 0.0
    %v826 = vrot.slane %v825, 4
    %v827 = vadd.f32 %v825, %v826
    %v828 = vrot.slane %v827, 2
    %v829 = vadd.f32 %v827, %v828
    %v830 = vrot.slane %v829, 1
    %v831 = vadd.f32 %v829, %v830
    %v832 = vsel %vm622, %v766, 0.0
    %v833 = vrot.slane %v832, 4
    %v834 = vadd.f32 %v832, %v833
    %v835 = vrot.slane %v834, 2
    %v836 = vadd.f32 %v834, %v835
    %v837 = vrot.slane %v836, 1
    %v838 = vadd.f32 %v836, %v837
    %v839 = vsel %vm622, %v768, 0.0
    %v840 = vrot.slane %v839, 4
    %v841 = vadd.f32 %v839, %v840
    %v842 = vrot.slane %v841, 2
    %v843 = vadd.f32 %v841, %v842
    %v844 = vrot.slane %v843, 1
    %v845 = vadd.f32 %v843, %v844
    %v846 = vsel %vm622, %v770, 0.0
    %v847 = vrot.slane %v846, 4
    %v848 = vadd.f32 %v846, %v847
    %v849 = vrot.slane %v848, 2
    %v850 = vadd.f32 %v848, %v849
    %v851 = vrot.slane %v850, 1
    %v852 = vadd.f32 %v850, %v851
    %v853 = vsel %vm622, %v772, 0.0
    %v854 = vrot.slane %v853, 4
    %v855 = vadd.f32 %v853, %v854
    %v856 = vrot.slane %v855, 2
    %v857 = vadd.f32 %v855, %v856
    %v858 = vrot.slane %v857, 1
    %v859 = vadd.f32 %v857, %v858
    %v860 = vsel %vm622, %v774, 0.0
    %v861 = vrot.slane %v860, 4
    %v862 = vadd.f32 %v860, %v861
    %v863 = vrot.slane %v862, 2
    %v864 = vadd.f32 %v862, %v863
    %v865 = vrot.slane %v864, 1
    %v866 = vadd.f32 %v864, %v865
    %v867 = vsel %vm622, %v776, 0.0
    %v868 = vrot.slane %v867, 4
    %v869 = vadd.f32 %v867, %v868
    %v870 = vrot.slane %v869, 2
    %v871 = vadd.f32 %v869, %v870
    %v872 = vrot.slane %v871, 1
    %v873 = vadd.f32 %v871, %v872
    %v874 = vsel %vm622, %v778, 0.0
    %v875 = vrot.slane %v874, 4
    %v876 = vadd.f32 %v874, %v875
    %v877 = vrot.slane %v876, 2
    %v878 = vadd.f32 %v876, %v877
    %v879 = vrot.slane %v878, 1
    %v880 = vadd.f32 %v878, %v879
    %v881 = vsel %vm622, %v780, 0.0
    %v882 = vrot.slane %v881, 4
    %v883 = vadd.f32 %v881, %v882
    %v884 = vrot.slane %v883, 2
    %v885 = vadd.f32 %v883, %v884
    %v886 = vrot.slane %v885, 1
    %v887 = vadd.f32 %v885, %v886
    %v888 = vsel %vm622, %v782, 0.0
    %v889 = vrot.slane %v888, 4
    %v890 = vadd.f32 %v888, %v889
    %v891 = vrot.slane %v890, 2
    %v892 = vadd.f32 %v890, %v891
    %v893 = vrot.slane %v892, 1
    %v894 = vadd.f32 %v892, %v893
    %v895 = vrcp.pop %v789
    %v896 = vrcp.pop %v796
    %v897 = vrcp.pop %v803
    %v898 = vrcp.pop %v810
    %v899 = vrcp.pop %v817
    %v900 = vrcp.pop %v824
    %v901 = vrcp.pop %v831
    %v902 = vrcp.pop %v838
    %v903 = vrcp.pop %v845
    %v904 = vrcp.pop %v852
    %v905 = vrcp.pop %v859
    %v906 = vrcp.pop %v866
    %v907 = vrcp.pop %v873
    %v908 = vrcp.pop %v880
    %v909 = vrcp.pop %v887
    %v910 = vrcp.pop %v894
    %v911 = vmul.f32 %v752, %v895
    %v912 = vmul.f32 %v754, %v896
    %v913 = vmul.f32 %v756, %v897
    %v914 = vmul.f32 %v758, %v898
    %v915 = vmul.f32 %v760, %v899
    %v916 = vmul.f32 %v762, %v900
    %v917 = vmul.f32 %v764, %v901
    %v918 = vmul.f32 %v766, %v902
    %v919 = vmul.f32 %v768, %v903
    %v920 = vmul.f32 %v770, %v904
    %v921 = vmul.f32 %v772, %v905
    %v922 = vmul.f32 %v774, %v906
    %v923 = vmul.f32 %v776, %v907
    %v924 = vmul.f32 %v778, %v908
    %v925 = vmul.f32 %v780, %v909
    %v926 = vmul.f32 %v782, %v910
    %v928 = vsel %vm622, %v911, 0
    %v931 = vsel %vm622, %v912, 0
    %v934 = vsel %vm622, %v913, 0
    %v937 = vsel %vm622, %v914, 0
    %v940 = vsel %vm622, %v915, 0
    %v943 = vsel %vm622, %v916, 0
    %v946 = vsel %vm622, %v917, 0
    %v949 = vsel %vm622, %v918, 0
    %v952 = vsel %vm622, %v919, 0
    %v955 = vsel %vm622, %v920, 0
    %v958 = vsel %vm622, %v921, 0
    %v961 = vsel %vm622, %v922, 0
    %v964 = vsel %vm622, %v923, 0
    %v967 = vsel %vm622, %v924, 0
    %v970 = vsel %vm622, %v925, 0
    %v973 = vsel %vm622, %v926, 0
    %vm975 = vcmask 1045504
    %v977 = vsel %vm975, %v92, 0
    %979 = vmatprep.subr.mxu0 0.0
    %980 = vmatpush1.msra.mxu0 %v977
    %981 = vmatprep.subr.mxu0 0.0
    %982 = vmatpush1.msra.mxu0 0.0
    %983 = vmatprep.subr.mxu0 0.0
    %984 = vmatpush1.msra.mxu0 0.0
    %985 = vmatprep.subr.mxu0 0.0
    %986 = vmatpush1.msra.mxu0 0.0
    %987 = vmatprep.subr.mxu0 0.0
    %988 = vmatpush1.msra.mxu0 0.0
    %989 = vmatprep.subr.mxu0 0.0
    %990 = vmatpush1.msra.mxu0 0.0
    %991 = vmatprep.subr.mxu0 0.0
    %992 = vmatpush1.msra.mxu0 0.0
    %993 = vmatprep.subr.mxu0 0.0
    %994 = vmatpush1.msra.mxu0 0.0
    %995 = vmatprep.subr.mxu0 0.0
    %996 = vmatpush1.msra.mxu0 0.0
    %997 = vmatprep.subr.mxu0 0.0
    %998 = vmatpush1.msra.mxu0 0.0
    %999 = vmatprep.subr.mxu0 0.0
    %1000 = vmatpush1.msra.mxu0 0.0
    %1001 = vmatprep.subr.mxu0 0.0
    %1002 = vmatpush1.msra.mxu0 0.0
    %1003 = vmatprep.subr.mxu0 0.0
    %1004 = vmatpush1.msra.mxu0 0.0
    %1005 = vmatprep.subr.mxu0 0.0
    %1006 = vmatpush1.msra.mxu0 0.0
    %1007 = vmatprep.subr.mxu0 0.0
    %1008 = vmatpush1.msra.mxu0 0.0
    %1009 = vmatprep.subr.mxu0 0.0
    %1010 = vmatpush1.msra.mxu0 0.0
    %1011 = vmatprep.subr.mxu0 0.0
    %1012 = vmatpush1.msra.mxu0 0.0
    %1013 = vmatprep.subr.mxu0 0.0
    %1014 = vmatpush1.msra.mxu0 0.0
    %1015 = vmatprep.subr.mxu0 0.0
    %1016 = vmatpush1.msra.mxu0 0.0
    %1017 = vmatprep.subr.mxu0 0.0
    %1018 = vmatpush1.msra.mxu0 0.0
    %1019 = vmatprep.subr.mxu0 0.0
    %1020 = vmatpush1.msra.mxu0 0.0
    %1021 = vmatprep.subr.mxu0 0.0
    %1022 = vmatpush1.msra.mxu0 0.0
    %1023 = vmatprep.subr.mxu0 0.0
    %1024 = vmatpush1.msra.mxu0 0.0
    %1025 = vmatprep.subr.mxu0 0.0
    %1026 = vmatpush1.msra.mxu0 0.0
    %1027 = vmatprep.subr.mxu0 0.0
    %1028 = vmatpush1.msra.mxu0 0.0
    %1029 = vmatprep.subr.mxu0 0.0
    %1030 = vmatpush1.msra.mxu0 0.0
    %1031 = vmatprep.subr.mxu0 0.0
    %1032 = vmatpush1.msra.mxu0 0.0
    %1033 = vmatprep.subr.mxu0 0.0
    %1034 = vmatpush1.msra.mxu0 0.0
    %1035 = vmatprep.subr.mxu0 0.0
    %1036 = vmatpush1.msra.mxu0 0.0
    %1037 = vmatprep.subr.mxu0 0.0
    %1038 = vmatpush1.msra.mxu0 0.0
    %1039 = vmatprep.subr.mxu0 0.0
    %1040 = vmatpush1.msra.mxu0 0.0
    %1041 = vmatprep.subr.mxu0 0.0
    %1042 = vmatpush1.msra.mxu0 0.0
    %1043 = vmatprep.mubr.f32.mxu0 0.0
    %1044 = vmatmul.mubr.f32.gmra.mrb[0].mxu0 %v928
    %v1045 = vpop.f32.mrb[0].mxu0
    %v1046 = vadd.f32 0.0, %v1045
    %v1047 = vpop.f32.mrb[0].mxu0
    %1048 = vmatprep.mubr.f32.mxu0 0.0
    %1049 = vmatmul.mubr.f32.gmra.mrb[0].mxu0 %v931
    %v1050 = vpop.f32.mrb[0].mxu0
    %v1051 = vadd.f32 0.0, %v1050
    %v1052 = vpop.f32.mrb[0].mxu0
    %1053 = vmatprep.mubr.f32.mxu0 0.0
    %1054 = vmatmul.mubr.f32.gmra.mrb[0].mxu0 %v934
    %v1055 = vpop.f32.mrb[0].mxu0
    %v1056 = vadd.f32 0.0, %v1055
    %v1057 = vpop.f32.mrb[0].mxu0
    %1058 = vmatprep.mubr.f32.mxu0 0.0
    %1059 = vmatmul.mubr.f32.gmra.mrb[0].mxu0 %v937
    %v1060 = vpop.f32.mrb[0].mxu0
    %v1061 = vadd.f32 0.0, %v1060
    %v1062 = vpop.f32.mrb[0].mxu0
    %1063 = vmatprep.mubr.f32.mxu0 0.0
    %1064 = vmatmul.mubr.f32.gmra.mrb[0].mxu0 %v940
    %v1065 = vpop.f32.mrb[0].mxu0
    %v1066 = vadd.f32 0.0, %v1065
    %v1067 = vpop.f32.mrb[0].mxu0
    %1068 = vmatprep.mubr.f32.mxu0 0.0
    %1069 = vmatmul.mubr.f32.gmra.mrb[0].mxu0 %v943
    %v1070 = vpop.f32.mrb[0].mxu0
    %v1071 = vadd.f32 0.0, %v1070
    %v1072 = vpop.f32.mrb[0].mxu0
    %1073 = vmatprep.mubr.f32.mxu0 0.0
    %1074 = vmatmul.mubr.f32.gmra.mrb[0].mxu0 %v946
    %v1075 = vpop.f32.mrb[0].mxu0
    %v1076 = vadd.f32 0.0, %v1075
    %v1077 = vpop.f32.mrb[0].mxu0
    %1078 = vmatprep.mubr.f32.mxu0 0.0
    %1079 = vmatmul.mubr.f32.gmra.mrb[0].mxu0 %v949
    %v1080 = vpop.f32.mrb[0].mxu0
    %v1081 = vadd.f32 0.0, %v1080
    %v1082 = vpop.f32.mrb[0].mxu0
    %1083 = vmatprep.mubr.f32.mxu0 0.0
    %1084 = vmatmul.mubr.f32.gmra.mrb[0].mxu0 %v952
    %v1085 = vpop.f32.mrb[0].mxu0
    %v1086 = vadd.f32 0.0, %v1085
    %v1087 = vpop.f32.mrb[0].mxu0
    %1088 = vmatprep.mubr.f32.mxu0 0.0
    %1089 = vmatmul.mubr.f32.gmra.mrb[0].mxu0 %v955
    %v1090 = vpop.f32.mrb[0].mxu0
    %v1091 = vadd.f32 0.0, %v1090
    %v1092 = vpop.f32.mrb[0].mxu0
    %1093 = vmatprep.mubr.f32.mxu0 0.0
    %1094 = vmatmul.mubr.f32.gmra.mrb[0].mxu0 %v958
    %v1095 = vpop.f32.mrb[0].mxu0
    %v1096 = vadd.f32 0.0, %v1095
    %v1097 = vpop.f32.mrb[0].mxu0
    %1098 = vmatprep.mubr.f32.mxu0 0.0
    %1099 = vmatmul.mubr.f32.gmra.mrb[0].mxu0 %v961
    %v1100 = vpop.f32.mrb[0].mxu0
    %v1101 = vadd.f32 0.0, %v1100
    %v1102 = vpop.f32.mrb[0].mxu0
    %1103 = vmatprep.mubr.f32.mxu0 0.0
    %1104 = vmatmul.mubr.f32.gmra.mrb[0].mxu0 %v964
    %v1105 = vpop.f32.mrb[0].mxu0
    %v1106 = vadd.f32 0.0, %v1105
    %v1107 = vpop.f32.mrb[0].mxu0
    %1108 = vmatprep.mubr.f32.mxu0 0.0
    %1109 = vmatmul.mubr.f32.gmra.mrb[0].mxu0 %v967
    %v1110 = vpop.f32.mrb[0].mxu0
    %v1111 = vadd.f32 0.0, %v1110
    %v1112 = vpop.f32.mrb[0].mxu0
    %1113 = vmatprep.mubr.f32.mxu0 0.0
    %1114 = vmatmul.mubr.f32.gmra.mrb[0].mxu0 %v970
    %v1115 = vpop.f32.mrb[0].mxu0
    %v1116 = vadd.f32 0.0, %v1115
    %v1117 = vpop.f32.mrb[0].mxu0
    %1118 = vmatprep.mubr.f32.mxu0 0.0
    %1119 = vmatmul.mubr.f32.gmra.mrb[0].mxu0 %v973
    %v1120 = vpop.f32.mrb[0].mxu0
    %v1121 = vadd.f32 0.0, %v1120
    %v1122 = vpop.f32.mrb[0].mxu0
    %1123 = vdwg.mxu0
    %1126 = vrot.lane.b32.xlu0 %v191, 32
    %v1127 = vpop.permute.xlu0 %1126
    %1128 = vrot.lane.b32.xlu0 %v193, 32
    %v1129 = vpop.permute.xlu0 %1128
    %1130 = vrot.lane.b32.xlu0 %v197, 32
    %v1131 = vpop.permute.xlu0 %1130
    %1132 = vrot.lane.b32.xlu0 %v199, 32
    %v1133 = vpop.permute.xlu0 %1132
    %vm1134 = vcmask 261120
    %v1135 = vsel %vm1134, %v1127, %v1129
    %v1136 = vsel %vm1134, %v1131, %v1133
    %v1139 = vmul.f32 %v1046, %v1135
    %v1140 = vmul.f32 %v1051, %v1135
    %v1141 = vmul.f32 %v1056, %v1135
    %v1142 = vmul.f32 %v1061, %v1135
    %v1143 = vmul.f32 %v1066, %v1135
    %v1144 = vmul.f32 %v1071, %v1135
    %v1145 = vmul.f32 %v1076, %v1135
    %v1146 = vmul.f32 %v1081, %v1135
    %v1147 = vmul.f32 %v1086, %v1136
    %v1148 = vmul.f32 %v1091, %v1136
    %v1149 = vmul.f32 %v1096, %v1136
    %v1150 = vmul.f32 %v1101, %v1136
    %v1151 = vmul.f32 %v1106, %v1136
    %v1152 = vmul.f32 %v1111, %v1136
    %v1153 = vmul.f32 %v1116, %v1136
    %v1154 = vmul.f32 %v1121, %v1136
    %v1155 = vsel %vm117, %v1139, 0.0
    %v1156 = vrot.slane %v1155, 4
    %v1157 = vadd.f32 %v1155, %v1156
    %v1158 = vrot.slane %v1157, 2
    %v1159 = vadd.f32 %v1157, %v1158
    %v1160 = vrot.slane %v1159, 1
    %v1161 = vadd.f32 %v1159, %v1160
    %v1162 = vsel %vm117, %v1140, 0.0
    %v1163 = vrot.slane %v1162, 4
    %v1164 = vadd.f32 %v1162, %v1163
    %v1165 = vrot.slane %v1164, 2
    %v1166 = vadd.f32 %v1164, %v1165
    %v1167 = vrot.slane %v1166, 1
    %v1168 = vadd.f32 %v1166, %v1167
    %v1169 = vsel %vm117, %v1141, 0.0
    %v1170 = vrot.slane %v1169, 4
    %v1171 = vadd.f32 %v1169, %v1170
    %v1172 = vrot.slane %v1171, 2
    %v1173 = vadd.f32 %v1171, %v1172
    %v1174 = vrot.slane %v1173, 1
    %v1175 = vadd.f32 %v1173, %v1174
    %v1176 = vsel %vm117, %v1142, 0.0
    %v1177 = vrot.slane %v1176, 4
    %v1178 = vadd.f32 %v1176, %v1177
    %v1179 = vrot.slane %v1178, 2
    %v1180 = vadd.f32 %v1178, %v1179
    %v1181 = vrot.slane %v1180, 1
    %v1182 = vadd.f32 %v1180, %v1181
    %v1183 = vsel %vm117, %v1143, 0.0
    %v1184 = vrot.slane %v1183, 4
    %v1185 = vadd.f32 %v1183, %v1184
    %v1186 = vrot.slane %v1185, 2
    %v1187 = vadd.f32 %v1185, %v1186
    %v1188 = vrot.slane %v1187, 1
    %v1189 = vadd.f32 %v1187, %v1188
    %v1190 = vsel %vm117, %v1144, 0.0
    %v1191 = vrot.slane %v1190, 4
    %v1192 = vadd.f32 %v1190, %v1191
    %v1193 = vrot.slane %v1192, 2
    %v1194 = vadd.f32 %v1192, %v1193
    %v1195 = vrot.slane %v1194, 1
    %v1196 = vadd.f32 %v1194, %v1195
    %v1197 = vsel %vm117, %v1145, 0.0
    %v1198 = vrot.slane %v1197, 4
    %v1199 = vadd.f32 %v1197, %v1198
    %v1200 = vrot.slane %v1199, 2
    %v1201 = vadd.f32 %v1199, %v1200
    %v1202 = vrot.slane %v1201, 1
    %v1203 = vadd.f32 %v1201, %v1202
    %v1204 = vsel %vm117, %v1146, 0.0
    %v1205 = vrot.slane %v1204, 4
    %v1206 = vadd.f32 %v1204, %v1205
    %v1207 = vrot.slane %v1206, 2
    %v1208 = vadd.f32 %v1206, %v1207
    %v1209 = vrot.slane %v1208, 1
    %v1210 = vadd.f32 %v1208, %v1209
    %v1211 = vsel %vm117, %v1147, 0.0
    %v1212 = vrot.slane %v1211, 4
    %v1213 = vadd.f32 %v1211, %v1212
    %v1214 = vrot.slane %v1213, 2
    %v1215 = vadd.f32 %v1213, %v1214
    %v1216 = vrot.slane %v1215, 1
    %v1217 = vadd.f32 %v1215, %v1216
    %v1218 = vsel %vm117, %v1148, 0.0
    %v1219 = vrot.slane %v1218, 4
    %v1220 = vadd.f32 %v1218, %v1219
    %v1221 = vrot.slane %v1220, 2
    %v1222 = vadd.f32 %v1220, %v1221
    %v1223 = vrot.slane %v1222, 1
    %v1224 = vadd.f32 %v1222, %v1223
    %v1225 = vsel %vm117, %v1149, 0.0
    %v1226 = vrot.slane %v1225, 4
    %v1227 = vadd.f32 %v1225, %v1226
    %v1228 = vrot.slane %v1227, 2
    %v1229 = vadd.f32 %v1227, %v1228
    %v1230 = vrot.slane %v1229, 1
    %v1231 = vadd.f32 %v1229, %v1230
    %v1232 = vsel %vm117, %v1150, 0.0
    %v1233 = vrot.slane %v1232, 4
    %v1234 = vadd.f32 %v1232, %v1233
    %v1235 = vrot.slane %v1234, 2
    %v1236 = vadd.f32 %v1234, %v1235
    %v1237 = vrot.slane %v1236, 1
    %v1238 = vadd.f32 %v1236, %v1237
    %v1239 = vsel %vm117, %v1151, 0.0
    %v1240 = vrot.slane %v1239, 4
    %v1241 = vadd.f32 %v1239, %v1240
    %v1242 = vrot.slane %v1241, 2
    %v1243 = vadd.f32 %v1241, %v1242
    %v1244 = vrot.slane %v1243, 1
    %v1245 = vadd.f32 %v1243, %v1244
    %v1246 = vsel %vm117, %v1152, 0.0
    %v1247 = vrot.slane %v1246, 4
    %v1248 = vadd.f32 %v1246, %v1247
    %v1249 = vrot.slane %v1248, 2
    %v1250 = vadd.f32 %v1248, %v1249
    %v1251 = vrot.slane %v1250, 1
    %v1252 = vadd.f32 %v1250, %v1251
    %v1253 = vsel %vm117, %v1153, 0.0
    %v1254 = vrot.slane %v1253, 4
    %v1255 = vadd.f32 %v1253, %v1254
    %v1256 = vrot.slane %v1255, 2
    %v1257 = vadd.f32 %v1255, %v1256
    %v1258 = vrot.slane %v1257, 1
    %v1259 = vadd.f32 %v1257, %v1258
    %v1260 = vsel %vm117, %v1154, 0.0
    %v1261 = vrot.slane %v1260, 4
    %v1262 = vadd.f32 %v1260, %v1261
    %v1263 = vrot.slane %v1262, 2
    %v1264 = vadd.f32 %v1262, %v1263
    %v1265 = vrot.slane %v1264, 1
    %v1266 = vadd.f32 %v1264, %v1265
    %v1267 = vld [vmem:[#allocation2] sm:$0xff]
    %v1268 = vld [vmem:[#allocation2 + $0x8] sm:$0xff]
    %v1269 = vld [vmem:[#allocation2 + $0x10] sm:$0xff]
    %v1270 = vld [vmem:[#allocation2 + $0x18] sm:$0xff]
    %v1271 = vld [vmem:[#allocation2 + $0x20] sm:$0xff]
    %v1272 = vld [vmem:[#allocation2 + $0x28] sm:$0xff]
    %v1273 = vld [vmem:[%s5] sm:$0x1]
    %v1275 = vlaneseq
    %v1276 = vshrl.u32 %v1275, 7
    %v1277 = vsub.s32 0, %v1276
    %v1278 = vrot.slane %v1273, %v1277
    %vm1296 = vcmask 1041409
    %v1297 = vsel %vm1296, %v1168, %v1161
    %vm1298 = vcmask 1042434
    %v1299 = vsel %vm1298, %v1175, %v1297
    %vm1300 = vcmask 1043459
    %v1301 = vsel %vm1300, %v1182, %v1299
    %vm1302 = vcmask 1044484
    %v1303 = vsel %vm1302, %v1189, %v1301
    %vm1304 = vcmask 1045509
    %v1305 = vsel %vm1304, %v1196, %v1303
    %vm1306 = vcmask 1046534
    %v1307 = vsel %vm1306, %v1203, %v1305
    %vm1308 = vcmask 1047559
    %v1309 = vsel %vm1308, %v1210, %v1307
    %v1310 = vsel %vm1296, %v1224, %v1217
    %v1311 = vsel %vm1298, %v1231, %v1310
    %v1312 = vsel %vm1300, %v1238, %v1311
    %v1313 = vsel %vm1302, %v1245, %v1312
    %v1314 = vsel %vm1304, %v1252, %v1313
    %v1315 = vsel %vm1306, %v1259, %v1314
    %v1316 = vsel %vm1308, %v1266, %v1315
    %v1317 = vsel %vm117, %v1309, 0
    %v1319 = vsel %vm117, %v1316, 0
    %1321 = vmatprep.subr.mxu0 0.0
    %1322 = vmatpush1.msra.mxu0 %v1267
    %1323 = vmatprep.subr.mxu0 0.0
    %1324 = vmatpush1.msra.mxu0 %v1268
    %1325 = vmatprep.subr.mxu0 0.0
    %1326 = vmatpush1.msra.mxu0 %v1269
    %1327 = vmatprep.subr.mxu0 0.0
    %1328 = vmatpush1.msra.mxu0 %v1270
    %1329 = vmatprep.subr.mxu0 0.0
    %1330 = vmatpush1.msra.mxu0 %v1271
    %1331 = vmatprep.subr.mxu0 0.0
    %1332 = vmatpush1.msra.mxu0 %v1272
    %1333 = vmatprep.subr.mxu0 0.0
    %1334 = vmatpush1.msra.mxu0 0.0
    %1335 = vmatprep.subr.mxu0 0.0
    %1336 = vmatpush1.msra.mxu0 0.0
    %1337 = vmatprep.subr.mxu0 0.0
    %1338 = vmatpush1.msra.mxu0 0.0
    %1339 = vmatprep.subr.mxu0 0.0
    %1340 = vmatpush1.msra.mxu0 0.0
    %1341 = vmatprep.subr.mxu0 0.0
    %1342 = vmatpush1.msra.mxu0 0.0
    %1343 = vmatprep.subr.mxu0 0.0
    %1344 = vmatpush1.msra.mxu0 0.0
    %1345 = vmatprep.subr.mxu0 0.0
    %1346 = vmatpush1.msra.mxu0 0.0
    %1347 = vmatprep.subr.mxu0 0.0
    %1348 = vmatpush1.msra.mxu0 0.0
    %1349 = vmatprep.subr.mxu0 0.0
    %1350 = vmatpush1.msra.mxu0 0.0
    %1351 = vmatprep.subr.mxu0 0.0
    %1352 = vmatpush1.msra.mxu0 0.0
    %1353 = vmatprep.subr.mxu0 0.0
    %1354 = vmatpush1.msra.mxu0 0.0
    %1355 = vmatprep.subr.mxu0 0.0
    %1356 = vmatpush1.msra.mxu0 0.0
    %1357 = vmatprep.subr.mxu0 0.0
    %1358 = vmatpush1.msra.mxu0 0.0
    %1359 = vmatprep.subr.mxu0 0.0
    %1360 = vmatpush1.msra.mxu0 0.0
    %1361 = vmatprep.subr.mxu0 0.0
    %1362 = vmatpush1.msra.mxu0 0.0
    %1363 = vmatprep.subr.mxu0 0.0
    %1364 = vmatpush1.msra.mxu0 0.0
    %1365 = vmatprep.subr.mxu0 0.0
    %1366 = vmatpush1.msra.mxu0 0.0
    %1367 = vmatprep.subr.mxu0 0.0
    %1368 = vmatpush1.msra.mxu0 0.0
    %1369 = vmatprep.subr.mxu0 0.0
    %1370 = vmatpush1.msra.mxu0 0.0
    %1371 = vmatprep.subr.mxu0 0.0
    %1372 = vmatpush1.msra.mxu0 0.0
    %1373 = vmatprep.subr.mxu0 0.0
    %1374 = vmatpush1.msra.mxu0 0.0
    %1375 = vmatprep.subr.mxu0 0.0
    %1376 = vmatpush1.msra.mxu0 0.0
    %1377 = vmatprep.subr.mxu0 0.0
    %1378 = vmatpush1.msra.mxu0 0.0
    %1379 = vmatprep.subr.mxu0 0.0
    %1380 = vmatpush1.msra.mxu0 0.0
    %1381 = vmatprep.subr.mxu0 0.0
    %1382 = vmatpush1.msra.mxu0 0.0
    %1383 = vmatprep.subr.mxu0 0.0
    %1384 = vmatpush1.msra.mxu0 0.0
    %1385 = vmatprep.mubr.f32.mxu0 0.0
    %1386 = vmatmul.mubr.f32.gmra.mrb[0].mxu0 %v1317
    %v1387 = vpop.f32.mrb[0].mxu0
    %v1388 = vadd.f32 %v1278, %v1387
    %v1389 = vpop.f32.mrb[0].mxu0
    %1390 = vmatprep.mubr.f32.mxu0 0.0
    %1391 = vmatmul.mubr.f32.gmra.mrb[0].mxu0 %v1319
    %v1392 = vpop.f32.mrb[0].mxu0
    %v1393 = vadd.f32 %v1278, %v1392
    %v1394 = vpop.f32.mrb[0].mxu0
    %1395 = vdwg.mxu0
    %v1396 = vadd.f32 %v82, %v1388
    %v1397 = vadd.f32 %v83, %v1393
    %v1398 = vld [vmem:[%s6] sm:$0x1]
    %v1399 = vld [vmem:[%s7] sm:$0x1]
    %v1400 = vsel %vm117, %v1396, 0.0
    %1401 = vadd.xlane.f32.xlu0 %v1400
    %v1402 = vpop.xlane.xlu0 %1401
    %v1403 = vsel %vm117, %v1397, 0.0
    %1404 = vadd.xlane.f32.xlu0 %v1403
    %v1405 = vpop.xlane.xlu0 %1404
    %v1406 = vrcp.pop 48.0
    %v1407 = vmul.f32 %v1402, %v1406
    %v1408 = vmul.f32 %v1405, %v1406
    %v1409 = vsub.f32 %v1396, %v1407
    %v1410 = vsub.f32 %v1397, %v1408
    %v1411 = vmul.f32 %v1409, %v1409
    %v1412 = vmul.f32 %v1410, %v1410
    %v1413 = vsel %vm117, %v1411, 0.0
    %1414 = vadd.xlane.f32.xlu0 %v1413
    %v1415 = vpop.xlane.xlu0 %1414
    %v1416 = vsel %vm117, %v1412, 0.0
    %1417 = vadd.xlane.f32.xlu0 %v1416
    %v1418 = vpop.xlane.xlu0 %1417
    %v1419 = vmul.f32 %v1415, %v1406
    %v1420 = vmul.f32 %v1418, %v1406
    %v1421 = vadd.f32 %v1419, 1e-05
    %v1422 = vadd.f32 %v1420, 1e-05
    %v1423 = vrsqrt.pop %v1421
    %v1424 = vrsqrt.pop %v1422
    %v1425 = vmul.f32 %v1409, %v1423
    %v1426 = vmul.f32 %v1410, %v1424
    %v1428 = vlaneseq
    %v1429 = vshrl.u32 %v1428, 7
    %v1430 = vsub.s32 0, %v1429
    %v1431 = vrot.slane %v1398, %v1430
    %v1433 = vmul.f32 %v1425, %v1431
    %v1434 = vmul.f32 %v1426, %v1431
    %v1436 = vlaneseq
    %v1437 = vshrl.u32 %v1436, 7
    %v1438 = vsub.s32 0, %v1437
    %v1439 = vrot.slane %v1399, %v1438
    %v1441 = vadd.f32 %v1433, %v1439
    %v1442 = vadd.f32 %v1434, %v1439
    %v1443 = vld [vmem:[#allocation5] sm:$0xff]
    %v1444 = vld [vmem:[#allocation5 + $0x8] sm:$0xff]
    %v1445 = vld [vmem:[#allocation5 + $0x10] sm:$0xff]
    %v1446 = vld [vmem:[#allocation5 + $0x18] sm:$0xff]
    %v1447 = vld [vmem:[#allocation5 + $0x20] sm:$0xff]
    %v1448 = vld [vmem:[#allocation5 + $0x28] sm:$0xff]
    %v1449 = vld [vmem:[%s9] sm:$0x1]
    %v1451 = vlaneseq
    %v1452 = vshrl.u32 %v1451, 7
    %v1453 = vsub.s32 0, %v1452
    %v1454 = vrot.slane %v1449, %v1453
    %v1457 = vsel %vm117, %v1441, 0
    %v1460 = vsel %vm117, %v1442, 0
    %1462 = vmatprep.subr.mxu0 0.0
    %1463 = vmatpush1.msra.mxu0 %v1443
    %1464 = vmatprep.subr.mxu0 0.0
    %1465 = vmatpush1.msra.mxu0 %v1444
    %1466 = vmatprep.subr.mxu0 0.0
    %1467 = vmatpush1.msra.mxu0 %v1445
    %1468 = vmatprep.subr.mxu0 0.0
    %1469 = vmatpush1.msra.mxu0 %v1446
    %1470 = vmatprep.subr.mxu0 0.0
    %1471 = vmatpush1.msra.mxu0 %v1447
    %1472 = vmatprep.subr.mxu0 0.0
    %1473 = vmatpush1.msra.mxu0 %v1448
    %1474 = vmatprep.subr.mxu0 0.0
    %1475 = vmatpush1.msra.mxu0 0.0
    %1476 = vmatprep.subr.mxu0 0.0
    %1477 = vmatpush1.msra.mxu0 0.0
    %1478 = vmatprep.subr.mxu0 0.0
    %1479 = vmatpush1.msra.mxu0 0.0
    %1480 = vmatprep.subr.mxu0 0.0
    %1481 = vmatpush1.msra.mxu0 0.0
    %1482 = vmatprep.subr.mxu0 0.0
    %1483 = vmatpush1.msra.mxu0 0.0
    %1484 = vmatprep.subr.mxu0 0.0
    %1485 = vmatpush1.msra.mxu0 0.0
    %1486 = vmatprep.subr.mxu0 0.0
    %1487 = vmatpush1.msra.mxu0 0.0
    %1488 = vmatprep.subr.mxu0 0.0
    %1489 = vmatpush1.msra.mxu0 0.0
    %1490 = vmatprep.subr.mxu0 0.0
    %1491 = vmatpush1.msra.mxu0 0.0
    %1492 = vmatprep.subr.mxu0 0.0
    %1493 = vmatpush1.msra.mxu0 0.0
    %1494 = vmatprep.subr.mxu0 0.0
    %1495 = vmatpush1.msra.mxu0 0.0
    %1496 = vmatprep.subr.mxu0 0.0
    %1497 = vmatpush1.msra.mxu0 0.0
    %1498 = vmatprep.subr.mxu0 0.0
    %1499 = vmatpush1.msra.mxu0 0.0
    %1500 = vmatprep.subr.mxu0 0.0
    %1501 = vmatpush1.msra.mxu0 0.0
    %1502 = vmatprep.subr.mxu0 0.0
    %1503 = vmatpush1.msra.mxu0 0.0
    %1504 = vmatprep.subr.mxu0 0.0
    %1505 = vmatpush1.msra.mxu0 0.0
    %1506 = vmatprep.subr.mxu0 0.0
    %1507 = vmatpush1.msra.mxu0 0.0
    %1508 = vmatprep.subr.mxu0 0.0
    %1509 = vmatpush1.msra.mxu0 0.0
    %1510 = vmatprep.subr.mxu0 0.0
    %1511 = vmatpush1.msra.mxu0 0.0
    %1512 = vmatprep.subr.mxu0 0.0
    %1513 = vmatpush1.msra.mxu0 0.0
    %1514 = vmatprep.subr.mxu0 0.0
    %1515 = vmatpush1.msra.mxu0 0.0
    %1516 = vmatprep.subr.mxu0 0.0
    %1517 = vmatpush1.msra.mxu0 0.0
    %1518 = vmatprep.subr.mxu0 0.0
    %1519 = vmatpush1.msra.mxu0 0.0
    %1520 = vmatprep.subr.mxu0 0.0
    %1521 = vmatpush1.msra.mxu0 0.0
    %1522 = vmatprep.subr.mxu0 0.0
    %1523 = vmatpush1.msra.mxu0 0.0
    %1524 = vmatprep.subr.mxu0 0.0
    %1525 = vmatpush1.msra.mxu0 0.0
    %1526 = vmatprep.mubr.f32.mxu0 0.0
    %1527 = vmatmul.mubr.f32.gmra.mrb[0].mxu0 %v1457
    %v1528 = vpop.f32.mrb[0].mxu0
    %v1529 = vadd.f32 %v1454, %v1528
    %v1530 = vpop.f32.mrb[0].mxu0
    %1531 = vmatprep.mubr.f32.mxu0 0.0
    %1532 = vmatmul.mubr.f32.gmra.mrb[0].mxu0 %v1460
    %v1533 = vpop.f32.mrb[0].mxu0
    %v1534 = vadd.f32 %v1454, %v1533
    %v1535 = vpop.f32.mrb[0].mxu0
    %1536 = vdwg.mxu0
    %v1537 = vmax.f32 %v1529, 0.0
    %v1538 = vmax.f32 %v1534, 0.0
    %v1539 = vld [vmem:[%s10] sm:$0xff]
    %v1540 = vld [vmem:[%s10 + $0x8] sm:$0xff]
    %v1541 = vld [vmem:[%s10 + $0x10] sm:$0xff]
    %v1542 = vld [vmem:[%s10 + $0x18] sm:$0xff]
    %v1543 = vld [vmem:[%s10 + $0x20] sm:$0xff]
    %v1544 = vld [vmem:[%s10 + $0x28] sm:$0xff]
    %v1545 = vld [vmem:[%s10 + $0x30] sm:$0xff]
    %v1546 = vld [vmem:[%s10 + $0x38] sm:$0xff]
    %v1547 = vld [vmem:[%s11] sm:$0x1]
    %v1549 = vlaneseq
    %v1550 = vshrl.u32 %v1549, 7
    %v1551 = vsub.s32 0, %v1550
    %v1552 = vrot.slane %v1547, %v1551
    %vm1554 = vcmask 523264
    %v1556 = vsel %vm1554, %v1537, 0
    %v1559 = vsel %vm1554, %v1538, 0
    %1561 = vmatprep.subr.mxu0 0.0
    %1562 = vmatpush1.msra.mxu0 %v1539
    %1563 = vmatprep.subr.mxu0 0.0
    %1564 = vmatpush1.msra.mxu0 %v1540
    %1565 = vmatprep.subr.mxu0 0.0
    %1566 = vmatpush1.msra.mxu0 %v1541
    %1567 = vmatprep.subr.mxu0 0.0
    %1568 = vmatpush1.msra.mxu0 %v1542
    %1569 = vmatprep.subr.mxu0 0.0
    %1570 = vmatpush1.msra.mxu0 %v1543
    %1571 = vmatprep.subr.mxu0 0.0
    %1572 = vmatpush1.msra.mxu0 %v1544
    %1573 = vmatprep.subr.mxu0 0.0
    %1574 = vmatpush1.msra.mxu0 %v1545
    %1575 = vmatprep.subr.mxu0 0.0
    %1576 = vmatpush1.msra.mxu0 %v1546
    %1577 = vmatprep.subr.mxu0 0.0
    %1578 = vmatpush1.msra.mxu0 0.0
    %1579 = vmatprep.subr.mxu0 0.0
    %1580 = vmatpush1.msra.mxu0 0.0
    %1581 = vmatprep.subr.mxu0 0.0
    %1582 = vmatpush1.msra.mxu0 0.0
    %1583 = vmatprep.subr.mxu0 0.0
    %1584 = vmatpush1.msra.mxu0 0.0
    %1585 = vmatprep.subr.mxu0 0.0
    %1586 = vmatpush1.msra.mxu0 0.0
    %1587 = vmatprep.subr.mxu0 0.0
    %1588 = vmatpush1.msra.mxu0 0.0
    %1589 = vmatprep.subr.mxu0 0.0
    %1590 = vmatpush1.msra.mxu0 0.0
    %1591 = vmatprep.subr.mxu0 0.0
    %1592 = vmatpush1.msra.mxu0 0.0
    %1593 = vmatprep.subr.mxu0 0.0
    %1594 = vmatpush1.msra.mxu0 0.0
    %1595 = vmatprep.subr.mxu0 0.0
    %1596 = vmatpush1.msra.mxu0 0.0
    %1597 = vmatprep.subr.mxu0 0.0
    %1598 = vmatpush1.msra.mxu0 0.0
    %1599 = vmatprep.subr.mxu0 0.0
    %1600 = vmatpush1.msra.mxu0 0.0
    %1601 = vmatprep.subr.mxu0 0.0
    %1602 = vmatpush1.msra.mxu0 0.0
    %1603 = vmatprep.subr.mxu0 0.0
    %1604 = vmatpush1.msra.mxu0 0.0
    %1605 = vmatprep.subr.mxu0 0.0
    %1606 = vmatpush1.msra.mxu0 0.0
    %1607 = vmatprep.subr.mxu0 0.0
    %1608 = vmatpush1.msra.mxu0 0.0
    %1609 = vmatprep.subr.mxu0 0.0
    %1610 = vmatpush1.msra.mxu0 0.0
    %1611 = vmatprep.subr.mxu0 0.0
    %1612 = vmatpush1.msra.mxu0 0.0
    %1613 = vmatprep.subr.mxu0 0.0
    %1614 = vmatpush1.msra.mxu0 0.0
    %1615 = vmatprep.subr.mxu0 0.0
    %1616 = vmatpush1.msra.mxu0 0.0
    %1617 = vmatprep.subr.mxu0 0.0
    %1618 = vmatpush1.msra.mxu0 0.0
    %1619 = vmatprep.subr.mxu0 0.0
    %1620 = vmatpush1.msra.mxu0 0.0
    %1621 = vmatprep.subr.mxu0 0.0
    %1622 = vmatpush1.msra.mxu0 0.0
    %1623 = vmatprep.subr.mxu0 0.0
    %1624 = vmatpush1.msra.mxu0 0.0
    %1625 = vmatprep.mubr.f32.mxu0 0.0
    %1626 = vmatmul.mubr.f32.gmra.mrb[0].mxu0 %v1556
    %v1627 = vpop.f32.mrb[0].mxu0
    %v1628 = vadd.f32 %v1552, %v1627
    %v1629 = vpop.f32.mrb[0].mxu0
    %1630 = vmatprep.mubr.f32.mxu0 0.0
    %1631 = vmatmul.mubr.f32.gmra.mrb[0].mxu0 %v1559
    %v1632 = vpop.f32.mrb[0].mxu0
    %v1633 = vadd.f32 %v1552, %v1632
    %v1634 = vpop.f32.mrb[0].mxu0
    %1635 = vdwg.mxu0
    %v1636 = vadd.f32 %v1441, %v1628
    %v1637 = vadd.f32 %v1442, %v1633
    %v1638 = vld [vmem:[%s12] sm:$0x1]
    %v1639 = vld [vmem:[%s13] sm:$0x1]
    %v1640 = vsel %vm117, %v1636, 0.0
    %1641 = vadd.xlane.f32.xlu0 %v1640
    %v1642 = vpop.xlane.xlu0 %1641
    %v1643 = vsel %vm117, %v1637, 0.0
    %1644 = vadd.xlane.f32.xlu0 %v1643
    %v1645 = vpop.xlane.xlu0 %1644
    %v1646 = vmul.f32 %v1642, %v1406
    %v1647 = vmul.f32 %v1645, %v1406
    %v1648 = vsub.f32 %v1636, %v1646
    %v1649 = vsub.f32 %v1637, %v1647
    %v1650 = vmul.f32 %v1648, %v1648
    %v1651 = vmul.f32 %v1649, %v1649
    %v1652 = vsel %vm117, %v1650, 0.0
    %1653 = vadd.xlane.f32.xlu0 %v1652
    %v1654 = vpop.xlane.xlu0 %1653
    %v1655 = vsel %vm117, %v1651, 0.0
    %1656 = vadd.xlane.f32.xlu0 %v1655
    %v1657 = vpop.xlane.xlu0 %1656
    %v1658 = vmul.f32 %v1654, %v1406
    %v1659 = vmul.f32 %v1657, %v1406
    %v1660 = vadd.f32 %v1658, 1e-05
    %v1661 = vadd.f32 %v1659, 1e-05
    %v1662 = vrsqrt.pop %v1660
    %v1663 = vrsqrt.pop %v1661
    %v1664 = vmul.f32 %v1648, %v1662
    %v1665 = vmul.f32 %v1649, %v1663
    %v1667 = vlaneseq
    %v1668 = vshrl.u32 %v1667, 7
    %v1669 = vsub.s32 0, %v1668
    %v1670 = vrot.slane %v1638, %v1669
    %v1672 = vmul.f32 %v1664, %v1670
    %v1673 = vmul.f32 %v1665, %v1670
    %v1675 = vlaneseq
    %v1676 = vshrl.u32 %v1675, 7
    %v1677 = vsub.s32 0, %v1676
    %v1678 = vrot.slane %v1639, %v1677
    %v1680 = vadd.f32 %v1672, %v1678
    %v1681 = vadd.f32 %v1673, %v1678
    %s1682 = scalar_lea.vmem %s2, 96
    %v1683 = vld [vmem:[%s1682] sm:$0xff]
    %v1684 = vld [vmem:[%s1682 + $0x8] sm:$0xff]
    %v1685 = vld [vmem:[%s1682 + $0x10] sm:$0xff]
    %v1686 = vld [vmem:[%s1682 + $0x18] sm:$0xff]
    %v1687 = vld [vmem:[%s1682 + $0x20] sm:$0xff]
    %v1688 = vld [vmem:[%s1682 + $0x28] sm:$0xff]
    %v1689 = vld [vmem:[%s1682 + $0x30] sm:$0xff]
    %v1690 = vld [vmem:[%s1682 + $0x38] sm:$0xff]
    %v1691 = vld [vmem:[%s1682 + $0x40] sm:$0xff]
    %v1692 = vld [vmem:[%s1682 + $0x48] sm:$0xff]
    %v1693 = vld [vmem:[%s1682 + $0x50] sm:$0xff]
    %v1694 = vld [vmem:[%s1682 + $0x58] sm:$0xff]
    %s1695 = scalar_lea.vmem %s3, 2
    %v1696 = vld [vmem:[%s1695] sm:$0x3]
    %v1698 = vlaneseq
    %v1699 = vshrl.u32 %v1698, 7
    %v1700 = vsub.s32 0, %v1699
    %v1701 = vrot.slane %v1696, %v1700
    %v1702 = vlaneseq
    %v1703 = vshrl.u32 %v1702, 7
    %v1704 = vsub.s32 1, %v1703
    %v1705 = vrot.slane %v1696, %v1704
    %v1709 = vsel %vm117, %v1680, 0
    %v1712 = vsel %vm117, %v1681, 0
    %1714 = vmatprep.subr.mxu0 %v1684
    %1715 = vmatpush1.msra.mxu0 %v1683
    %1716 = vmatprep.subr.mxu0 %v1686
    %1717 = vmatpush1.msra.mxu0 %v1685
    %1718 = vmatprep.subr.mxu0 %v1688
    %1719 = vmatpush1.msra.mxu0 %v1687
    %1720 = vmatprep.subr.mxu0 %v1690
    %1721 = vmatpush1.msra.mxu0 %v1689
    %1722 = vmatprep.subr.mxu0 %v1692
    %1723 = vmatpush1.msra.mxu0 %v1691
    %1724 = vmatprep.subr.mxu0 %v1694
    %1725 = vmatpush1.msra.mxu0 %v1693
    %1726 = vmatprep.subr.mxu0 0.0
    %1727 = vmatpush1.msra.mxu0 0.0
    %1728 = vmatprep.subr.mxu0 0.0
    %1729 = vmatpush1.msra.mxu0 0.0
    %1730 = vmatprep.subr.mxu0 0.0
    %1731 = vmatpush1.msra.mxu0 0.0
    %1732 = vmatprep.subr.mxu0 0.0
    %1733 = vmatpush1.msra.mxu0 0.0
    %1734 = vmatprep.subr.mxu0 0.0
    %1735 = vmatpush1.msra.mxu0 0.0
    %1736 = vmatprep.subr.mxu0 0.0
    %1737 = vmatpush1.msra.mxu0 0.0
    %1738 = vmatprep.subr.mxu0 0.0
    %1739 = vmatpush1.msra.mxu0 0.0
    %1740 = vmatprep.subr.mxu0 0.0
    %1741 = vmatpush1.msra.mxu0 0.0
    %1742 = vmatprep.subr.mxu0 0.0
    %1743 = vmatpush1.msra.mxu0 0.0
    %1744 = vmatprep.subr.mxu0 0.0
    %1745 = vmatpush1.msra.mxu0 0.0
    %1746 = vmatprep.subr.mxu0 0.0
    %1747 = vmatpush1.msra.mxu0 0.0
    %1748 = vmatprep.subr.mxu0 0.0
    %1749 = vmatpush1.msra.mxu0 0.0
    %1750 = vmatprep.subr.mxu0 0.0
    %1751 = vmatpush1.msra.mxu0 0.0
    %1752 = vmatprep.subr.mxu0 0.0
    %1753 = vmatpush1.msra.mxu0 0.0
    %1754 = vmatprep.subr.mxu0 0.0
    %1755 = vmatpush1.msra.mxu0 0.0
    %1756 = vmatprep.subr.mxu0 0.0
    %1757 = vmatpush1.msra.mxu0 0.0
    %1758 = vmatprep.subr.mxu0 0.0
    %1759 = vmatpush1.msra.mxu0 0.0
    %1760 = vmatprep.subr.mxu0 0.0
    %1761 = vmatpush1.msra.mxu0 0.0
    %1762 = vmatprep.subr.mxu0 0.0
    %1763 = vmatpush1.msra.mxu0 0.0
    %1764 = vmatprep.subr.mxu0 0.0
    %1765 = vmatpush1.msra.mxu0 0.0
    %1766 = vmatprep.subr.mxu0 0.0
    %1767 = vmatpush1.msra.mxu0 0.0
    %1768 = vmatprep.subr.mxu0 0.0
    %1769 = vmatpush1.msra.mxu0 0.0
    %1770 = vmatprep.subr.mxu0 0.0
    %1771 = vmatpush1.msra.mxu0 0.0
    %1772 = vmatprep.subr.mxu0 0.0
    %1773 = vmatpush1.msra.mxu0 0.0
    %1774 = vmatprep.subr.mxu0 0.0
    %1775 = vmatpush1.msra.mxu0 0.0
    %1776 = vmatprep.subr.mxu0 0.0
    %1777 = vmatpush1.msra.mxu0 0.0
    %1778 = vmatprep.mubr.f32.mxu0 0.0
    %1779 = vmatmul.mubr.f32.gmra.mrb[0].mxu0 %v1709
    %v1780 = vpop.f32.mrb[0].mxu0
    %v1781 = vadd.f32 %v1701, %v1780
    %v1782 = vpop.f32.mrb[0].mxu0
    %v1783 = vadd.f32 %v1705, %v1782
    %1784 = vmatprep.mubr.f32.mxu0 0.0
    %1785 = vmatmul.mubr.f32.gmra.mrb[0].mxu0 %v1712
    %v1786 = vpop.f32.mrb[0].mxu0
    %v1787 = vadd.f32 %v1701, %v1786
    %v1788 = vpop.f32.mrb[0].mxu0
    %v1789 = vadd.f32 %v1705, %v1788
    %1790 = vdwg.mxu0
    %v1793 = vcombine.high %v1781, %v1781
    %v1795 = vunpack.c.l.s4 1966171168
    %v1796 = vunpack.c.0.s8 %v1795
    %v1797 = vlaneseq
    %v1798 = vshrl.u32 %v1797, 7
    %v1799 = vsub.s32 %v1796, %v1798
    %v1800 = vrot.slane %v1781, %v1799
    %v1802 = vunpack.c.l.s4 1966171168
    %v1803 = vunpack.c.0.s8 %v1802
    %v1804 = vlaneseq
    %v1805 = vshrl.u32 %v1804, 7
    %v1806 = vsub.s32 %v1803, %v1805
    %v1807 = vrot.slane %v1793, %v1806
    %v1808 = vcombine.high %v1800, %v1800
    %v1809 = vcombine.high %v1807, %v1807
    %v1811 = vunpack.c.l.s4 1966171168
    %v1812 = vunpack.c.0.s8 %v1811
    %v1813 = vlaneseq
    %v1814 = vshrl.u32 %v1813, 7
    %v1815 = vsub.s32 %v1812, %v1814
    %v1816 = vrot.slane %v1800, %v1815
    %v1818 = vunpack.c.l.s4 1966171168
    %v1819 = vunpack.c.0.s8 %v1818
    %v1820 = vlaneseq
    %v1821 = vshrl.u32 %v1820, 7
    %v1822 = vsub.s32 %v1819, %v1821
    %v1823 = vrot.slane %v1807, %v1822
    %v1825 = vunpack.c.l.s4 1966171168
    %v1826 = vunpack.c.0.s8 %v1825
    %v1827 = vlaneseq
    %v1828 = vshrl.u32 %v1827, 7
    %v1829 = vsub.s32 %v1826, %v1828
    %v1830 = vrot.slane %v1808, %v1829
    %v1832 = vunpack.c.l.s4 1966171168
    %v1833 = vunpack.c.0.s8 %v1832
    %v1834 = vlaneseq
    %v1835 = vshrl.u32 %v1834, 7
    %v1836 = vsub.s32 %v1833, %v1835
    %v1837 = vrot.slane %v1809, %v1836
    %v1838 = vcombine.high %v1816, %v1816
    %v1839 = vcombine.high %v1823, %v1823
    %v1840 = vcombine.high %v1830, %v1830
    %v1841 = vcombine.high %v1837, %v1837
    %v1842 = vcombine.high %v1787, %v1787
    %v1844 = vunpack.c.l.s4 1966171168
    %v1845 = vunpack.c.0.s8 %v1844
    %v1846 = vlaneseq
    %v1847 = vshrl.u32 %v1846, 7
    %v1848 = vsub.s32 %v1845, %v1847
    %v1849 = vrot.slane %v1787, %v1848
    %v1851 = vunpack.c.l.s4 1966171168
    %v1852 = vunpack.c.0.s8 %v1851
    %v1853 = vlaneseq
    %v1854 = vshrl.u32 %v1853, 7
    %v1855 = vsub.s32 %v1852, %v1854
    %v1856 = vrot.slane %v1842, %v1855
    %v1857 = vcombine.high %v1849, %v1849
    %v1858 = vcombine.high %v1856, %v1856
    %v1860 = vunpack.c.l.s4 1966171168
    %v1861 = vunpack.c.0.s8 %v1860
    %v1862 = vlaneseq
    %v1863 = vshrl.u32 %v1862, 7
    %v1864 = vsub.s32 %v1861, %v1863
    %v1865 = vrot.slane %v1849, %v1864
    %v1867 = vunpack.c.l.s4 1966171168
    %v1868 = vunpack.c.0.s8 %v1867
    %v1869 = vlaneseq
    %v1870 = vshrl.u32 %v1869, 7
    %v1871 = vsub.s32 %v1868, %v1870
    %v1872 = vrot.slane %v1856, %v1871
    %v1874 = vunpack.c.l.s4 1966171168
    %v1875 = vunpack.c.0.s8 %v1874
    %v1876 = vlaneseq
    %v1877 = vshrl.u32 %v1876, 7
    %v1878 = vsub.s32 %v1875, %v1877
    %v1879 = vrot.slane %v1857, %v1878
    %v1881 = vunpack.c.l.s4 1966171168
    %v1882 = vunpack.c.0.s8 %v1881
    %v1883 = vlaneseq
    %v1884 = vshrl.u32 %v1883, 7
    %v1885 = vsub.s32 %v1882, %v1884
    %v1886 = vrot.slane %v1858, %v1885
    %v1887 = vcombine.high %v1865, %v1865
    %v1888 = vcombine.high %v1872, %v1872
    %v1889 = vcombine.high %v1879, %v1879
    %v1890 = vcombine.high %v1886, %v1886
    %v1891 = vlaneseq
    %v1892 = vshrl.u32 %v1891, 7
    %v1893 = vsub.s32 0, %v1892
    %v1894 = vrot.slane %v1816, %v1893
    %v1895 = vlaneseq
    %v1896 = vshrl.u32 %v1895, 7
    %v1897 = vsub.s32 0, %v1896
    %v1898 = vrot.slane %v1830, %v1897
    %v1899 = vlaneseq
    %v1900 = vshrl.u32 %v1899, 7
    %v1901 = vsub.s32 0, %v1900
    %v1902 = vrot.slane %v1838, %v1901
    %v1903 = vlaneseq
    %v1904 = vshrl.u32 %v1903, 7
    %v1905 = vsub.s32 0, %v1904
    %v1906 = vrot.slane %v1840, %v1905
    %v1907 = vlaneseq
    %v1908 = vshrl.u32 %v1907, 7
    %v1909 = vsub.s32 0, %v1908
    %v1910 = vrot.slane %v1823, %v1909
    %v1911 = vlaneseq
    %v1912 = vshrl.u32 %v1911, 7
    %v1913 = vsub.s32 0, %v1912
    %v1914 = vrot.slane %v1837, %v1913
    %v1915 = vlaneseq
    %v1916 = vshrl.u32 %v1915, 7
    %v1917 = vsub.s32 0, %v1916
    %v1918 = vrot.slane %v1839, %v1917
    %v1919 = vlaneseq
    %v1920 = vshrl.u32 %v1919, 7
    %v1921 = vsub.s32 0, %v1920
    %v1922 = vrot.slane %v1841, %v1921
    %v1923 = vlaneseq
    %v1924 = vshrl.u32 %v1923, 7
    %v1925 = vsub.s32 0, %v1924
    %v1926 = vrot.slane %v1865, %v1925
    %v1927 = vlaneseq
    %v1928 = vshrl.u32 %v1927, 7
    %v1929 = vsub.s32 0, %v1928
    %v1930 = vrot.slane %v1879, %v1929
    %v1931 = vlaneseq
    %v1932 = vshrl.u32 %v1931, 7
    %v1933 = vsub.s32 0, %v1932
    %v1934 = vrot.slane %v1887, %v1933
    %v1935 = vlaneseq
    %v1936 = vshrl.u32 %v1935, 7
    %v1937 = vsub.s32 0, %v1936
    %v1938 = vrot.slane %v1889, %v1937
    %v1939 = vlaneseq
    %v1940 = vshrl.u32 %v1939, 7
    %v1941 = vsub.s32 0, %v1940
    %v1942 = vrot.slane %v1872, %v1941
    %v1943 = vlaneseq
    %v1944 = vshrl.u32 %v1943, 7
    %v1945 = vsub.s32 0, %v1944
    %v1946 = vrot.slane %v1886, %v1945
    %v1947 = vlaneseq
    %v1948 = vshrl.u32 %v1947, 7
    %v1949 = vsub.s32 0, %v1948
    %v1950 = vrot.slane %v1888, %v1949
    %v1951 = vlaneseq
    %v1952 = vshrl.u32 %v1951, 7
    %v1953 = vsub.s32 0, %v1952
    %v1954 = vrot.slane %v1890, %v1953
    %1971 = vrot.lane.b32.xlu0 %v1781, 80
    %v1972 = vpop.permute.xlu0 %1971
    %1973 = vrot.lane.b32.xlu0 %v1787, 80
    %v1974 = vpop.permute.xlu0 %1973
    %v1977 = vmul.f32 %v1894, %v1972
    %v1978 = vmul.f32 %v1898, %v1972
    %v1979 = vmul.f32 %v1902, %v1972
    %v1980 = vmul.f32 %v1906, %v1972
    %v1981 = vmul.f32 %v1910, %v1972
    %v1982 = vmul.f32 %v1914, %v1972
    %v1983 = vmul.f32 %v1918, %v1972
    %v1984 = vmul.f32 %v1922, %v1972
    %v1985 = vmul.f32 %v1926, %v1974
    %v1986 = vmul.f32 %v1930, %v1974
    %v1987 = vmul.f32 %v1934, %v1974
    %v1988 = vmul.f32 %v1938, %v1974
    %v1989 = vmul.f32 %v1942, %v1974
    %v1990 = vmul.f32 %v1946, %v1974
    %v1991 = vmul.f32 %v1950, %v1974
    %v1992 = vmul.f32 %v1954, %v1974
    %v1994 = vsel %vm117, %v1977, 0
    %v1997 = vsel %vm117, %v1978, 0
    %v2000 = vsel %vm117, %v1979, 0
    %v2003 = vsel %vm117, %v1980, 0
    %v2006 = vsel %vm117, %v1981, 0
    %v2009 = vsel %vm117, %v1982, 0
    %v2012 = vsel %vm117, %v1983, 0
    %v2015 = vsel %vm117, %v1984, 0
    %v2018 = vsel %vm117, %v1985, 0
    %v2021 = vsel %vm117, %v1986, 0
    %v2024 = vsel %vm117, %v1987, 0
    %v2027 = vsel %vm117, %v1988, 0
    %v2030 = vsel %vm117, %v1989, 0
    %v2033 = vsel %vm117, %v1990, 0
    %v2036 = vsel %vm117, %v1991, 0
    %v2039 = vsel %vm117, %v1992, 0
    %2041 = vmatprep.subr.mxu0 0.0
    %2042 = vmatpush1.msra.mxu0 %v86
    %2043 = vmatprep.subr.mxu0 0.0
    %2044 = vmatpush1.msra.mxu0 %v87
    %2045 = vmatprep.subr.mxu0 0.0
    %2046 = vmatpush1.msra.mxu0 %v88
    %2047 = vmatprep.subr.mxu0 0.0
    %2048 = vmatpush1.msra.mxu0 %v89
    %2049 = vmatprep.subr.mxu0 0.0
    %2050 = vmatpush1.msra.mxu0 %v90
    %2051 = vmatprep.subr.mxu0 0.0
    %2052 = vmatpush1.msra.mxu0 %v91
    %2053 = vmatprep.subr.mxu0 0.0
    %2054 = vmatpush1.msra.mxu0 0.0
    %2055 = vmatprep.subr.mxu0 0.0
    %2056 = vmatpush1.msra.mxu0 0.0
    %2057 = vmatprep.subr.mxu0 0.0
    %2058 = vmatpush1.msra.mxu0 0.0
    %2059 = vmatprep.subr.mxu0 0.0
    %2060 = vmatpush1.msra.mxu0 0.0
    %2061 = vmatprep.subr.mxu0 0.0
    %2062 = vmatpush1.msra.mxu0 0.0
    %2063 = vmatprep.subr.mxu0 0.0
    %2064 = vmatpush1.msra.mxu0 0.0
    %2065 = vmatprep.subr.mxu0 0.0
    %2066 = vmatpush1.msra.mxu0 0.0
    %2067 = vmatprep.subr.mxu0 0.0
    %2068 = vmatpush1.msra.mxu0 0.0
    %2069 = vmatprep.subr.mxu0 0.0
    %2070 = vmatpush1.msra.mxu0 0.0
    %2071 = vmatprep.subr.mxu0 0.0
    %2072 = vmatpush1.msra.mxu0 0.0
    %2073 = vmatprep.subr.mxu0 0.0
    %2074 = vmatpush1.msra.mxu0 0.0
    %2075 = vmatprep.subr.mxu0 0.0
    %2076 = vmatpush1.msra.mxu0 0.0
    %2077 = vmatprep.subr.mxu0 0.0
    %2078 = vmatpush1.msra.mxu0 0.0
    %2079 = vmatprep.subr.mxu0 0.0
    %2080 = vmatpush1.msra.mxu0 0.0
    %2081 = vmatprep.subr.mxu0 0.0
    %2082 = vmatpush1.msra.mxu0 0.0
    %2083 = vmatprep.subr.mxu0 0.0
    %2084 = vmatpush1.msra.mxu0 0.0
    %2085 = vmatprep.subr.mxu0 0.0
    %2086 = vmatpush1.msra.mxu0 0.0
    %2087 = vmatprep.subr.mxu0 0.0
    %2088 = vmatpush1.msra.mxu0 0.0
    %2089 = vmatprep.subr.mxu0 0.0
    %2090 = vmatpush1.msra.mxu0 0.0
    %2091 = vmatprep.subr.mxu0 0.0
    %2092 = vmatpush1.msra.mxu0 0.0
    %2093 = vmatprep.subr.mxu0 0.0
    %2094 = vmatpush1.msra.mxu0 0.0
    %2095 = vmatprep.subr.mxu0 0.0
    %2096 = vmatpush1.msra.mxu0 0.0
    %2097 = vmatprep.subr.mxu0 0.0
    %2098 = vmatpush1.msra.mxu0 0.0
    %2099 = vmatprep.subr.mxu0 0.0
    %2100 = vmatpush1.msra.mxu0 0.0
    %2101 = vmatprep.subr.mxu0 0.0
    %2102 = vmatpush1.msra.mxu0 0.0
    %2103 = vmatprep.subr.mxu0 0.0
    %2104 = vmatpush1.msra.mxu0 0.0
    %2105 = vmatprep.mubr.f32.mxu0 0.0
    %2106 = vmatmul.mubr.f32.gmra.mrb[0].mxu0 %v1994
    %v2107 = vpop.f32.mrb[0].mxu0
    %v2108 = vadd.f32 0.0, %v2107
    %v2109 = vpop.f32.mrb[0].mxu0
    %2110 = vmatprep.mubr.f32.mxu0 0.0
    %2111 = vmatmul.mubr.f32.gmra.mrb[0].mxu0 %v1997
    %v2112 = vpop.f32.mrb[0].mxu0
    %v2113 = vadd.f32 0.0, %v2112
    %v2114 = vpop.f32.mrb[0].mxu0
    %2115 = vmatprep.mubr.f32.mxu0 0.0
    %2116 = vmatmul.mubr.f32.gmra.mrb[0].mxu0 %v2000
    %v2117 = vpop.f32.mrb[0].mxu0
    %v2118 = vadd.f32 0.0, %v2117
    %v2119 = vpop.f32.mrb[0].mxu0
    %2120 = vmatprep.mubr.f32.mxu0 0.0
    %2121 = vmatmul.mubr.f32.gmra.mrb[0].mxu0 %v2003
    %v2122 = vpop.f32.mrb[0].mxu0
    %v2123 = vadd.f32 0.0, %v2122
    %v2124 = vpop.f32.mrb[0].mxu0
    %2125 = vmatprep.mubr.f32.mxu0 0.0
    %2126 = vmatmul.mubr.f32.gmra.mrb[0].mxu0 %v2006
    %v2127 = vpop.f32.mrb[0].mxu0
    %v2128 = vadd.f32 0.0, %v2127
    %v2129 = vpop.f32.mrb[0].mxu0
    %2130 = vmatprep.mubr.f32.mxu0 0.0
    %2131 = vmatmul.mubr.f32.gmra.mrb[0].mxu0 %v2009
    %v2132 = vpop.f32.mrb[0].mxu0
    %v2133 = vadd.f32 0.0, %v2132
    %v2134 = vpop.f32.mrb[0].mxu0
    %2135 = vmatprep.mubr.f32.mxu0 0.0
    %2136 = vmatmul.mubr.f32.gmra.mrb[0].mxu0 %v2012
    %v2137 = vpop.f32.mrb[0].mxu0
    %v2138 = vadd.f32 0.0, %v2137
    %v2139 = vpop.f32.mrb[0].mxu0
    %2140 = vmatprep.mubr.f32.mxu0 0.0
    %2141 = vmatmul.mubr.f32.gmra.mrb[0].mxu0 %v2015
    %v2142 = vpop.f32.mrb[0].mxu0
    %v2143 = vadd.f32 0.0, %v2142
    %v2144 = vpop.f32.mrb[0].mxu0
    %2145 = vmatprep.mubr.f32.mxu0 0.0
    %2146 = vmatmul.mubr.f32.gmra.mrb[0].mxu0 %v2018
    %v2147 = vpop.f32.mrb[0].mxu0
    %v2148 = vadd.f32 0.0, %v2147
    %v2149 = vpop.f32.mrb[0].mxu0
    %2150 = vmatprep.mubr.f32.mxu0 0.0
    %2151 = vmatmul.mubr.f32.gmra.mrb[0].mxu0 %v2021
    %v2152 = vpop.f32.mrb[0].mxu0
    %v2153 = vadd.f32 0.0, %v2152
    %v2154 = vpop.f32.mrb[0].mxu0
    %2155 = vmatprep.mubr.f32.mxu0 0.0
    %2156 = vmatmul.mubr.f32.gmra.mrb[0].mxu0 %v2024
    %v2157 = vpop.f32.mrb[0].mxu0
    %v2158 = vadd.f32 0.0, %v2157
    %v2159 = vpop.f32.mrb[0].mxu0
    %2160 = vmatprep.mubr.f32.mxu0 0.0
    %2161 = vmatmul.mubr.f32.gmra.mrb[0].mxu0 %v2027
    %v2162 = vpop.f32.mrb[0].mxu0
    %v2163 = vadd.f32 0.0, %v2162
    %v2164 = vpop.f32.mrb[0].mxu0
    %2165 = vmatprep.mubr.f32.mxu0 0.0
    %2166 = vmatmul.mubr.f32.gmra.mrb[0].mxu0 %v2030
    %v2167 = vpop.f32.mrb[0].mxu0
    %v2168 = vadd.f32 0.0, %v2167
    %v2169 = vpop.f32.mrb[0].mxu0
    %2170 = vmatprep.mubr.f32.mxu0 0.0
    %2171 = vmatmul.mubr.f32.gmra.mrb[0].mxu0 %v2033
    %v2172 = vpop.f32.mrb[0].mxu0
    %v2173 = vadd.f32 0.0, %v2172
    %v2174 = vpop.f32.mrb[0].mxu0
    %2175 = vmatprep.mubr.f32.mxu0 0.0
    %2176 = vmatmul.mubr.f32.gmra.mrb[0].mxu0 %v2036
    %v2177 = vpop.f32.mrb[0].mxu0
    %v2178 = vadd.f32 0.0, %v2177
    %v2179 = vpop.f32.mrb[0].mxu0
    %2180 = vmatprep.mubr.f32.mxu0 0.0
    %2181 = vmatmul.mubr.f32.gmra.mrb[0].mxu0 %v2039
    %v2182 = vpop.f32.mrb[0].mxu0
    %v2183 = vadd.f32 0.0, %v2182
    %v2184 = vpop.f32.mrb[0].mxu0
    %2185 = vdwg.mxu0
    %v2186 = vadd.f32 %v2108, %v599
    %v2187 = vadd.f32 %v2113, %v599
    %v2188 = vadd.f32 %v2118, %v599
    %v2189 = vadd.f32 %v2123, %v599
    %v2190 = vadd.f32 %v2128, %v599
    %v2191 = vadd.f32 %v2133, %v599
    %v2192 = vadd.f32 %v2138, %v599
    %v2193 = vadd.f32 %v2143, %v599
    %v2194 = vadd.f32 %v2148, %v604
    %v2195 = vadd.f32 %v2153, %v604
    %v2196 = vadd.f32 %v2158, %v604
    %v2197 = vadd.f32 %v2163, %v604
    %v2198 = vadd.f32 %v2168, %v604
    %v2199 = vadd.f32 %v2173, %v604
    %v2200 = vadd.f32 %v2178, %v604
    %v2201 = vadd.f32 %v2183, %v604
    %v2202 = vsel %vm622, %v2186, -inf
    %v2203 = vrot.slane %v2202, 4
    %v2204 = vmax.f32 %v2202, %v2203
    %v2205 = vrot.slane %v2204, 2
    %v2206 = vmax.f32 %v2204, %v2205
    %v2207 = vrot.slane %v2206, 1
    %v2208 = vmax.f32 %v2206, %v2207
    %v2209 = vsel %vm622, %v2187, -inf
    %v2210 = vrot.slane %v2209, 4
    %v2211 = vmax.f32 %v2209, %v2210
    %v2212 = vrot.slane %v2211, 2
    %v2213 = vmax.f32 %v2211, %v2212
    %v2214 = vrot.slane %v2213, 1
    %v2215 = vmax.f32 %v2213, %v2214
    %v2216 = vsel %vm622, %v2188, -inf
    %v2217 = vrot.slane %v2216, 4
    %v2218 = vmax.f32 %v2216, %v2217
    %v2219 = vrot.slane %v2218, 2
    %v2220 = vmax.f32 %v2218, %v2219
    %v2221 = vrot.slane %v2220, 1
    %v2222 = vmax.f32 %v2220, %v2221
    %v2223 = vsel %vm622, %v2189, -inf
    %v2224 = vrot.slane %v2223, 4
    %v2225 = vmax.f32 %v2223, %v2224
    %v2226 = vrot.slane %v2225, 2
    %v2227 = vmax.f32 %v2225, %v2226
    %v2228 = vrot.slane %v2227, 1
    %v2229 = vmax.f32 %v2227, %v2228
    %v2230 = vsel %vm622, %v2190, -inf
    %v2231 = vrot.slane %v2230, 4
    %v2232 = vmax.f32 %v2230, %v2231
    %v2233 = vrot.slane %v2232, 2
    %v2234 = vmax.f32 %v2232, %v2233
    %v2235 = vrot.slane %v2234, 1
    %v2236 = vmax.f32 %v2234, %v2235
    %v2237 = vsel %vm622, %v2191, -inf
    %v2238 = vrot.slane %v2237, 4
    %v2239 = vmax.f32 %v2237, %v2238
    %v2240 = vrot.slane %v2239, 2
    %v2241 = vmax.f32 %v2239, %v2240
    %v2242 = vrot.slane %v2241, 1
    %v2243 = vmax.f32 %v2241, %v2242
    %v2244 = vsel %vm622, %v2192, -inf
    %v2245 = vrot.slane %v2244, 4
    %v2246 = vmax.f32 %v2244, %v2245
    %v2247 = vrot.slane %v2246, 2
    %v2248 = vmax.f32 %v2246, %v2247
    %v2249 = vrot.slane %v2248, 1
    %v2250 = vmax.f32 %v2248, %v2249
    %v2251 = vsel %vm622, %v2193, -inf
    %v2252 = vrot.slane %v2251, 4
    %v2253 = vmax.f32 %v2251, %v2252
    %v2254 = vrot.slane %v2253, 2
    %v2255 = vmax.f32 %v2253, %v2254
    %v2256 = vrot.slane %v2255, 1
    %v2257 = vmax.f32 %v2255, %v2256
    %v2258 = vsel %vm622, %v2194, -inf
    %v2259 = vrot.slane %v2258, 4
    %v2260 = vmax.f32 %v2258, %v2259
    %v2261 = vrot.slane %v2260, 2
    %v2262 = vmax.f32 %v2260, %v2261
    %v2263 = vrot.slane %v2262, 1
    %v2264 = vmax.f32 %v2262, %v2263
    %v2265 = vsel %vm622, %v2195, -inf
    %v2266 = vrot.slane %v2265, 4
    %v2267 = vmax.f32 %v2265, %v2266
    %v2268 = vrot.slane %v2267, 2
    %v2269 = vmax.f32 %v2267, %v2268
    %v2270 = vrot.slane %v2269, 1
    %v2271 = vmax.f32 %v2269, %v2270
    %v2272 = vsel %vm622, %v2196, -inf
    %v2273 = vrot.slane %v2272, 4
    %v2274 = vmax.f32 %v2272, %v2273
    %v2275 = vrot.slane %v2274, 2
    %v2276 = vmax.f32 %v2274, %v2275
    %v2277 = vrot.slane %v2276, 1
    %v2278 = vmax.f32 %v2276, %v2277
    %v2279 = vsel %vm622, %v2197, -inf
    %v2280 = vrot.slane %v2279, 4
    %v2281 = vmax.f32 %v2279, %v2280
    %v2282 = vrot.slane %v2281, 2
    %v2283 = vmax.f32 %v2281, %v2282
    %v2284 = vrot.slane %v2283, 1
    %v2285 = vmax.f32 %v2283, %v2284
    %v2286 = vsel %vm622, %v2198, -inf
    %v2287 = vrot.slane %v2286, 4
    %v2288 = vmax.f32 %v2286, %v2287
    %v2289 = vrot.slane %v2288, 2
    %v2290 = vmax.f32 %v2288, %v2289
    %v2291 = vrot.slane %v2290, 1
    %v2292 = vmax.f32 %v2290, %v2291
    %v2293 = vsel %vm622, %v2199, -inf
    %v2294 = vrot.slane %v2293, 4
    %v2295 = vmax.f32 %v2293, %v2294
    %v2296 = vrot.slane %v2295, 2
    %v2297 = vmax.f32 %v2295, %v2296
    %v2298 = vrot.slane %v2297, 1
    %v2299 = vmax.f32 %v2297, %v2298
    %v2300 = vsel %vm622, %v2200, -inf
    %v2301 = vrot.slane %v2300, 4
    %v2302 = vmax.f32 %v2300, %v2301
    %v2303 = vrot.slane %v2302, 2
    %v2304 = vmax.f32 %v2302, %v2303
    %v2305 = vrot.slane %v2304, 1
    %v2306 = vmax.f32 %v2304, %v2305
    %v2307 = vsel %vm622, %v2201, -inf
    %v2308 = vrot.slane %v2307, 4
    %v2309 = vmax.f32 %v2307, %v2308
    %v2310 = vrot.slane %v2309, 2
    %v2311 = vmax.f32 %v2309, %v2310
    %v2312 = vrot.slane %v2311, 1
    %v2313 = vmax.f32 %v2311, %v2312
    %v2314 = vsub.f32 %v2186, %v2208
    %v2315 = vsub.f32 %v2187, %v2215
    %v2316 = vsub.f32 %v2188, %v2222
    %v2317 = vsub.f32 %v2189, %v2229
    %v2318 = vsub.f32 %v2190, %v2236
    %v2319 = vsub.f32 %v2191, %v2243
    %v2320 = vsub.f32 %v2192, %v2250
    %v2321 = vsub.f32 %v2193, %v2257
    %v2322 = vsub.f32 %v2194, %v2264
    %v2323 = vsub.f32 %v2195, %v2271
    %v2324 = vsub.f32 %v2196, %v2278
    %v2325 = vsub.f32 %v2197, %v2285
    %v2326 = vsub.f32 %v2198, %v2292
    %v2327 = vsub.f32 %v2199, %v2299
    %v2328 = vsub.f32 %v2200, %v2306
    %v2329 = vsub.f32 %v2201, %v2313
    %v2330 = vmul.f32 %v2314, 1.442695
    %v2331 = vpow.pop %v2330
    %v2332 = vmul.f32 %v2315, 1.442695
    %v2333 = vpow.pop %v2332
    %v2334 = vmul.f32 %v2316, 1.442695
    %v2335 = vpow.pop %v2334
    %v2336 = vmul.f32 %v2317, 1.442695
    %v2337 = vpow.pop %v2336
    %v2338 = vmul.f32 %v2318, 1.442695
    %v2339 = vpow.pop %v2338
    %v2340 = vmul.f32 %v2319, 1.442695
    %v2341 = vpow.pop %v2340
    %v2342 = vmul.f32 %v2320, 1.442695
    %v2343 = vpow.pop %v2342
    %v2344 = vmul.f32 %v2321, 1.442695
    %v2345 = vpow.pop %v2344
    %v2346 = vmul.f32 %v2322, 1.442695
    %v2347 = vpow.pop %v2346
    %v2348 = vmul.f32 %v2323, 1.442695
    %v2349 = vpow.pop %v2348
    %v2350 = vmul.f32 %v2324, 1.442695
    %v2351 = vpow.pop %v2350
    %v2352 = vmul.f32 %v2325, 1.442695
    %v2353 = vpow.pop %v2352
    %v2354 = vmul.f32 %v2326, 1.442695
    %v2355 = vpow.pop %v2354
    %v2356 = vmul.f32 %v2327, 1.442695
    %v2357 = vpow.pop %v2356
    %v2358 = vmul.f32 %v2328, 1.442695
    %v2359 = vpow.pop %v2358
    %v2360 = vmul.f32 %v2329, 1.442695
    %v2361 = vpow.pop %v2360
    %v2362 = vsel %vm622, %v2331, 0.0
    %v2363 = vrot.slane %v2362, 4
    %v2364 = vadd.f32 %v2362, %v2363
    %v2365 = vrot.slane %v2364, 2
    %v2366 = vadd.f32 %v2364, %v2365
    %v2367 = vrot.slane %v2366, 1
    %v2368 = vadd.f32 %v2366, %v2367
    %v2369 = vsel %vm622, %v2333, 0.0
    %v2370 = vrot.slane %v2369, 4
    %v2371 = vadd.f32 %v2369, %v2370
    %v2372 = vrot.slane %v2371, 2
    %v2373 = vadd.f32 %v2371, %v2372
    %v2374 = vrot.slane %v2373, 1
    %v2375 = vadd.f32 %v2373, %v2374
    %v2376 = vsel %vm622, %v2335, 0.0
    %v2377 = vrot.slane %v2376, 4
    %v2378 = vadd.f32 %v2376, %v2377
    %v2379 = vrot.slane %v2378, 2
    %v2380 = vadd.f32 %v2378, %v2379
    %v2381 = vrot.slane %v2380, 1
    %v2382 = vadd.f32 %v2380, %v2381
    %v2383 = vsel %vm622, %v2337, 0.0
    %v2384 = vrot.slane %v2383, 4
    %v2385 = vadd.f32 %v2383, %v2384
    %v2386 = vrot.slane %v2385, 2
    %v2387 = vadd.f32 %v2385, %v2386
    %v2388 = vrot.slane %v2387, 1
    %v2389 = vadd.f32 %v2387, %v2388
    %v2390 = vsel %vm622, %v2339, 0.0
    %v2391 = vrot.slane %v2390, 4
    %v2392 = vadd.f32 %v2390, %v2391
    %v2393 = vrot.slane %v2392, 2
    %v2394 = vadd.f32 %v2392, %v2393
    %v2395 = vrot.slane %v2394, 1
    %v2396 = vadd.f32 %v2394, %v2395
    %v2397 = vsel %vm622, %v2341, 0.0
    %v2398 = vrot.slane %v2397, 4
    %v2399 = vadd.f32 %v2397, %v2398
    %v2400 = vrot.slane %v2399, 2
    %v2401 = vadd.f32 %v2399, %v2400
    %v2402 = vrot.slane %v2401, 1
    %v2403 = vadd.f32 %v2401, %v2402
    %v2404 = vsel %vm622, %v2343, 0.0
    %v2405 = vrot.slane %v2404, 4
    %v2406 = vadd.f32 %v2404, %v2405
    %v2407 = vrot.slane %v2406, 2
    %v2408 = vadd.f32 %v2406, %v2407
    %v2409 = vrot.slane %v2408, 1
    %v2410 = vadd.f32 %v2408, %v2409
    %v2411 = vsel %vm622, %v2345, 0.0
    %v2412 = vrot.slane %v2411, 4
    %v2413 = vadd.f32 %v2411, %v2412
    %v2414 = vrot.slane %v2413, 2
    %v2415 = vadd.f32 %v2413, %v2414
    %v2416 = vrot.slane %v2415, 1
    %v2417 = vadd.f32 %v2415, %v2416
    %v2418 = vsel %vm622, %v2347, 0.0
    %v2419 = vrot.slane %v2418, 4
    %v2420 = vadd.f32 %v2418, %v2419
    %v2421 = vrot.slane %v2420, 2
    %v2422 = vadd.f32 %v2420, %v2421
    %v2423 = vrot.slane %v2422, 1
    %v2424 = vadd.f32 %v2422, %v2423
    %v2425 = vsel %vm622, %v2349, 0.0
    %v2426 = vrot.slane %v2425, 4
    %v2427 = vadd.f32 %v2425, %v2426
    %v2428 = vrot.slane %v2427, 2
    %v2429 = vadd.f32 %v2427, %v2428
    %v2430 = vrot.slane %v2429, 1
    %v2431 = vadd.f32 %v2429, %v2430
    %v2432 = vsel %vm622, %v2351, 0.0
    %v2433 = vrot.slane %v2432, 4
    %v2434 = vadd.f32 %v2432, %v2433
    %v2435 = vrot.slane %v2434, 2
    %v2436 = vadd.f32 %v2434, %v2435
    %v2437 = vrot.slane %v2436, 1
    %v2438 = vadd.f32 %v2436, %v2437
    %v2439 = vsel %vm622, %v2353, 0.0
    %v2440 = vrot.slane %v2439, 4
    %v2441 = vadd.f32 %v2439, %v2440
    %v2442 = vrot.slane %v2441, 2
    %v2443 = vadd.f32 %v2441, %v2442
    %v2444 = vrot.slane %v2443, 1
    %v2445 = vadd.f32 %v2443, %v2444
    %v2446 = vsel %vm622, %v2355, 0.0
    %v2447 = vrot.slane %v2446, 4
    %v2448 = vadd.f32 %v2446, %v2447
    %v2449 = vrot.slane %v2448, 2
    %v2450 = vadd.f32 %v2448, %v2449
    %v2451 = vrot.slane %v2450, 1
    %v2452 = vadd.f32 %v2450, %v2451
    %v2453 = vsel %vm622, %v2357, 0.0
    %v2454 = vrot.slane %v2453, 4
    %v2455 = vadd.f32 %v2453, %v2454
    %v2456 = vrot.slane %v2455, 2
    %v2457 = vadd.f32 %v2455, %v2456
    %v2458 = vrot.slane %v2457, 1
    %v2459 = vadd.f32 %v2457, %v2458
    %v2460 = vsel %vm622, %v2359, 0.0
    %v2461 = vrot.slane %v2460, 4
    %v2462 = vadd.f32 %v2460, %v2461
    %v2463 = vrot.slane %v2462, 2
    %v2464 = vadd.f32 %v2462, %v2463
    %v2465 = vrot.slane %v2464, 1
    %v2466 = vadd.f32 %v2464, %v2465
    %v2467 = vsel %vm622, %v2361, 0.0
    %v2468 = vrot.slane %v2467, 4
    %v2469 = vadd.f32 %v2467, %v2468
    %v2470 = vrot.slane %v2469, 2
    %v2471 = vadd.f32 %v2469, %v2470
    %v2472 = vrot.slane %v2471, 1
    %v2473 = vadd.f32 %v2471, %v2472
    %v2474 = vrcp.pop %v2368
    %v2475 = vrcp.pop %v2375
    %v2476 = vrcp.pop %v2382
    %v2477 = vrcp.pop %v2389
    %v2478 = vrcp.pop %v2396
    %v2479 = vrcp.pop %v2403
    %v2480 = vrcp.pop %v2410
    %v2481 = vrcp.pop %v2417
    %v2482 = vrcp.pop %v2424
    %v2483 = vrcp.pop %v2431
    %v2484 = vrcp.pop %v2438
    %v2485 = vrcp.pop %v2445
    %v2486 = vrcp.pop %v2452
    %v2487 = vrcp.pop %v2459
    %v2488 = vrcp.pop %v2466
    %v2489 = vrcp.pop %v2473
    %v2490 = vmul.f32 %v2331, %v2474
    %v2491 = vmul.f32 %v2333, %v2475
    %v2492 = vmul.f32 %v2335, %v2476
    %v2493 = vmul.f32 %v2337, %v2477
    %v2494 = vmul.f32 %v2339, %v2478
    %v2495 = vmul.f32 %v2341, %v2479
    %v2496 = vmul.f32 %v2343, %v2480
    %v2497 = vmul.f32 %v2345, %v2481
    %v2498 = vmul.f32 %v2347, %v2482
    %v2499 = vmul.f32 %v2349, %v2483
    %v2500 = vmul.f32 %v2351, %v2484
    %v2501 = vmul.f32 %v2353, %v2485
    %v2502 = vmul.f32 %v2355, %v2486
    %v2503 = vmul.f32 %v2357, %v2487
    %v2504 = vmul.f32 %v2359, %v2488
    %v2505 = vmul.f32 %v2361, %v2489
    %v2507 = vsel %vm622, %v2490, 0
    %v2510 = vsel %vm622, %v2491, 0
    %v2513 = vsel %vm622, %v2492, 0
    %v2516 = vsel %vm622, %v2493, 0
    %v2519 = vsel %vm622, %v2494, 0
    %v2522 = vsel %vm622, %v2495, 0
    %v2525 = vsel %vm622, %v2496, 0
    %v2528 = vsel %vm622, %v2497, 0
    %v2531 = vsel %vm622, %v2498, 0
    %v2534 = vsel %vm622, %v2499, 0
    %v2537 = vsel %vm622, %v2500, 0
    %v2540 = vsel %vm622, %v2501, 0
    %v2543 = vsel %vm622, %v2502, 0
    %v2546 = vsel %vm622, %v2503, 0
    %v2549 = vsel %vm622, %v2504, 0
    %v2552 = vsel %vm622, %v2505, 0
    %2554 = vmatprep.subr.mxu0 0.0
    %2555 = vmatpush1.msra.mxu0 %v977
    %2556 = vmatprep.subr.mxu0 0.0
    %2557 = vmatpush1.msra.mxu0 0.0
    %2558 = vmatprep.subr.mxu0 0.0
    %2559 = vmatpush1.msra.mxu0 0.0
    %2560 = vmatprep.subr.mxu0 0.0
    %2561 = vmatpush1.msra.mxu0 0.0
    %2562 = vmatprep.subr.mxu0 0.0
    %2563 = vmatpush1.msra.mxu0 0.0
    %2564 = vmatprep.subr.mxu0 0.0
    %2565 = vmatpush1.msra.mxu0 0.0
    %2566 = vmatprep.subr.mxu0 0.0
    %2567 = vmatpush1.msra.mxu0 0.0
    %2568 = vmatprep.subr.mxu0 0.0
    %2569 = vmatpush1.msra.mxu0 0.0
    %2570 = vmatprep.subr.mxu0 0.0
    %2571 = vmatpush1.msra.mxu0 0.0
    %2572 = vmatprep.subr.mxu0 0.0
    %2573 = vmatpush1.msra.mxu0 0.0
    %2574 = vmatprep.subr.mxu0 0.0
    %2575 = vmatpush1.msra.mxu0 0.0
    %2576 = vmatprep.subr.mxu0 0.0
    %2577 = vmatpush1.msra.mxu0 0.0
    %2578 = vmatprep.subr.mxu0 0.0
    %2579 = vmatpush1.msra.mxu0 0.0
    %2580 = vmatprep.subr.mxu0 0.0
    %2581 = vmatpush1.msra.mxu0 0.0
    %2582 = vmatprep.subr.mxu0 0.0
    %2583 = vmatpush1.msra.mxu0 0.0
    %2584 = vmatprep.subr.mxu0 0.0
    %2585 = vmatpush1.msra.mxu0 0.0
    %2586 = vmatprep.subr.mxu0 0.0
    %2587 = vmatpush1.msra.mxu0 0.0
    %2588 = vmatprep.subr.mxu0 0.0
    %2589 = vmatpush1.msra.mxu0 0.0
    %2590 = vmatprep.subr.mxu0 0.0
    %2591 = vmatpush1.msra.mxu0 0.0
    %2592 = vmatprep.subr.mxu0 0.0
    %2593 = vmatpush1.msra.mxu0 0.0
    %2594 = vmatprep.subr.mxu0 0.0
    %2595 = vmatpush1.msra.mxu0 0.0
    %2596 = vmatprep.subr.mxu0 0.0
    %2597 = vmatpush1.msra.mxu0 0.0
    %2598 = vmatprep.subr.mxu0 0.0
    %2599 = vmatpush1.msra.mxu0 0.0
    %2600 = vmatprep.subr.mxu0 0.0
    %2601 = vmatpush1.msra.mxu0 0.0
    %2602 = vmatprep.subr.mxu0 0.0
    %2603 = vmatpush1.msra.mxu0 0.0
    %2604 = vmatprep.subr.mxu0 0.0
    %2605 = vmatpush1.msra.mxu0 0.0
    %2606 = vmatprep.subr.mxu0 0.0
    %2607 = vmatpush1.msra.mxu0 0.0
    %2608 = vmatprep.subr.mxu0 0.0
    %2609 = vmatpush1.msra.mxu0 0.0
    %2610 = vmatprep.subr.mxu0 0.0
    %2611 = vmatpush1.msra.mxu0 0.0
    %2612 = vmatprep.subr.mxu0 0.0
    %2613 = vmatpush1.msra.mxu0 0.0
    %2614 = vmatprep.subr.mxu0 0.0
    %2615 = vmatpush1.msra.mxu0 0.0
    %2616 = vmatprep.subr.mxu0 0.0
    %2617 = vmatpush1.msra.mxu0 0.0
    %2618 = vmatprep.mubr.f32.mxu0 0.0
    %2619 = vmatmul.mubr.f32.gmra.mrb[0].mxu0 %v2507
    %v2620 = vpop.f32.mrb[0].mxu0
    %v2621 = vadd.f32 0.0, %v2620
    %v2622 = vpop.f32.mrb[0].mxu0
    %2623 = vmatprep.mubr.f32.mxu0 0.0
    %2624 = vmatmul.mubr.f32.gmra.mrb[0].mxu0 %v2510
    %v2625 = vpop.f32.mrb[0].mxu0
    %v2626 = vadd.f32 0.0, %v2625
    %v2627 = vpop.f32.mrb[0].mxu0
    %2628 = vmatprep.mubr.f32.mxu0 0.0
    %2629 = vmatmul.mubr.f32.gmra.mrb[0].mxu0 %v2513
    %v2630 = vpop.f32.mrb[0].mxu0
    %v2631 = vadd.f32 0.0, %v2630
    %v2632 = vpop.f32.mrb[0].mxu0
    %2633 = vmatprep.mubr.f32.mxu0 0.0
    %2634 = vmatmul.mubr.f32.gmra.mrb[0].mxu0 %v2516
    %v2635 = vpop.f32.mrb[0].mxu0
    %v2636 = vadd.f32 0.0, %v2635
    %v2637 = vpop.f32.mrb[0].mxu0
    %2638 = vmatprep.mubr.f32.mxu0 0.0
    %2639 = vmatmul.mubr.f32.gmra.mrb[0].mxu0 %v2519
    %v2640 = vpop.f32.mrb[0].mxu0
    %v2641 = vadd.f32 0.0, %v2640
    %v2642 = vpop.f32.mrb[0].mxu0
    %2643 = vmatprep.mubr.f32.mxu0 0.0
    %2644 = vmatmul.mubr.f32.gmra.mrb[0].mxu0 %v2522
    %v2645 = vpop.f32.mrb[0].mxu0
    %v2646 = vadd.f32 0.0, %v2645
    %v2647 = vpop.f32.mrb[0].mxu0
    %2648 = vmatprep.mubr.f32.mxu0 0.0
    %2649 = vmatmul.mubr.f32.gmra.mrb[0].mxu0 %v2525
    %v2650 = vpop.f32.mrb[0].mxu0
    %v2651 = vadd.f32 0.0, %v2650
    %v2652 = vpop.f32.mrb[0].mxu0
    %2653 = vmatprep.mubr.f32.mxu0 0.0
    %2654 = vmatmul.mubr.f32.gmra.mrb[0].mxu0 %v2528
    %v2655 = vpop.f32.mrb[0].mxu0
    %v2656 = vadd.f32 0.0, %v2655
    %v2657 = vpop.f32.mrb[0].mxu0
    %2658 = vmatprep.mubr.f32.mxu0 0.0
    %2659 = vmatmul.mubr.f32.gmra.mrb[0].mxu0 %v2531
    %v2660 = vpop.f32.mrb[0].mxu0
    %v2661 = vadd.f32 0.0, %v2660
    %v2662 = vpop.f32.mrb[0].mxu0
    %2663 = vmatprep.mubr.f32.mxu0 0.0
    %2664 = vmatmul.mubr.f32.gmra.mrb[0].mxu0 %v2534
    %v2665 = vpop.f32.mrb[0].mxu0
    %v2666 = vadd.f32 0.0, %v2665
    %v2667 = vpop.f32.mrb[0].mxu0
    %2668 = vmatprep.mubr.f32.mxu0 0.0
    %2669 = vmatmul.mubr.f32.gmra.mrb[0].mxu0 %v2537
    %v2670 = vpop.f32.mrb[0].mxu0
    %v2671 = vadd.f32 0.0, %v2670
    %v2672 = vpop.f32.mrb[0].mxu0
    %2673 = vmatprep.mubr.f32.mxu0 0.0
    %2674 = vmatmul.mubr.f32.gmra.mrb[0].mxu0 %v2540
    %v2675 = vpop.f32.mrb[0].mxu0
    %v2676 = vadd.f32 0.0, %v2675
    %v2677 = vpop.f32.mrb[0].mxu0
    %2678 = vmatprep.mubr.f32.mxu0 0.0
    %2679 = vmatmul.mubr.f32.gmra.mrb[0].mxu0 %v2543
    %v2680 = vpop.f32.mrb[0].mxu0
    %v2681 = vadd.f32 0.0, %v2680
    %v2682 = vpop.f32.mrb[0].mxu0
    %2683 = vmatprep.mubr.f32.mxu0 0.0
    %2684 = vmatmul.mubr.f32.gmra.mrb[0].mxu0 %v2546
    %v2685 = vpop.f32.mrb[0].mxu0
    %v2686 = vadd.f32 0.0, %v2685
    %v2687 = vpop.f32.mrb[0].mxu0
    %2688 = vmatprep.mubr.f32.mxu0 0.0
    %2689 = vmatmul.mubr.f32.gmra.mrb[0].mxu0 %v2549
    %v2690 = vpop.f32.mrb[0].mxu0
    %v2691 = vadd.f32 0.0, %v2690
    %v2692 = vpop.f32.mrb[0].mxu0
    %2693 = vmatprep.mubr.f32.mxu0 0.0
    %2694 = vmatmul.mubr.f32.gmra.mrb[0].mxu0 %v2552
    %v2695 = vpop.f32.mrb[0].mxu0
    %v2696 = vadd.f32 0.0, %v2695
    %v2697 = vpop.f32.mrb[0].mxu0
    %2698 = vdwg.mxu0
    %2701 = vrot.lane.b32.xlu0 %v1781, 32
    %v2702 = vpop.permute.xlu0 %2701
    %2703 = vrot.lane.b32.xlu0 %v1783, 32
    %v2704 = vpop.permute.xlu0 %2703
    %2705 = vrot.lane.b32.xlu0 %v1787, 32
    %v2706 = vpop.permute.xlu0 %2705
    %2707 = vrot.lane.b32.xlu0 %v1789, 32
    %v2708 = vpop.permute.xlu0 %2707
    %v2709 = vsel %vm1134, %v2702, %v2704
    %v2710 = vsel %vm1134, %v2706, %v2708
    %v2713 = vmul.f32 %v2621, %v2709
    %v2714 = vmul.f32 %v2626, %v2709
    %v2715 = vmul.f32 %v2631, %v2709
    %v2716 = vmul.f32 %v2636, %v2709
    %v2717 = vmul.f32 %v2641, %v2709
    %v2718 = vmul.f32 %v2646, %v2709
    %v2719 = vmul.f32 %v2651, %v2709
    %v2720 = vmul.f32 %v2656, %v2709
    %v2721 = vmul.f32 %v2661, %v2710
    %v2722 = vmul.f32 %v2666, %v2710
    %v2723 = vmul.f32 %v2671, %v2710
    %v2724 = vmul.f32 %v2676, %v2710
    %v2725 = vmul.f32 %v2681, %v2710
    %v2726 = vmul.f32 %v2686, %v2710
    %v2727 = vmul.f32 %v2691, %v2710
    %v2728 = vmul.f32 %v2696, %v2710
    %v2729 = vsel %vm117, %v2713, 0.0
    %v2730 = vrot.slane %v2729, 4
    %v2731 = vadd.f32 %v2729, %v2730
    %v2732 = vrot.slane %v2731, 2
    %v2733 = vadd.f32 %v2731, %v2732
    %v2734 = vrot.slane %v2733, 1
    %v2735 = vadd.f32 %v2733, %v2734
    %v2736 = vsel %vm117, %v2714, 0.0
    %v2737 = vrot.slane %v2736, 4
    %v2738 = vadd.f32 %v2736, %v2737
    %v2739 = vrot.slane %v2738, 2
    %v2740 = vadd.f32 %v2738, %v2739
    %v2741 = vrot.slane %v2740, 1
    %v2742 = vadd.f32 %v2740, %v2741
    %v2743 = vsel %vm117, %v2715, 0.0
    %v2744 = vrot.slane %v2743, 4
    %v2745 = vadd.f32 %v2743, %v2744
    %v2746 = vrot.slane %v2745, 2
    %v2747 = vadd.f32 %v2745, %v2746
    %v2748 = vrot.slane %v2747, 1
    %v2749 = vadd.f32 %v2747, %v2748
    %v2750 = vsel %vm117, %v2716, 0.0
    %v2751 = vrot.slane %v2750, 4
    %v2752 = vadd.f32 %v2750, %v2751
    %v2753 = vrot.slane %v2752, 2
    %v2754 = vadd.f32 %v2752, %v2753
    %v2755 = vrot.slane %v2754, 1
    %v2756 = vadd.f32 %v2754, %v2755
    %v2757 = vsel %vm117, %v2717, 0.0
    %v2758 = vrot.slane %v2757, 4
    %v2759 = vadd.f32 %v2757, %v2758
    %v2760 = vrot.slane %v2759, 2
    %v2761 = vadd.f32 %v2759, %v2760
    %v2762 = vrot.slane %v2761, 1
    %v2763 = vadd.f32 %v2761, %v2762
    %v2764 = vsel %vm117, %v2718, 0.0
    %v2765 = vrot.slane %v2764, 4
    %v2766 = vadd.f32 %v2764, %v2765
    %v2767 = vrot.slane %v2766, 2
    %v2768 = vadd.f32 %v2766, %v2767
    %v2769 = vrot.slane %v2768, 1
    %v2770 = vadd.f32 %v2768, %v2769
    %v2771 = vsel %vm117, %v2719, 0.0
    %v2772 = vrot.slane %v2771, 4
    %v2773 = vadd.f32 %v2771, %v2772
    %v2774 = vrot.slane %v2773, 2
    %v2775 = vadd.f32 %v2773, %v2774
    %v2776 = vrot.slane %v2775, 1
    %v2777 = vadd.f32 %v2775, %v2776
    %v2778 = vsel %vm117, %v2720, 0.0
    %v2779 = vrot.slane %v2778, 4
    %v2780 = vadd.f32 %v2778, %v2779
    %v2781 = vrot.slane %v2780, 2
    %v2782 = vadd.f32 %v2780, %v2781
    %v2783 = vrot.slane %v2782, 1
    %v2784 = vadd.f32 %v2782, %v2783
    %v2785 = vsel %vm117, %v2721, 0.0
    %v2786 = vrot.slane %v2785, 4
    %v2787 = vadd.f32 %v2785, %v2786
    %v2788 = vrot.slane %v2787, 2
    %v2789 = vadd.f32 %v2787, %v2788
    %v2790 = vrot.slane %v2789, 1
    %v2791 = vadd.f32 %v2789, %v2790
    %v2792 = vsel %vm117, %v2722, 0.0
    %v2793 = vrot.slane %v2792, 4
    %v2794 = vadd.f32 %v2792, %v2793
    %v2795 = vrot.slane %v2794, 2
    %v2796 = vadd.f32 %v2794, %v2795
    %v2797 = vrot.slane %v2796, 1
    %v2798 = vadd.f32 %v2796, %v2797
    %v2799 = vsel %vm117, %v2723, 0.0
    %v2800 = vrot.slane %v2799, 4
    %v2801 = vadd.f32 %v2799, %v2800
    %v2802 = vrot.slane %v2801, 2
    %v2803 = vadd.f32 %v2801, %v2802
    %v2804 = vrot.slane %v2803, 1
    %v2805 = vadd.f32 %v2803, %v2804
    %v2806 = vsel %vm117, %v2724, 0.0
    %v2807 = vrot.slane %v2806, 4
    %v2808 = vadd.f32 %v2806, %v2807
    %v2809 = vrot.slane %v2808, 2
    %v2810 = vadd.f32 %v2808, %v2809
    %v2811 = vrot.slane %v2810, 1
    %v2812 = vadd.f32 %v2810, %v2811
    %v2813 = vsel %vm117, %v2725, 0.0
    %v2814 = vrot.slane %v2813, 4
    %v2815 = vadd.f32 %v2813, %v2814
    %v2816 = vrot.slane %v2815, 2
    %v2817 = vadd.f32 %v2815, %v2816
    %v2818 = vrot.slane %v2817, 1
    %v2819 = vadd.f32 %v2817, %v2818
    %v2820 = vsel %vm117, %v2726, 0.0
    %v2821 = vrot.slane %v2820, 4
    %v2822 = vadd.f32 %v2820, %v2821
    %v2823 = vrot.slane %v2822, 2
    %v2824 = vadd.f32 %v2822, %v2823
    %v2825 = vrot.slane %v2824, 1
    %v2826 = vadd.f32 %v2824, %v2825
    %v2827 = vsel %vm117, %v2727, 0.0
    %v2828 = vrot.slane %v2827, 4
    %v2829 = vadd.f32 %v2827, %v2828
    %v2830 = vrot.slane %v2829, 2
    %v2831 = vadd.f32 %v2829, %v2830
    %v2832 = vrot.slane %v2831, 1
    %v2833 = vadd.f32 %v2831, %v2832
    %v2834 = vsel %vm117, %v2728, 0.0
    %v2835 = vrot.slane %v2834, 4
    %v2836 = vadd.f32 %v2834, %v2835
    %v2837 = vrot.slane %v2836, 2
    %v2838 = vadd.f32 %v2836, %v2837
    %v2839 = vrot.slane %v2838, 1
    %v2840 = vadd.f32 %v2838, %v2839
    %s2841 = scalar_lea.vmem [#allocation2], 48
    %v2842 = vld [vmem:[%s2841] sm:$0xff]
    %v2843 = vld [vmem:[%s2841 + $0x8] sm:$0xff]
    %v2844 = vld [vmem:[%s2841 + $0x10] sm:$0xff]
    %v2845 = vld [vmem:[%s2841 + $0x18] sm:$0xff]
    %v2846 = vld [vmem:[%s2841 + $0x20] sm:$0xff]
    %v2847 = vld [vmem:[%s2841 + $0x28] sm:$0xff]
    %s2848 = scalar_lea.vmem %s5, 1
    %v2849 = vld [vmem:[%s2848] sm:$0x1]
    %v2851 = vlaneseq
    %v2852 = vshrl.u32 %v2851, 7
    %v2853 = vsub.s32 0, %v2852
    %v2854 = vrot.slane %v2849, %v2853
    %v2872 = vsel %vm1296, %v2742, %v2735
    %v2873 = vsel %vm1298, %v2749, %v2872
    %v2874 = vsel %vm1300, %v2756, %v2873
    %v2875 = vsel %vm1302, %v2763, %v2874
    %v2876 = vsel %vm1304, %v2770, %v2875
    %v2877 = vsel %vm1306, %v2777, %v2876
    %v2878 = vsel %vm1308, %v2784, %v2877
    %v2879 = vsel %vm1296, %v2798, %v2791
    %v2880 = vsel %vm1298, %v2805, %v2879
    %v2881 = vsel %vm1300, %v2812, %v2880
    %v2882 = vsel %vm1302, %v2819, %v2881
    %v2883 = vsel %vm1304, %v2826, %v2882
    %v2884 = vsel %vm1306, %v2833, %v2883
    %v2885 = vsel %vm1308, %v2840, %v2884
    %v2886 = vsel %vm117, %v2878, 0
    %v2888 = vsel %vm117, %v2885, 0
    %2890 = vmatprep.subr.mxu0 0.0
    %2891 = vmatpush1.msra.mxu0 %v2842
    %2892 = vmatprep.subr.mxu0 0.0
    %2893 = vmatpush1.msra.mxu0 %v2843
    %2894 = vmatprep.subr.mxu0 0.0
    %2895 = vmatpush1.msra.mxu0 %v2844
    %2896 = vmatprep.subr.mxu0 0.0
    %2897 = vmatpush1.msra.mxu0 %v2845
    %2898 = vmatprep.subr.mxu0 0.0
    %2899 = vmatpush1.msra.mxu0 %v2846
    %2900 = vmatprep.subr.mxu0 0.0
    %2901 = vmatpush1.msra.mxu0 %v2847
    %2902 = vmatprep.subr.mxu0 0.0
    %2903 = vmatpush1.msra.mxu0 0.0
    %2904 = vmatprep.subr.mxu0 0.0
    %2905 = vmatpush1.msra.mxu0 0.0
    %2906 = vmatprep.subr.mxu0 0.0
    %2907 = vmatpush1.msra.mxu0 0.0
    %2908 = vmatprep.subr.mxu0 0.0
    %2909 = vmatpush1.msra.mxu0 0.0
    %2910 = vmatprep.subr.mxu0 0.0
    %2911 = vmatpush1.msra.mxu0 0.0
    %2912 = vmatprep.subr.mxu0 0.0
    %2913 = vmatpush1.msra.mxu0 0.0
    %2914 = vmatprep.subr.mxu0 0.0
    %2915 = vmatpush1.msra.mxu0 0.0
    %2916 = vmatprep.subr.mxu0 0.0
    %2917 = vmatpush1.msra.mxu0 0.0
    %2918 = vmatprep.subr.mxu0 0.0
    %2919 = vmatpush1.msra.mxu0 0.0
    %2920 = vmatprep.subr.mxu0 0.0
    %2921 = vmatpush1.msra.mxu0 0.0
    %2922 = vmatprep.subr.mxu0 0.0
    %2923 = vmatpush1.msra.mxu0 0.0
    %2924 = vmatprep.subr.mxu0 0.0
    %2925 = vmatpush1.msra.mxu0 0.0
    %2926 = vmatprep.subr.mxu0 0.0
    %2927 = vmatpush1.msra.mxu0 0.0
    %2928 = vmatprep.subr.mxu0 0.0
    %2929 = vmatpush1.msra.mxu0 0.0
    %2930 = vmatprep.subr.mxu0 0.0
    %2931 = vmatpush1.msra.mxu0 0.0
    %2932 = vmatprep.subr.mxu0 0.0
    %2933 = vmatpush1.msra.mxu0 0.0
    %2934 = vmatprep.subr.mxu0 0.0
    %2935 = vmatpush1.msra.mxu0 0.0
    %2936 = vmatprep.subr.mxu0 0.0
    %2937 = vmatpush1.msra.mxu0 0.0
    %2938 = vmatprep.subr.mxu0 0.0
    %2939 = vmatpush1.msra.mxu0 0.0
    %2940 = vmatprep.subr.mxu0 0.0
    %2941 = vmatpush1.msra.mxu0 0.0
    %2942 = vmatprep.subr.mxu0 0.0
    %2943 = vmatpush1.msra.mxu0 0.0
    %2944 = vmatprep.subr.mxu0 0.0
    %2945 = vmatpush1.msra.mxu0 0.0
    %2946 = vmatprep.subr.mxu0 0.0
    %2947 = vmatpush1.msra.mxu0 0.0
    %2948 = vmatprep.subr.mxu0 0.0
    %2949 = vmatpush1.msra.mxu0 0.0
    %2950 = vmatprep.subr.mxu0 0.0
    %2951 = vmatpush1.msra.mxu0 0.0
    %2952 = vmatprep.subr.mxu0 0.0
    %2953 = vmatpush1.msra.mxu0 0.0
    %2954 = vmatprep.mubr.f32.mxu0 0.0
    %2955 = vmatmul.mubr.f32.gmra.mrb[0].mxu0 %v2886
    %v2956 = vpop.f32.mrb[0].mxu0
    %v2957 = vadd.f32 %v2854, %v2956
    %v2958 = vpop.f32.mrb[0].mxu0
    %2959 = vmatprep.mubr.f32.mxu0 0.0
    %2960 = vmatmul.mubr.f32.gmra.mrb[0].mxu0 %v2888
    %v2961 = vpop.f32.mrb[0].mxu0
    %v2962 = vadd.f32 %v2854, %v2961
    %v2963 = vpop.f32.mrb[0].mxu0
    %2964 = vdwg.mxu0
    %v2965 = vadd.f32 %v1680, %v2957
    %v2966 = vadd.f32 %v1681, %v2962
    %s2967 = scalar_lea.vmem %s6, 1
    %v2968 = vld [vmem:[%s2967] sm:$0x1]
    %s2969 = scalar_lea.vmem %s7, 1
    %v2970 = vld [vmem:[%s2969] sm:$0x1]
    %v2971 = vsel %vm117, %v2965, 0.0
    %2972 = vadd.xlane.f32.xlu0 %v2971
    %v2973 = vpop.xlane.xlu0 %2972
    %v2974 = vsel %vm117, %v2966, 0.0
    %2975 = vadd.xlane.f32.xlu0 %v2974
    %v2976 = vpop.xlane.xlu0 %2975
    %v2977 = vmul.f32 %v2973, %v1406
    %v2978 = vmul.f32 %v2976, %v1406
    %v2979 = vsub.f32 %v2965, %v2977
    %v2980 = vsub.f32 %v2966, %v2978
    %v2981 = vmul.f32 %v2979, %v2979
    %v2982 = vmul.f32 %v2980, %v2980
    %v2983 = vsel %vm117, %v2981, 0.0
    %2984 = vadd.xlane.f32.xlu0 %v2983
    %v2985 = vpop.xlane.xlu0 %2984
    %v2986 = vsel %vm117, %v2982, 0.0
    %2987 = vadd.xlane.f32.xlu0 %v2986
    %v2988 = vpop.xlane.xlu0 %2987
    %v2989 = vmul.f32 %v2985, %v1406
    %v2990 = vmul.f32 %v2988, %v1406
    %v2991 = vadd.f32 %v2989, 1e-05
    %v2992 = vadd.f32 %v2990, 1e-05
    %v2993 = vrsqrt.pop %v2991
    %v2994 = vrsqrt.pop %v2992
    %v2995 = vmul.f32 %v2979, %v2993
    %v2996 = vmul.f32 %v2980, %v2994
    %v2998 = vlaneseq
    %v2999 = vshrl.u32 %v2998, 7
    %v3000 = vsub.s32 0, %v2999
    %v3001 = vrot.slane %v2968, %v3000
    %v3003 = vmul.f32 %v2995, %v3001
    %v3004 = vmul.f32 %v2996, %v3001
    %v3006 = vlaneseq
    %v3007 = vshrl.u32 %v3006, 7
    %v3008 = vsub.s32 0, %v3007
    %v3009 = vrot.slane %v2970, %v3008
    %v3011 = vadd.f32 %v3003, %v3009
    %v3012 = vadd.f32 %v3004, %v3009
    %s3013 = scalar_lea.vmem [#allocation5], 48
    %v3014 = vld [vmem:[%s3013] sm:$0xff]
    %v3015 = vld [vmem:[%s3013 + $0x8] sm:$0xff]
    %v3016 = vld [vmem:[%s3013 + $0x10] sm:$0xff]
    %v3017 = vld [vmem:[%s3013 + $0x18] sm:$0xff]
    %v3018 = vld [vmem:[%s3013 + $0x20] sm:$0xff]
    %v3019 = vld [vmem:[%s3013 + $0x28] sm:$0xff]
    %s3020 = scalar_lea.vmem %s9, 1
    %v3021 = vld [vmem:[%s3020] sm:$0x1]
    %v3023 = vlaneseq
    %v3024 = vshrl.u32 %v3023, 7
    %v3025 = vsub.s32 0, %v3024
    %v3026 = vrot.slane %v3021, %v3025
    %v3029 = vsel %vm117, %v3011, 0
    %v3032 = vsel %vm117, %v3012, 0
    %3034 = vmatprep.subr.mxu0 0.0
    %3035 = vmatpush1.msra.mxu0 %v3014
    %3036 = vmatprep.subr.mxu0 0.0
    %3037 = vmatpush1.msra.mxu0 %v3015
    %3038 = vmatprep.subr.mxu0 0.0
    %3039 = vmatpush1.msra.mxu0 %v3016
    %3040 = vmatprep.subr.mxu0 0.0
    %3041 = vmatpush1.msra.mxu0 %v3017
    %3042 = vmatprep.subr.mxu0 0.0
    %3043 = vmatpush1.msra.mxu0 %v3018
    %3044 = vmatprep.subr.mxu0 0.0
    %3045 = vmatpush1.msra.mxu0 %v3019
    %3046 = vmatprep.subr.mxu0 0.0
    %3047 = vmatpush1.msra.mxu0 0.0
    %3048 = vmatprep.subr.mxu0 0.0
    %3049 = vmatpush1.msra.mxu0 0.0
    %3050 = vmatprep.subr.mxu0 0.0
    %3051 = vmatpush1.msra.mxu0 0.0
    %3052 = vmatprep.subr.mxu0 0.0
    %3053 = vmatpush1.msra.mxu0 0.0
    %3054 = vmatprep.subr.mxu0 0.0
    %3055 = vmatpush1.msra.mxu0 0.0
    %3056 = vmatprep.subr.mxu0 0.0
    %3057 = vmatpush1.msra.mxu0 0.0
    %3058 = vmatprep.subr.mxu0 0.0
    %3059 = vmatpush1.msra.mxu0 0.0
    %3060 = vmatprep.subr.mxu0 0.0
    %3061 = vmatpush1.msra.mxu0 0.0
    %3062 = vmatprep.subr.mxu0 0.0
    %3063 = vmatpush1.msra.mxu0 0.0
    %3064 = vmatprep.subr.mxu0 0.0
    %3065 = vmatpush1.msra.mxu0 0.0
    %3066 = vmatprep.subr.mxu0 0.0
    %3067 = vmatpush1.msra.mxu0 0.0
    %3068 = vmatprep.subr.mxu0 0.0
    %3069 = vmatpush1.msra.mxu0 0.0
    %3070 = vmatprep.subr.mxu0 0.0
    %3071 = vmatpush1.msra.mxu0 0.0
    %3072 = vmatprep.subr.mxu0 0.0
    %3073 = vmatpush1.msra.mxu0 0.0
    %3074 = vmatprep.subr.mxu0 0.0
    %3075 = vmatpush1.msra.mxu0 0.0
    %3076 = vmatprep.subr.mxu0 0.0
    %3077 = vmatpush1.msra.mxu0 0.0
    %3078 = vmatprep.subr.mxu0 0.0
    %3079 = vmatpush1.msra.mxu0 0.0
    %3080 = vmatprep.subr.mxu0 0.0
    %3081 = vmatpush1.msra.mxu0 0.0
    %3082 = vmatprep.subr.mxu0 0.0
    %3083 = vmatpush1.msra.mxu0 0.0
    %3084 = vmatprep.subr.mxu0 0.0
    %3085 = vmatpush1.msra.mxu0 0.0
    %3086 = vmatprep.subr.mxu0 0.0
    %3087 = vmatpush1.msra.mxu0 0.0
    %3088 = vmatprep.subr.mxu0 0.0
    %3089 = vmatpush1.msra.mxu0 0.0
    %3090 = vmatprep.subr.mxu0 0.0
    %3091 = vmatpush1.msra.mxu0 0.0
    %3092 = vmatprep.subr.mxu0 0.0
    %3093 = vmatpush1.msra.mxu0 0.0
    %3094 = vmatprep.subr.mxu0 0.0
    %3095 = vmatpush1.msra.mxu0 0.0
    %3096 = vmatprep.subr.mxu0 0.0
    %3097 = vmatpush1.msra.mxu0 0.0
    %3098 = vmatprep.mubr.f32.mxu0 0.0
    %3099 = vmatmul.mubr.f32.gmra.mrb[0].mxu0 %v3029
    %v3100 = vpop.f32.mrb[0].mxu0
    %v3101 = vadd.f32 %v3026, %v3100
    %v3102 = vpop.f32.mrb[0].mxu0
    %3103 = vmatprep.mubr.f32.mxu0 0.0
    %3104 = vmatmul.mubr.f32.gmra.mrb[0].mxu0 %v3032
    %v3105 = vpop.f32.mrb[0].mxu0
    %v3106 = vadd.f32 %v3026, %v3105
    %v3107 = vpop.f32.mrb[0].mxu0
    %3108 = vdwg.mxu0
    %v3109 = vmax.f32 %v3101, 0.0
    %v3110 = vmax.f32 %v3106, 0.0
    %s3111 = scalar_lea.vmem %s10, 64
    %v3112 = vld [vmem:[%s3111] sm:$0xff]
    %v3113 = vld [vmem:[%s3111 + $0x8] sm:$0xff]
    %v3114 = vld [vmem:[%s3111 + $0x10] sm:$0xff]
    %v3115 = vld [vmem:[%s3111 + $0x18] sm:$0xff]
    %v3116 = vld [vmem:[%s3111 + $0x20] sm:$0xff]
    %v3117 = vld [vmem:[%s3111 + $0x28] sm:$0xff]
    %v3118 = vld [vmem:[%s3111 + $0x30] sm:$0xff]
    %v3119 = vld [vmem:[%s3111 + $0x38] sm:$0xff]
    %s3120 = scalar_lea.vmem %s11, 1
    %v3121 = vld [vmem:[%s3120] sm:$0x1]
    %v3123 = vlaneseq
    %v3124 = vshrl.u32 %v3123, 7
    %v3125 = vsub.s32 0, %v3124
    %v3126 = vrot.slane %v3121, %v3125
    %v3129 = vsel %vm1554, %v3109, 0
    %v3132 = vsel %vm1554, %v3110, 0
    %3134 = vmatprep.subr.mxu0 0.0
    %3135 = vmatpush1.msra.mxu0 %v3112
    %3136 = vmatprep.subr.mxu0 0.0
    %3137 = vmatpush1.msra.mxu0 %v3113
    %3138 = vmatprep.subr.mxu0 0.0
    %3139 = vmatpush1.msra.mxu0 %v3114
    %3140 = vmatprep.subr.mxu0 0.0
    %3141 = vmatpush1.msra.mxu0 %v3115
    %3142 = vmatprep.subr.mxu0 0.0
    %3143 = vmatpush1.msra.mxu0 %v3116
    %3144 = vmatprep.subr.mxu0 0.0
    %3145 = vmatpush1.msra.mxu0 %v3117
    %3146 = vmatprep.subr.mxu0 0.0
    %3147 = vmatpush1.msra.mxu0 %v3118
    %3148 = vmatprep.subr.mxu0 0.0
    %3149 = vmatpush1.msra.mxu0 %v3119
    %3150 = vmatprep.subr.mxu0 0.0
    %3151 = vmatpush1.msra.mxu0 0.0
    %3152 = vmatprep.subr.mxu0 0.0
    %3153 = vmatpush1.msra.mxu0 0.0
    %3154 = vmatprep.subr.mxu0 0.0
    %3155 = vmatpush1.msra.mxu0 0.0
    %3156 = vmatprep.subr.mxu0 0.0
    %3157 = vmatpush1.msra.mxu0 0.0
    %3158 = vmatprep.subr.mxu0 0.0
    %3159 = vmatpush1.msra.mxu0 0.0
    %3160 = vmatprep.subr.mxu0 0.0
    %3161 = vmatpush1.msra.mxu0 0.0
    %3162 = vmatprep.subr.mxu0 0.0
    %3163 = vmatpush1.msra.mxu0 0.0
    %3164 = vmatprep.subr.mxu0 0.0
    %3165 = vmatpush1.msra.mxu0 0.0
    %3166 = vmatprep.subr.mxu0 0.0
    %3167 = vmatpush1.msra.mxu0 0.0
    %3168 = vmatprep.subr.mxu0 0.0
    %3169 = vmatpush1.msra.mxu0 0.0
    %3170 = vmatprep.subr.mxu0 0.0
    %3171 = vmatpush1.msra.mxu0 0.0
    %3172 = vmatprep.subr.mxu0 0.0
    %3173 = vmatpush1.msra.mxu0 0.0
    %3174 = vmatprep.subr.mxu0 0.0
    %3175 = vmatpush1.msra.mxu0 0.0
    %3176 = vmatprep.subr.mxu0 0.0
    %3177 = vmatpush1.msra.mxu0 0.0
    %3178 = vmatprep.subr.mxu0 0.0
    %3179 = vmatpush1.msra.mxu0 0.0
    %3180 = vmatprep.subr.mxu0 0.0
    %3181 = vmatpush1.msra.mxu0 0.0
    %3182 = vmatprep.subr.mxu0 0.0
    %3183 = vmatpush1.msra.mxu0 0.0
    %3184 = vmatprep.subr.mxu0 0.0
    %3185 = vmatpush1.msra.mxu0 0.0
    %3186 = vmatprep.subr.mxu0 0.0
    %3187 = vmatpush1.msra.mxu0 0.0
    %3188 = vmatprep.subr.mxu0 0.0
    %3189 = vmatpush1.msra.mxu0 0.0
    %3190 = vmatprep.subr.mxu0 0.0
    %3191 = vmatpush1.msra.mxu0 0.0
    %3192 = vmatprep.subr.mxu0 0.0
    %3193 = vmatpush1.msra.mxu0 0.0
    %3194 = vmatprep.subr.mxu0 0.0
    %3195 = vmatpush1.msra.mxu0 0.0
    %3196 = vmatprep.subr.mxu0 0.0
    %3197 = vmatpush1.msra.mxu0 0.0
    %3198 = vmatprep.mubr.f32.mxu0 0.0
    %3199 = vmatmul.mubr.f32.gmra.mrb[0].mxu0 %v3129
    %v3200 = vpop.f32.mrb[0].mxu0
    %v3201 = vadd.f32 %v3126, %v3200
    %v3202 = vpop.f32.mrb[0].mxu0
    %3203 = vmatprep.mubr.f32.mxu0 0.0
    %3204 = vmatmul.mubr.f32.gmra.mrb[0].mxu0 %v3132
    %v3205 = vpop.f32.mrb[0].mxu0
    %v3206 = vadd.f32 %v3126, %v3205
    %v3207 = vpop.f32.mrb[0].mxu0
    %3208 = vdwg.mxu0
    %v3209 = vadd.f32 %v3011, %v3201
    %v3210 = vadd.f32 %v3012, %v3206
    %s3211 = scalar_lea.vmem %s12, 1
    %v3212 = vld [vmem:[%s3211] sm:$0x1]
    %s3213 = scalar_lea.vmem %s13, 1
    %v3214 = vld [vmem:[%s3213] sm:$0x1]
    %v3215 = vsel %vm117, %v3209, 0.0
    %3216 = vadd.xlane.f32.xlu0 %v3215
    %v3217 = vpop.xlane.xlu0 %3216
    %v3218 = vsel %vm117, %v3210, 0.0
    %3219 = vadd.xlane.f32.xlu0 %v3218
    %v3220 = vpop.xlane.xlu0 %3219
    %v3221 = vmul.f32 %v3217, %v1406
    %v3222 = vmul.f32 %v3220, %v1406
    %v3223 = vsub.f32 %v3209, %v3221
    %v3224 = vsub.f32 %v3210, %v3222
    %v3225 = vmul.f32 %v3223, %v3223
    %v3226 = vmul.f32 %v3224, %v3224
    %v3227 = vsel %vm117, %v3225, 0.0
    %3228 = vadd.xlane.f32.xlu0 %v3227
    %v3229 = vpop.xlane.xlu0 %3228
    %v3230 = vsel %vm117, %v3226, 0.0
    %3231 = vadd.xlane.f32.xlu0 %v3230
    %v3232 = vpop.xlane.xlu0 %3231
    %v3233 = vmul.f32 %v3229, %v1406
    %v3234 = vmul.f32 %v3232, %v1406
    %v3235 = vadd.f32 %v3233, 1e-05
    %v3236 = vadd.f32 %v3234, 1e-05
    %v3237 = vrsqrt.pop %v3235
    %v3238 = vrsqrt.pop %v3236
    %v3239 = vmul.f32 %v3223, %v3237
    %v3240 = vmul.f32 %v3224, %v3238
    %v3242 = vlaneseq
    %v3243 = vshrl.u32 %v3242, 7
    %v3244 = vsub.s32 0, %v3243
    %v3245 = vrot.slane %v3212, %v3244
    %v3247 = vmul.f32 %v3239, %v3245
    %v3248 = vmul.f32 %v3240, %v3245
    %v3250 = vlaneseq
    %v3251 = vshrl.u32 %v3250, 7
    %v3252 = vsub.s32 0, %v3251
    %v3253 = vrot.slane %v3214, %v3252
    %v3255 = vadd.f32 %v3247, %v3253
    %v3256 = vadd.f32 %v3248, %v3253
    %3257 = vst.msk [vmem:[#allocation7] sm:$0xff] %vm117, %v3255
    %3258 = vst.msk [vmem:[#allocation7 + $0x8] sm:$0xff] %vm117, %v3256
    // Predicated region
    $region74: #{tpu_custom_call.1} parent=1 // pred_check
      _
    $region75: #{tpu_custom_call.1} parent=1 // pred_check_branch
      %3260 = sbr.rel (0) target = $region77
    $region76: #{tpu_custom_call.1} parent=1 // pred_region
      %s3262 = ssub.s32 256, 256
      %3263 = vsyncadd [#allocation4], %s3262
      %s3264 = sshll.u32 [#allocation7], 4
      %s3265 = int_to_ptr.vmem [resolvable:$true] %s3264
      %3270 = dma.vmem_to_hbm [thread:$0]  %s3265, 256, %s16, [#allocation4], 128, 128, 8
    $region77: #{tpu_custom_call.1} parent=1 // pred_fallthru
      _
    // Predicated region
    $region78: #{tpu_custom_call.1} parent=1 // pred_check
      _
    $region79: #{tpu_custom_call.1} parent=1 // pred_check_branch
      %3272 = sbr.rel (0) target = $region81
    $region80: #{tpu_custom_call.1} parent=1 // pred_region
      %3273 = dma.done [#allocation4], 256
    $region81: #{tpu_custom_call.1} parent=1 // pred_fallthru
      _
    %3274 = vsyncpa [#allocation3], 1
    %3275 = vsyncpa [#allocation6], 1
    %3276 = vsyncpa [#allocation4], 1

</llo_original>
